<compile_context>
chip_gen: v5e
topology: v5e:2x2
jax: 0.10.0
libtpu: 0.0.40
codegen_flags: <defaults>
</compile_context>

<pallas_src>
import jax
import jax.numpy as jnp
from jax.experimental import pallas as pl
from jax.experimental.pallas import tpu as pltpu

VMEM_LIMIT = 32 * 1024 * 1024  # sized for v7x's smaller VMEM; plenty for v5e/v6e too


def _round_up(x, m):
    return ((x + m - 1) // m) * m


# ---------------------------------------------------------------------------
# Pallas kernels
# ---------------------------------------------------------------------------

def conv_pool_kernel(p_ref, w_ref, b_ref, o_ref):
    """conv-as-matmul + bias + 2x2 maxpool + ReLU for one tile of patch rows.

    p_ref: (4, TM, D)  bf16 im2col patches, axis 0 = pool-window position
    w_ref: (D, 128)    bf16 conv weight, out-channels zero-padded to 128 lanes
    b_ref: (1, 128)    f32 bias (padded)
    o_ref: (TM, 128)   bf16 pooled+ReLU activations (lane-dense store)
    """
    tm = o_ref.shape[0]
    d = p_ref.shape[-1]
    p = p_ref[...].reshape(4 * tm, d)                       # one big MXU push
    z = jnp.dot(p, w_ref[...], preferred_element_type=jnp.float32)
    z = z.reshape(4, tm, 128)
    pooled = jnp.maximum(jnp.maximum(z[0], z[1]), jnp.maximum(z[2], z[3]))
    o_ref[...] = jnp.maximum(pooled + b_ref[...], 0.0).astype(o_ref.dtype)


def conv2_head_kernel(p_ref, w2_ref, b2_ref, w1_ref, b1_ref, w3_ref, b3_ref, o_ref):
    """conv2+pool+ReLU fused with flatten(NCHW)+fc1+ReLU+fc2+log_softmax.

    p_ref:  (4, S=16, TN, D2) bf16 conv2 im2col patches (pool_pos, spatial, sample, feat)
    w2_ref: (D2, 128) bf16 conv2 weight (20 -> 128 padded lanes);  b2_ref: (1,128) f32
    w1_ref: (S, 128, 64) bf16 fc1 weight, rows in (hp,wp,c) order (NCHW flatten folded in)
    b1_ref: (1, 64) f32
    w3_ref: (64, 128) bf16 fc2 weight (10 -> 128 padded lanes);    b3_ref: (1,128) f32
    o_ref:  (TN, 128) f32 log-probabilities (classes live in lanes 0..9)
    """
    tn = o_ref.shape[0]
    s_dim = p_ref.shape[1]
    d2 = p_ref.shape[-1]

    # conv2 as one matmul over all (pool_pos, spatial, sample) rows.
    p = p_ref[...].reshape(4 * s_dim * tn, d2)
    z = jnp.dot(p, w2_ref[...], preferred_element_type=jnp.float32)
    z = z.reshape(4, s_dim, tn, 128)
    pooled = jnp.maximum(jnp.maximum(z[0], z[1]), jnp.maximum(z[2], z[3]))   # (S,TN,128)
    act = jnp.maximum(pooled + b2_ref[...], 0.0).astype(jnp.bfloat16)

    # fc1 as K-chunked accumulation over the 16 spatial positions (different weights per
    # position, so this is exactly the MXU's own K-tiling -- no lane-crossing reshape).
    h = jnp.zeros((tn, 64), jnp.float32)
    for s in range(s_dim):
        h = h + jnp.dot(act[s], w1_ref[s], preferred_element_type=jnp.float32)
    h = jnp.maximum(h + b1_ref[...], 0.0).astype(jnp.bfloat16)

    logits = jnp.dot(h, w3_ref[...], preferred_element_type=jnp.float32) + b3_ref[...]
    lane = jax.lax.broadcasted_iota(jnp.int32, logits.shape, 1)
    logits = jnp.where(lane < 10, logits, -1e30)            # mask padded class lanes
    m = jnp.max(logits, axis=-1, keepdims=True)
    shifted = logits - m
    lse = jnp.log(jnp.sum(jnp.exp(shifted), axis=-1, keepdims=True))
    o_ref[...] = shifted - lse


# ---------------------------------------------------------------------------
# Wrappers (im2col + padding glue; parameter prep done once outside jit)
# ---------------------------------------------------------------------------

def _im2col_pool(x_nhwc, K, spatial_major):
    """im2col grouped by 2x2 pool-window position.

    spatial_major=False -> (4, N*Hp*Wp, D)         rows ordered (n, hp, wp)
    spatial_major=True  -> (4, Hp*Wp, N, D)        for per-batch-tile blocking
    """
    N, H, W, C = x_nhwc.shape
    Ho, Wo = H - K + 1, W - K + 1
    Hp, Wp = Ho // 2, Wo // 2
    rows = []
    for ki in range(K):
        cols = [x_nhwc[:, ki:ki + Ho, kj:kj + Wo, :] for kj in range(K)]
        rows.append(jnp.stack(cols, axis=-2))                # (N,Ho,Wo,K,C)
    patches = jnp.stack(rows, axis=-3)                       # (N,Ho,Wo,K,K,C)
    D = K * K * C
    patches = patches.reshape(N, Ho, Wo, D).reshape(N, Hp, 2, Wp, 2, D)
    if spatial_major:
        patches = patches.transpose(2, 4, 1, 3, 0, 5)        # (2,2,Hp,Wp,N,D)
        return patches.reshape(4, Hp * Wp, N, D), (N, Hp, Wp)
    patches = patches.transpose(2, 4, 0, 1, 3, 5)            # (2,2,N,Hp,Wp,D)
    return patches.reshape(4, N * Hp * Wp, D), (N, Hp, Wp)


def prepare_params(params):
    """PyTorch-layout params -> padded/permuted bf16 matmul operands (call once, outside jit)."""
    c1w, c1b, c2w, c2b, f1w, f1b, f2w, f2b = params
    # conv1: OIHW (10,1,5,5) -> (25, 128) bf16
    w1 = jnp.transpose(c1w, (2, 3, 1, 0)).reshape(25, 10)
    w1 = jnp.pad(w1, ((0, 0), (0, 118))).astype(jnp.bfloat16)
    b1 = jnp.pad(c1b, (0, 118)).reshape(1, 128).astype(jnp.float32)
    # conv2: OIHW (20,10,5,5) -> (250, 128) bf16
    w2 = jnp.transpose(c2w, (2, 3, 1, 0)).reshape(250, 20)
    w2 = jnp.pad(w2, ((0, 0), (0, 108))).astype(jnp.bfloat16)
    b2 = jnp.pad(c2b, (0, 108)).reshape(1, 128).astype(jnp.float32)
    # fc1: (50, 320); torch flatten index = c*16 + hp*4 + wp.  Fold the NCHW-flatten
    # permutation into the weight rows: layout (s=hp*4+wp, c_padded, out_padded).
    w1f = f1w.reshape(50, 20, 4, 4)                          # (out, c, hp, wp)
    w1f = jnp.transpose(w1f, (2, 3, 1, 0))                   # (hp, wp, c, out)
    w1f = jnp.pad(w1f, ((0, 0), (0, 0), (0, 108), (0, 14)))  # (4,4,128,64)
    w1f = w1f.reshape(16, 128, 64).astype(jnp.bfloat16)
    b1f = jnp.pad(f1b, (0, 14)).reshape(1, 64).astype(jnp.float32)
    # fc2: (10, 50) -> (64, 128) bf16
    w2f = jnp.pad(f2w.T, ((0, 14), (0, 118))).astype(jnp.bfloat16)
    b2f = jnp.pad(f2b, (0, 118)).reshape(1, 128).astype(jnp.float32)
    return (w1, b1, w2, b2, w1f, b1f, w2f, b2f)


def _mosaic_params():
    return pltpu.CompilerParams(dimension_semantics=("parallel",),
                                vmem_limit_bytes=VMEM_LIMIT)


@jax.jit
def mnist_comparator_forward(x_nchw, prepped):
    w1, b1, w2, b2, w1f, b1f, w2f, b2f = prepped
    N = x_nchw.shape[0]
    x = jnp.transpose(x_nchw, (0, 2, 3, 1))                  # NCHW -> NHWC (N,28,28,1)

    # ---------------- conv1 + pool + relu ----------------
    p1, (_, hp1, wp1) = _im2col_pool(x, 5, spatial_major=False)      # (4, N*144, 25)
    M1 = N * hp1 * wp1
    tile_m = min(512, _round_up(M1, 16))
    M1p = _round_up(M1, tile_m)
    D1 = p1.shape[-1]
    p1 = jnp.pad(p1, ((0, 0), (0, M1p - M1), (0, 0))).astype(jnp.bfloat16)

    a1 = pl.pallas_call(
        conv_pool_kernel,
        out_shape=jax.ShapeDtypeStruct((M1p, 128), jnp.bfloat16),
        grid=(M1p // tile_m,),
        in_specs=[pl.BlockSpec((4, tile_m, D1), lambda i: (0, i, 0)),
                  pl.BlockSpec((D1, 128), lambda i: (0, 0)),
                  pl.BlockSpec((1, 128), lambda i: (0, 0))],
        out_specs=pl.BlockSpec((tile_m, 128), lambda i: (i, 0)),
        compiler_params=_mosaic_params(),
        cost_estimate=pl.CostEstimate(
            flops=2 * 4 * M1p * D1 * 128, transcendentals=0,
            bytes_accessed=p1.size * 2 + D1 * 128 * 2 + M1p * 128 * 2),
    )(p1, w1, b1)
    a1 = a1[:M1, :10].reshape(N, hp1, wp1, 10)               # (N,12,12,10) bf16

    # ------- conv2 + pool + relu + fc1 + relu + fc2 + log_softmax (fused) -------
    p2, (_, hp2, wp2) = _im2col_pool(a1, 5, spatial_major=True)      # (4, 16, N, 250)
    S = hp2 * wp2
    D2 = p2.shape[-1]
    tile_n = min(64, _round_up(N, 16))
    Np = _round_up(N, tile_n)
    p2 = jnp.pad(p2, ((0, 0), (0, 0), (0, Np - N), (0, 0))).astype(jnp.bfloat16)

    out = pl.pallas_call(
        conv2_head_kernel,
        out_shape=jax.ShapeDtypeStruct((Np, 128), jnp.float32),
        grid=(Np // tile_n,),
        in_specs=[pl.BlockSpec((4, S, tile_n, D2), lambda i: (0, 0, i, 0)),
                  pl.BlockSpec((D2, 128), lambda i: (0, 0)),
                  pl.BlockSpec((1, 128), lambda i: (0, 0)),
                  pl.BlockSpec((S, 128, 64), lambda i: (0, 0, 0)),
                  pl.BlockSpec((1, 64), lambda i: (0, 0)),
                  pl.BlockSpec((64, 128), lambda i: (0, 0)),
                  pl.BlockSpec((1, 128), lambda i: (0, 0))],
        out_specs=pl.BlockSpec((tile_n, 128), lambda i: (i, 0)),
        compiler_params=_mosaic_params(),
        cost_estimate=pl.CostEstimate(
            flops=2 * (4 * S * Np * D2 * 128 + Np * S * 128 * 64 + Np * 64 * 128),
            transcendentals=Np * 128,
            bytes_accessed=p2.size * 2 + (D2 * 128 + S * 128 * 64 + 64 * 128) * 2
                           + Np * 128 * 4),
    )(p2, w2, b2, w1f, b1f, w2f, b2f)

    return out[:N, :10]                                      # (N, 10) log-probs


# ---------------------------------------------------------------------------
# Pure-JAX reference (correctness check only)
# ---------------------------------------------------------------------------

def reference_forward(x_nchw, params):
    c1w, c1b, c2w, c2b, f1w, f1b, f2w, f2b = params

    def conv_block(x, w, b):
        y = jax.lax.conv_general_dilated(
            x, w, window_strides=(1, 1), padding='VALID',
            dimension_numbers=('NCHW', 'OIHW', 'NCHW')) + b[None, :, None, None]
        y = jax.lax.reduce_window(y, -jnp.inf, jax.lax.max,
                                  (1, 1, 2, 2), (1, 1, 2, 2), 'VALID')
        return jnp.maximum(y, 0.0)

    y = conv_block(x_nchw, c1w, c1b)
    y = conv_block(y, c2w, c2b)
    y = y.reshape(y.shape[0], -1)
    y = jnp.maximum(y @ f1w.T + f1b, 0.0)
    y = y @ f2w.T + f2b
    return jax.nn.log_softmax(y, axis=1)


# ---------------------------------------------------------------------------
# Main
# ---------------------------------------------------------------------------

if __name__ == "__main__":
    key = jax.random.PRNGKey(0)
    ks = jax.random.split(key, 9)

    # Deterministic synthetic parameters (PyTorch shape conventions).
    params = (
        0.10 * jax.random.normal(ks[0], (10, 1, 5, 5), jnp.float32),    # conv1.weight
        0.10 * jax.random.normal(ks[1], (10,), jnp.float32),            # conv1.bias
        0.05 * jax.random.normal(ks[2], (20, 10, 5, 5), jnp.float32),   # conv2.weight
        0.05 * jax.random.normal(ks[3], (20,), jnp.float32),            # conv2.bias
        0.05 * jax.random.normal(ks[4], (50, 320), jnp.float32),        # fc1.weight
        0.05 * jax.random.normal(ks[5], (50,), jnp.float32),            # fc1.bias
        0.10 * jax.random.normal(ks[6], (10, 50), jnp.float32),         # fc2.weight
        0.10 * jax.random.normal(ks[7], (10,), jnp.float32),            # fc2.bias
    )

    # MNIST-sized input: fc1 in_features=320 forces 28x28 spatial; batch=2.
    x = jax.random.normal(ks[8], (2, 1, 28, 28), jnp.float32)

    prepped = prepare_params(params)            # one-time weight prep, outside the jit
    out = mnist_comparator_forward(x, prepped)
    out = jax.block_until_ready(out)

    ref = reference_forward(x, params)
    assert out.shape == (2, 10), out.shape
    assert bool(jnp.allclose(out, ref, atol=2e-2, rtol=2e-2)), "mismatch vs reference"

    print("KERNEL_OK")
</pallas_src>

<mosaic_0001>
module attributes {stable_mosaic.version = 11 : i64} {
  func.func @conv_pool_kernel(%arg0: i32, %arg1: memref<4x288x25xbf16, #tpu.memory_space<vmem>>, %arg2: memref<25x128xbf16, #tpu.memory_space<vmem>>, %arg3: memref<1x128xf32, #tpu.memory_space<vmem>>, %arg4: memref<288x128xbf16, #tpu.memory_space<vmem>>) attributes {dimension_semantics = [#tpu.dimension_semantics<parallel>], iteration_bounds = array<i64: 1>, scalar_prefetch = 0 : i64, scratch_operands = 0 : i64, tpu.core_type = #tpu.core_type<tc>, window_params = [{transform_indices = @transform_0, window_bounds = array<i64: 4, 288, 25>}, {pipeline_mode = #tpu.pipeline_mode<synchronous>, transform_indices = @transform_1, window_bounds = array<i64: 25, 128>}, {pipeline_mode = #tpu.pipeline_mode<synchronous>, transform_indices = @transform_2, window_bounds = array<i64: 1, 128>}, {transform_indices = @transform_3, window_bounds = array<i64: 288, 128>}]} {
    %c0 = arith.constant 0 : index
    %c0_0 = arith.constant 0 : index
    %c0_1 = arith.constant 0 : index
    %0 = vector.load %arg1[%c0, %c0_0, %c0_1] : memref<4x288x25xbf16, #tpu.memory_space<vmem>>, vector<4x288x25xbf16>
    %1 = vector.shape_cast %0 : vector<4x288x25xbf16> to vector<1152x25xbf16>
    %c0_2 = arith.constant 0 : index
    %c0_3 = arith.constant 0 : index
    %2 = vector.load %arg2[%c0_2, %c0_3] : memref<25x128xbf16, #tpu.memory_space<vmem>>, vector<25x128xbf16>
    %cst = arith.constant dense<0.000000e+00> : vector<1152x128xf32>
    %3 = tpu.matmul %1, %2, %cst {dimension_numbers = #tpu.dot_dimension_numbers<[1], [0], [0], [1], [0, 0, 1, 1], [], []>} : vector<1152x25xbf16>, vector<25x128xbf16>, vector<1152x128xf32> -> vector<1152x128xf32>
    %4 = vector.shape_cast %3 : vector<1152x128xf32> to vector<4x288x128xf32>
    %5 = vector.extract_strided_slice %4 {offsets = [0, 0, 0], sizes = [1, 288, 128], strides = [1, 1, 1]} : vector<4x288x128xf32> to vector<1x288x128xf32>
    %6 = vector.shape_cast %5 : vector<1x288x128xf32> to vector<288x128xf32>
    %7 = vector.extract_strided_slice %4 {offsets = [1, 0, 0], sizes = [1, 288, 128], strides = [1, 1, 1]} : vector<4x288x128xf32> to vector<1x288x128xf32>
    %8 = vector.shape_cast %7 : vector<1x288x128xf32> to vector<288x128xf32>
    %9 = arith.maximumf %6, %8 : vector<288x128xf32>
    %10 = vector.extract_strided_slice %4 {offsets = [2, 0, 0], sizes = [1, 288, 128], strides = [1, 1, 1]} : vector<4x288x128xf32> to vector<1x288x128xf32>
    %11 = vector.shape_cast %10 : vector<1x288x128xf32> to vector<288x128xf32>
    %12 = vector.extract_strided_slice %4 {offsets = [3, 0, 0], sizes = [1, 288, 128], strides = [1, 1, 1]} : vector<4x288x128xf32> to vector<1x288x128xf32>
    %13 = vector.shape_cast %12 : vector<1x288x128xf32> to vector<288x128xf32>
    %14 = arith.maximumf %11, %13 : vector<288x128xf32>
    %15 = arith.maximumf %9, %14 : vector<288x128xf32>
    %c0_4 = arith.constant 0 : index
    %c0_5 = arith.constant 0 : index
    %16 = vector.load %arg3[%c0_4, %c0_5] : memref<1x128xf32, #tpu.memory_space<vmem>>, vector<1x128xf32>
    %17 = vector.broadcast %16 : vector<1x128xf32> to vector<288x128xf32>
    %18 = arith.addf %15, %17 : vector<288x128xf32>
    %cst_6 = arith.constant 0.000000e+00 : f32
    %19 = vector.broadcast %cst_6 : f32 to vector<288x128xf32>
    %20 = arith.maximumf %18, %19 : vector<288x128xf32>
    %21 = arith.truncf %20 : vector<288x128xf32> to vector<288x128xbf16>
    %c0_7 = arith.constant 0 : index
    %c0_8 = arith.constant 0 : index
    %22 = vector.load %arg4[%c0_7, %c0_8] : memref<288x128xbf16, #tpu.memory_space<vmem>>, vector<288x128xbf16>
    tpu.vector_store %arg4[%c0_7, %c0_8], %21 {strides = array<i32>} : memref<288x128xbf16, #tpu.memory_space<vmem>>, vector<288x128xbf16>,
    return
  }
  func.func @transform_0(%arg0: i32) -> (i32, i32, i32) {
    %c0_i32 = arith.constant 0 : i32
    %c0_i32_0 = arith.constant 0 : i32
    %c0_i32_1 = arith.constant 0 : i32
    return %c0_i32, %arg0, %c0_i32_0 : i32, i32, i32
  }
  func.func @transform_1(%arg0: i32) -> (i32, i32) {
    %c0_i32 = arith.constant 0 : i32
    %c0_i32_0 = arith.constant 0 : i32
    %c0_i32_1 = arith.constant 0 : i32
    return %c0_i32, %c0_i32_0 : i32, i32
  }
  func.func @transform_2(%arg0: i32) -> (i32, i32) {
    %c0_i32 = arith.constant 0 : i32
    %c0_i32_0 = arith.constant 0 : i32
    %c0_i32_1 = arith.constant 0 : i32
    return %c0_i32, %c0_i32_0 : i32, i32
  }
  func.func @transform_3(%arg0: i32) -> (i32, i32) {
    %c0_i32 = arith.constant 0 : i32
    %c0_i32_0 = arith.constant 0 : i32
    return %arg0, %c0_i32 : i32, i32
  }
}

module attributes {stable_mosaic.version = 11 : i64} {
  func.func @conv2_head_kernel(%arg0: i32, %arg1: memref<4x16x16x250xbf16, #tpu.memory_space<vmem>>, %arg2: memref<250x128xbf16, #tpu.memory_space<vmem>>, %arg3: memref<1x128xf32, #tpu.memory_space<vmem>>, %arg4: memref<16x128x64xbf16, #tpu.memory_space<vmem>>, %arg5: memref<1x64xf32, #tpu.memory_space<vmem>>, %arg6: memref<64x128xbf16, #tpu.memory_space<vmem>>, %arg7: memref<1x128xf32, #tpu.memory_space<vmem>>, %arg8: memref<16x128xf32, #tpu.memory_space<vmem>>) attributes {dimension_semantics = [#tpu.dimension_semantics<parallel>], iteration_bounds = array<i64: 1>, scalar_prefetch = 0 : i64, scratch_operands = 0 : i64, tpu.core_type = #tpu.core_type<tc>, window_params = [{transform_indices = @transform_0, window_bounds = array<i64: 4, 16, 16, 250>}, {pipeline_mode = #tpu.pipeline_mode<synchronous>, transform_indices = @transform_1, window_bounds = array<i64: 250, 128>}, {pipeline_mode = #tpu.pipeline_mode<synchronous>, transform_indices = @transform_2, window_bounds = array<i64: 1, 128>}, {pipeline_mode = #tpu.pipeline_mode<synchronous>, transform_indices = @transform_3, window_bounds = array<i64: 16, 128, 64>}, {pipeline_mode = #tpu.pipeline_mode<synchronous>, transform_indices = @transform_4, window_bounds = array<i64: 1, 64>}, {pipeline_mode = #tpu.pipeline_mode<synchronous>, transform_indices = @transform_5, window_bounds = array<i64: 64, 128>}, {pipeline_mode = #tpu.pipeline_mode<synchronous>, transform_indices = @transform_6, window_bounds = array<i64: 1, 128>}, {transform_indices = @transform_7, window_bounds = array<i64: 16, 128>}]} {
    %c0 = arith.constant 0 : index
    %c0_0 = arith.constant 0 : index
    %c0_1 = arith.constant 0 : index
    %c0_2 = arith.constant 0 : index
    %0 = vector.load %arg1[%c0, %c0_0, %c0_1, %c0_2] : memref<4x16x16x250xbf16, #tpu.memory_space<vmem>>, vector<4x16x16x250xbf16>
    %1 = vector.shape_cast %0 : vector<4x16x16x250xbf16> to vector<1024x250xbf16>
    %c0_3 = arith.constant 0 : index
    %c0_4 = arith.constant 0 : index
    %2 = vector.load %arg2[%c0_3, %c0_4] : memref<250x128xbf16, #tpu.memory_space<vmem>>, vector<250x128xbf16>
    %cst = arith.constant dense<0.000000e+00> : vector<1024x128xf32>
    %3 = tpu.matmul %1, %2, %cst {dimension_numbers = #tpu.dot_dimension_numbers<[1], [0], [0], [1], [0, 0, 1, 1], [], []>} : vector<1024x250xbf16>, vector<250x128xbf16>, vector<1024x128xf32> -> vector<1024x128xf32>
    %4 = vector.shape_cast %3 : vector<1024x128xf32> to vector<4x16x16x128xf32>
    %5 = vector.extract_strided_slice %4 {offsets = [0, 0, 0, 0], sizes = [1, 16, 16, 128], strides = [1, 1, 1, 1]} : vector<4x16x16x128xf32> to vector<1x16x16x128xf32>
    %6 = vector.shape_cast %5 : vector<1x16x16x128xf32> to vector<16x16x128xf32>
    %7 = vector.extract_strided_slice %4 {offsets = [1, 0, 0, 0], sizes = [1, 16, 16, 128], strides = [1, 1, 1, 1]} : vector<4x16x16x128xf32> to vector<1x16x16x128xf32>
    %8 = vector.shape_cast %7 : vector<1x16x16x128xf32> to vector<16x16x128xf32>
    %9 = arith.maximumf %6, %8 : vector<16x16x128xf32>
    %10 = vector.extract_strided_slice %4 {offsets = [2, 0, 0, 0], sizes = [1, 16, 16, 128], strides = [1, 1, 1, 1]} : vector<4x16x16x128xf32> to vector<1x16x16x128xf32>
    %11 = vector.shape_cast %10 : vector<1x16x16x128xf32> to vector<16x16x128xf32>
    %12 = vector.extract_strided_slice %4 {offsets = [3, 0, 0, 0], sizes = [1, 16, 16, 128], strides = [1, 1, 1, 1]} : vector<4x16x16x128xf32> to vector<1x16x16x128xf32>
    %13 = vector.shape_cast %12 : vector<1x16x16x128xf32> to vector<16x16x128xf32>
    %14 = arith.maximumf %11, %13 : vector<16x16x128xf32>
    %15 = arith.maximumf %9, %14 : vector<16x16x128xf32>
    %c0_5 = arith.constant 0 : index
    %c0_6 = arith.constant 0 : index
    %16 = vector.load %arg3[%c0_5, %c0_6] : memref<1x128xf32, #tpu.memory_space<vmem>>, vector<1x128xf32>
    %17 = vector.shape_cast %16 : vector<1x128xf32> to vector<1x1x128xf32>
    %18 = vector.broadcast %17 : vector<1x1x128xf32> to vector<16x16x128xf32>
    %19 = arith.addf %15, %18 : vector<16x16x128xf32>
    %cst_7 = arith.constant 0.000000e+00 : f32
    %20 = vector.broadcast %cst_7 : f32 to vector<16x16x128xf32>
    %21 = arith.maximumf %19, %20 : vector<16x16x128xf32>
    %22 = arith.truncf %21 : vector<16x16x128xf32> to vector<16x16x128xbf16>
    %cst_8 = arith.constant 0.000000e+00 : f32
    %23 = vector.broadcast %cst_8 : f32 to vector<16x64xf32>
    %24 = vector.extract_strided_slice %22 {offsets = [0, 0, 0], sizes = [1, 16, 128], strides = [1, 1, 1]} : vector<16x16x128xbf16> to vector<1x16x128xbf16>
    %25 = vector.shape_cast %24 : vector<1x16x128xbf16> to vector<16x128xbf16>
    %c0_9 = arith.constant 0 : index
    %c0_10 = arith.constant 0 : index
    %c0_11 = arith.constant 0 : index
    %26 = vector.load %arg4[%c0_9, %c0_10, %c0_11] : memref<16x128x64xbf16, #tpu.memory_space<vmem>>, vector<1x128x64xbf16>
    %27 = vector.shape_cast %26 : vector<1x128x64xbf16> to vector<128x64xbf16>
    %cst_12 = arith.constant dense<0.000000e+00> : vector<16x64xf32>
    %28 = tpu.matmul %25, %27, %cst_12 {dimension_numbers = #tpu.dot_dimension_numbers<[1], [0], [0], [1], [0, 0, 1, 1], [], []>} : vector<16x128xbf16>, vector<128x64xbf16>, vector<16x64xf32> -> vector<16x64xf32>
    %29 = arith.addf %23, %28 : vector<16x64xf32>
    %30 = vector.extract_strided_slice %22 {offsets = [1, 0, 0], sizes = [1, 16, 128], strides = [1, 1, 1]} : vector<16x16x128xbf16> to vector<1x16x128xbf16>
    %31 = vector.shape_cast %30 : vector<1x16x128xbf16> to vector<16x128xbf16>
    %c1 = arith.constant 1 : index
    %c0_13 = arith.constant 0 : index
    %c0_14 = arith.constant 0 : index
    %32 = vector.load %arg4[%c1, %c0_13, %c0_14] : memref<16x128x64xbf16, #tpu.memory_space<vmem>>, vector<1x128x64xbf16>
    %33 = vector.shape_cast %32 : vector<1x128x64xbf16> to vector<128x64xbf16>
    %cst_15 = arith.constant dense<0.000000e+00> : vector<16x64xf32>
    %34 = tpu.matmul %31, %33, %cst_15 {dimension_numbers = #tpu.dot_dimension_numbers<[1], [0], [0], [1], [0, 0, 1, 1], [], []>} : vector<16x128xbf16>, vector<128x64xbf16>, vector<16x64xf32> -> vector<16x64xf32>
    %35 = arith.addf %29, %34 : vector<16x64xf32>
    %36 = vector.extract_strided_slice %22 {offsets = [2, 0, 0], sizes = [1, 16, 128], strides = [1, 1, 1]} : vector<16x16x128xbf16> to vector<1x16x128xbf16>
    %37 = vector.shape_cast %36 : vector<1x16x128xbf16> to vector<16x128xbf16>
    %c2 = arith.constant 2 : index
    %c0_16 = arith.constant 0 : index
    %c0_17 = arith.constant 0 : index
    %38 = vector.load %arg4[%c2, %c0_16, %c0_17] : memref<16x128x64xbf16, #tpu.memory_space<vmem>>, vector<1x128x64xbf16>
    %39 = vector.shape_cast %38 : vector<1x128x64xbf16> to vector<128x64xbf16>
    %cst_18 = arith.constant dense<0.000000e+00> : vector<16x64xf32>
    %40 = tpu.matmul %37, %39, %cst_18 {dimension_numbers = #tpu.dot_dimension_numbers<[1], [0], [0], [1], [0, 0, 1, 1], [], []>} : vector<16x128xbf16>, vector<128x64xbf16>, vector<16x64xf32> -> vector<16x64xf32>
    %41 = arith.addf %35, %40 : vector<16x64xf32>
    %42 = vector.extract_strided_slice %22 {offsets = [3, 0, 0], sizes = [1, 16, 128], strides = [1, 1, 1]} : vector<16x16x128xbf16> to vector<1x16x128xbf16>
    %43 = vector.shape_cast %42 : vector<1x16x128xbf16> to vector<16x128xbf16>
    %c3 = arith.constant 3 : index
    %c0_19 = arith.constant 0 : index
    %c0_20 = arith.constant 0 : index
    %44 = vector.load %arg4[%c3, %c0_19, %c0_20] : memref<16x128x64xbf16, #tpu.memory_space<vmem>>, vector<1x128x64xbf16>
    %45 = vector.shape_cast %44 : vector<1x128x64xbf16> to vector<128x64xbf16>
    %cst_21 = arith.constant dense<0.000000e+00> : vector<16x64xf32>
    %46 = tpu.matmul %43, %45, %cst_21 {dimension_numbers = #tpu.dot_dimension_numbers<[1], [0], [0], [1], [0, 0, 1, 1], [], []>} : vector<16x128xbf16>, vector<128x64xbf16>, vector<16x64xf32> -> vector<16x64xf32>
    %47 = arith.addf %41, %46 : vector<16x64xf32>
    %48 = vector.extract_strided_slice %22 {offsets = [4, 0, 0], sizes = [1, 16, 128], strides = [1, 1, 1]} : vector<16x16x128xbf16> to vector<1x16x128xbf16>
    %49 = vector.shape_cast %48 : vector<1x16x128xbf16> to vector<16x128xbf16>
    %c4 = arith.constant 4 : index
    %c0_22 = arith.constant 0 : index
    %c0_23 = arith.constant 0 : index
    %50 = vector.load %arg4[%c4, %c0_22, %c0_23] : memref<16x128x64xbf16, #tpu.memory_space<vmem>>, vector<1x128x64xbf16>
    %51 = vector.shape_cast %50 : vector<1x128x64xbf16> to vector<128x64xbf16>
    %cst_24 = arith.constant dense<0.000000e+00> : vector<16x64xf32>
    %52 = tpu.matmul %49, %51, %cst_24 {dimension_numbers = #tpu.dot_dimension_numbers<[1], [0], [0], [1], [0, 0, 1, 1], [], []>} : vector<16x128xbf16>, vector<128x64xbf16>, vector<16x64xf32> -> vector<16x64xf32>
    %53 = arith.addf %47, %52 : vector<16x64xf32>
    %54 = vector.extract_strided_slice %22 {offsets = [5, 0, 0], sizes = [1, 16, 128], strides = [1, 1, 1]} : vector<16x16x128xbf16> to vector<1x16x128xbf16>
    %55 = vector.shape_cast %54 : vector<1x16x128xbf16> to vector<16x128xbf16>
    %c5 = arith.constant 5 : index
    %c0_25 = arith.constant 0 : index
    %c0_26 = arith.constant 0 : index
    %56 = vector.load %arg4[%c5, %c0_25, %c0_26] : memref<16x128x64xbf16, #tpu.memory_space<vmem>>, vector<1x128x64xbf16>
    %57 = vector.shape_cast %56 : vector<1x128x64xbf16> to vector<128x64xbf16>
    %cst_27 = arith.constant dense<0.000000e+00> : vector<16x64xf32>
    %58 = tpu.matmul %55, %57, %cst_27 {dimension_numbers = #tpu.dot_dimension_numbers<[1], [0], [0], [1], [0, 0, 1, 1], [], []>} : vector<16x128xbf16>, vector<128x64xbf16>, vector<16x64xf32> -> vector<16x64xf32>
    %59 = arith.addf %53, %58 : vector<16x64xf32>
    %60 = vector.extract_strided_slice %22 {offsets = [6, 0, 0], sizes = [1, 16, 128], strides = [1, 1, 1]} : vector<16x16x128xbf16> to vector<1x16x128xbf16>
    %61 = vector.shape_cast %60 : vector<1x16x128xbf16> to vector<16x128xbf16>
    %c6 = arith.constant 6 : index
    %c0_28 = arith.constant 0 : index
    %c0_29 = arith.constant 0 : index
    %62 = vector.load %arg4[%c6, %c0_28, %c0_29] : memref<16x128x64xbf16, #tpu.memory_space<vmem>>, vector<1x128x64xbf16>
    %63 = vector.shape_cast %62 : vector<1x128x64xbf16> to vector<128x64xbf16>
    %cst_30 = arith.constant dense<0.000000e+00> : vector<16x64xf32>
    %64 = tpu.matmul %61, %63, %cst_30 {dimension_numbers = #tpu.dot_dimension_numbers<[1], [0], [0], [1], [0, 0, 1, 1], [], []>} : vector<16x128xbf16>, vector<128x64xbf16>, vector<16x64xf32> -> vector<16x64xf32>
    %65 = arith.addf %59, %64 : vector<16x64xf32>
    %66 = vector.extract_strided_slice %22 {offsets = [7, 0, 0], sizes = [1, 16, 128], strides = [1, 1, 1]} : vector<16x16x128xbf16> to vector<1x16x128xbf16>
    %67 = vector.shape_cast %66 : vector<1x16x128xbf16> to vector<16x128xbf16>
    %c7 = arith.constant 7 : index
    %c0_31 = arith.constant 0 : index
    %c0_32 = arith.constant 0 : index
    %68 = vector.load %arg4[%c7, %c0_31, %c0_32] : memref<16x128x64xbf16, #tpu.memory_space<vmem>>, vector<1x128x64xbf16>
    %69 = vector.shape_cast %68 : vector<1x128x64xbf16> to vector<128x64xbf16>
    %cst_33 = arith.constant dense<0.000000e+00> : vector<16x64xf32>
    %70 = tpu.matmul %67, %69, %cst_33 {dimension_numbers = #tpu.dot_dimension_numbers<[1], [0], [0], [1], [0, 0, 1, 1], [], []>} : vector<16x128xbf16>, vector<128x64xbf16>, vector<16x64xf32> -> vector<16x64xf32>
    %71 = arith.addf %65, %70 : vector<16x64xf32>
    %72 = vector.extract_strided_slice %22 {offsets = [8, 0, 0], sizes = [1, 16, 128], strides = [1, 1, 1]} : vector<16x16x128xbf16> to vector<1x16x128xbf16>
    %73 = vector.shape_cast %72 : vector<1x16x128xbf16> to vector<16x128xbf16>
    %c8 = arith.constant 8 : index
    %c0_34 = arith.constant 0 : index
    %c0_35 = arith.constant 0 : index
    %74 = vector.load %arg4[%c8, %c0_34, %c0_35] : memref<16x128x64xbf16, #tpu.memory_space<vmem>>, vector<1x128x64xbf16>
    %75 = vector.shape_cast %74 : vector<1x128x64xbf16> to vector<128x64xbf16>
    %cst_36 = arith.constant dense<0.000000e+00> : vector<16x64xf32>
    %76 = tpu.matmul %73, %75, %cst_36 {dimension_numbers = #tpu.dot_dimension_numbers<[1], [0], [0], [1], [0, 0, 1, 1], [], []>} : vector<16x128xbf16>, vector<128x64xbf16>, vector<16x64xf32> -> vector<16x64xf32>
    %77 = arith.addf %71, %76 : vector<16x64xf32>
    %78 = vector.extract_strided_slice %22 {offsets = [9, 0, 0], sizes = [1, 16, 128], strides = [1, 1, 1]} : vector<16x16x128xbf16> to vector<1x16x128xbf16>
    %79 = vector.shape_cast %78 : vector<1x16x128xbf16> to vector<16x128xbf16>
    %c9 = arith.constant 9 : index
    %c0_37 = arith.constant 0 : index
    %c0_38 = arith.constant 0 : index
    %80 = vector.load %arg4[%c9, %c0_37, %c0_38] : memref<16x128x64xbf16, #tpu.memory_space<vmem>>, vector<1x128x64xbf16>
    %81 = vector.shape_cast %80 : vector<1x128x64xbf16> to vector<128x64xbf16>
    %cst_39 = arith.constant dense<0.000000e+00> : vector<16x64xf32>
    %82 = tpu.matmul %79, %81, %cst_39 {dimension_numbers = #tpu.dot_dimension_numbers<[1], [0], [0], [1], [0, 0, 1, 1], [], []>} : vector<16x128xbf16>, vector<128x64xbf16>, vector<16x64xf32> -> vector<16x64xf32>
    %83 = arith.addf %77, %82 : vector<16x64xf32>
    %84 = vector.extract_strided_slice %22 {offsets = [10, 0, 0], sizes = [1, 16, 128], strides = [1, 1, 1]} : vector<16x16x128xbf16> to vector<1x16x128xbf16>
    %85 = vector.shape_cast %84 : vector<1x16x128xbf16> to vector<16x128xbf16>
    %c10 = arith.constant 10 : index
    %c0_40 = arith.constant 0 : index
    %c0_41 = arith.constant 0 : index
    %86 = vector.load %arg4[%c10, %c0_40, %c0_41] : memref<16x128x64xbf16, #tpu.memory_space<vmem>>, vector<1x128x64xbf16>
    %87 = vector.shape_cast %86 : vector<1x128x64xbf16> to vector<128x64xbf16>
    %cst_42 = arith.constant dense<0.000000e+00> : vector<16x64xf32>
    %88 = tpu.matmul %85, %87, %cst_42 {dimension_numbers = #tpu.dot_dimension_numbers<[1], [0], [0], [1], [0, 0, 1, 1], [], []>} : vector<16x128xbf16>, vector<128x64xbf16>, vector<16x64xf32> -> vector<16x64xf32>
    %89 = arith.addf %83, %88 : vector<16x64xf32>
    %90 = vector.extract_strided_slice %22 {offsets = [11, 0, 0], sizes = [1, 16, 128], strides = [1, 1, 1]} : vector<16x16x128xbf16> to vector<1x16x128xbf16>
    %91 = vector.shape_cast %90 : vector<1x16x128xbf16> to vector<16x128xbf16>
    %c11 = arith.constant 11 : index
    %c0_43 = arith.constant 0 : index
    %c0_44 = arith.constant 0 : index
    %92 = vector.load %arg4[%c11, %c0_43, %c0_44] : memref<16x128x64xbf16, #tpu.memory_space<vmem>>, vector<1x128x64xbf16>
    %93 = vector.shape_cast %92 : vector<1x128x64xbf16> to vector<128x64xbf16>
    %cst_45 = arith.constant dense<0.000000e+00> : vector<16x64xf32>
    %94 = tpu.matmul %91, %93, %cst_45 {dimension_numbers = #tpu.dot_dimension_numbers<[1], [0], [0], [1], [0, 0, 1, 1], [], []>} : vector<16x128xbf16>, vector<128x64xbf16>, vector<16x64xf32> -> vector<16x64xf32>
    %95 = arith.addf %89, %94 : vector<16x64xf32>
    %96 = vector.extract_strided_slice %22 {offsets = [12, 0, 0], sizes = [1, 16, 128], strides = [1, 1, 1]} : vector<16x16x128xbf16> to vector<1x16x128xbf16>
    %97 = vector.shape_cast %96 : vector<1x16x128xbf16> to vector<16x128xbf16>
    %c12 = arith.constant 12 : index
    %c0_46 = arith.constant 0 : index
    %c0_47 = arith.constant 0 : index
    %98 = vector.load %arg4[%c12, %c0_46, %c0_47] : memref<16x128x64xbf16, #tpu.memory_space<vmem>>, vector<1x128x64xbf16>
    %99 = vector.shape_cast %98 : vector<1x128x64xbf16> to vector<128x64xbf16>
    %cst_48 = arith.constant dense<0.000000e+00> : vector<16x64xf32>
    %100 = tpu.matmul %97, %99, %cst_48 {dimension_numbers = #tpu.dot_dimension_numbers<[1], [0], [0], [1], [0, 0, 1, 1], [], []>} : vector<16x128xbf16>, vector<128x64xbf16>, vector<16x64xf32> -> vector<16x64xf32>
    %101 = arith.addf %95, %100 : vector<16x64xf32>
    %102 = vector.extract_strided_slice %22 {offsets = [13, 0, 0], sizes = [1, 16, 128], strides = [1, 1, 1]} : vector<16x16x128xbf16> to vector<1x16x128xbf16>
    %103 = vector.shape_cast %102 : vector<1x16x128xbf16> to vector<16x128xbf16>
    %c13 = arith.constant 13 : index
    %c0_49 = arith.constant 0 : index
    %c0_50 = arith.constant 0 : index
    %104 = vector.load %arg4[%c13, %c0_49, %c0_50] : memref<16x128x64xbf16, #tpu.memory_space<vmem>>, vector<1x128x64xbf16>
    %105 = vector.shape_cast %104 : vector<1x128x64xbf16> to vector<128x64xbf16>
    %cst_51 = arith.constant dense<0.000000e+00> : vector<16x64xf32>
    %106 = tpu.matmul %103, %105, %cst_51 {dimension_numbers = #tpu.dot_dimension_numbers<[1], [0], [0], [1], [0, 0, 1, 1], [], []>} : vector<16x128xbf16>, vector<128x64xbf16>, vector<16x64xf32> -> vector<16x64xf32>
    %107 = arith.addf %101, %106 : vector<16x64xf32>
    %108 = vector.extract_strided_slice %22 {offsets = [14, 0, 0], sizes = [1, 16, 128], strides = [1, 1, 1]} : vector<16x16x128xbf16> to vector<1x16x128xbf16>
    %109 = vector.shape_cast %108 : vector<1x16x128xbf16> to vector<16x128xbf16>
    %c14 = arith.constant 14 : index
    %c0_52 = arith.constant 0 : index
    %c0_53 = arith.constant 0 : index
    %110 = vector.load %arg4[%c14, %c0_52, %c0_53] : memref<16x128x64xbf16, #tpu.memory_space<vmem>>, vector<1x128x64xbf16>
    %111 = vector.shape_cast %110 : vector<1x128x64xbf16> to vector<128x64xbf16>
    %cst_54 = arith.constant dense<0.000000e+00> : vector<16x64xf32>
    %112 = tpu.matmul %109, %111, %cst_54 {dimension_numbers = #tpu.dot_dimension_numbers<[1], [0], [0], [1], [0, 0, 1, 1], [], []>} : vector<16x128xbf16>, vector<128x64xbf16>, vector<16x64xf32> -> vector<16x64xf32>
    %113 = arith.addf %107, %112 : vector<16x64xf32>
    %114 = vector.extract_strided_slice %22 {offsets = [15, 0, 0], sizes = [1, 16, 128], strides = [1, 1, 1]} : vector<16x16x128xbf16> to vector<1x16x128xbf16>
    %115 = vector.shape_cast %114 : vector<1x16x128xbf16> to vector<16x128xbf16>
    %c15 = arith.constant 15 : index
    %c0_55 = arith.constant 0 : index
    %c0_56 = arith.constant 0 : index
    %116 = vector.load %arg4[%c15, %c0_55, %c0_56] : memref<16x128x64xbf16, #tpu.memory_space<vmem>>, vector<1x128x64xbf16>
    %117 = vector.shape_cast %116 : vector<1x128x64xbf16> to vector<128x64xbf16>
    %cst_57 = arith.constant dense<0.000000e+00> : vector<16x64xf32>
    %118 = tpu.matmul %115, %117, %cst_57 {dimension_numbers = #tpu.dot_dimension_numbers<[1], [0], [0], [1], [0, 0, 1, 1], [], []>} : vector<16x128xbf16>, vector<128x64xbf16>, vector<16x64xf32> -> vector<16x64xf32>
    %119 = arith.addf %113, %118 : vector<16x64xf32>
    %c0_58 = arith.constant 0 : index
    %c0_59 = arith.constant 0 : index
    %120 = vector.load %arg5[%c0_58, %c0_59] : memref<1x64xf32, #tpu.memory_space<vmem>>, vector<1x64xf32>
    %121 = vector.broadcast %120 : vector<1x64xf32> to vector<16x64xf32>
    %122 = arith.addf %119, %121 : vector<16x64xf32>
    %cst_60 = arith.constant 0.000000e+00 : f32
    %123 = vector.broadcast %cst_60 : f32 to vector<16x64xf32>
    %124 = arith.maximumf %122, %123 : vector<16x64xf32>
    %125 = arith.truncf %124 : vector<16x64xf32> to vector<16x64xbf16>
    %c0_61 = arith.constant 0 : index
    %c0_62 = arith.constant 0 : index
    %126 = vector.load %arg6[%c0_61, %c0_62] : memref<64x128xbf16, #tpu.memory_space<vmem>>, vector<64x128xbf16>
    %cst_63 = arith.constant dense<0.000000e+00> : vector<16x128xf32>
    %127 = tpu.matmul %125, %126, %cst_63 {dimension_numbers = #tpu.dot_dimension_numbers<[1], [0], [0], [1], [0, 0, 1, 1], [], []>} : vector<16x64xbf16>, vector<64x128xbf16>, vector<16x128xf32> -> vector<16x128xf32>
    %c0_64 = arith.constant 0 : index
    %c0_65 = arith.constant 0 : index
    %128 = vector.load %arg7[%c0_64, %c0_65] : memref<1x128xf32, #tpu.memory_space<vmem>>, vector<1x128xf32>
    %129 = vector.broadcast %128 : vector<1x128xf32> to vector<16x128xf32>
    %130 = arith.addf %127, %129 : vector<16x128xf32>
    %131 = tpu.iota {dimensions = array<i32: 1>} : vector<16x128xi32>
    %c10_i32 = arith.constant 10 : i32
    %132 = vector.broadcast %c10_i32 : i32 to vector<16x128xi32>
    %133 = arith.cmpi slt, %131, %132 : vector<16x128xi32>
    %cst_66 = arith.constant -1.000000e+30 : f32
    %134 = vector.broadcast %cst_66 : f32 to vector<16x128xf32>
    %135 = arith.select %133, %130, %134 : vector<16x128xi1>, vector<16x128xf32>
    %cst_67 = arith.constant dense<0xFF800000> : vector<16xf32>
    %136 = vector.multi_reduction <maximumf>, %135, %cst_67 [1] : vector<16x128xf32> to vector<16xf32>
    %137 = vector.shape_cast %136 : vector<16xf32> to vector<16x1xf32>
    %138 = vector.broadcast %137 : vector<16x1xf32> to vector<16x128xf32>
    %139 = arith.subf %135, %138 : vector<16x128xf32>
    %140 = math.exp %139 : vector<16x128xf32>
    %cst_68 = arith.constant dense<0.000000e+00> : vector<16xf32>
    %141 = vector.multi_reduction <add>, %140, %cst_68 [1] : vector<16x128xf32> to vector<16xf32>
    %142 = vector.shape_cast %141 : vector<16xf32> to vector<16x1xf32>
    %143 = math.log %142 : vector<16x1xf32>
    %144 = vector.broadcast %143 : vector<16x1xf32> to vector<16x128xf32>
    %145 = arith.subf %139, %144 : vector<16x128xf32>
    %c0_69 = arith.constant 0 : index
    %c0_70 = arith.constant 0 : index
    %146 = vector.load %arg8[%c0_69, %c0_70] : memref<16x128xf32, #tpu.memory_space<vmem>>, vector<16x128xf32>
    tpu.vector_store %arg8[%c0_69, %c0_70], %145 {strides = array<i32>} : memref<16x128xf32, #tpu.memory_space<vmem>>, vector<16x128xf32>,
    return
  }
  func.func @transform_0(%arg0: i32) -> (i32, i32, i32, i32) {
    %c0_i32 = arith.constant 0 : i32
    %c0_i32_0 = arith.constant 0 : i32
    %c0_i32_1 = arith.constant 0 : i32
    %c0_i32_2 = arith.constant 0 : i32
    return %c0_i32, %c0_i32_0, %arg0, %c0_i32_1 : i32, i32, i32, i32
  }
  func.func @transform_1(%arg0: i32) -> (i32, i32) {
    %c0_i32 = arith.constant 0 : i32
    %c0_i32_0 = arith.constant 0 : i32
    %c0_i32_1 = arith.constant 0 : i32
    return %c0_i32, %c0_i32_0 : i32, i32
  }
  func.func @transform_2(%arg0: i32) -> (i32, i32) {
    %c0_i32 = arith.constant 0 : i32
    %c0_i32_0 = arith.constant 0 : i32
    %c0_i32_1 = arith.constant 0 : i32
    return %c0_i32, %c0_i32_0 : i32, i32
  }
  func.func @transform_3(%arg0: i32) -> (i32, i32, i32) {
    %c0_i32 = arith.constant 0 : i32
    %c0_i32_0 = arith.constant 0 : i32
    %c0_i32_1 = arith.constant 0 : i32
    %c0_i32_2 = arith.constant 0 : i32
    return %c0_i32, %c0_i32_0, %c0_i32_1 : i32, i32, i32
  }
  func.func @transform_4(%arg0: i32) -> (i32, i32) {
    %c0_i32 = arith.constant 0 : i32
    %c0_i32_0 = arith.constant 0 : i32
    %c0_i32_1 = arith.constant 0 : i32
    return %c0_i32, %c0_i32_0 : i32, i32
  }
  func.func @transform_5(%arg0: i32) -> (i32, i32) {
    %c0_i32 = arith.constant 0 : i32
    %c0_i32_0 = arith.constant 0 : i32
    %c0_i32_1 = arith.constant 0 : i32
    return %c0_i32, %c0_i32_0 : i32, i32
  }
  func.func @transform_6(%arg0: i32) -> (i32, i32) {
    %c0_i32 = arith.constant 0 : i32
    %c0_i32_0 = arith.constant 0 : i32
    %c0_i32_1 = arith.constant 0 : i32
    return %c0_i32, %c0_i32_0 : i32, i32
  }
  func.func @transform_7(%arg0: i32) -> (i32, i32) {
    %c0_i32 = arith.constant 0 : i32
    %c0_i32_0 = arith.constant 0 : i32
    return %arg0, %c0_i32 : i32, i32
  }
}

</mosaic_0001>

<llo_original>
// kernel: mnist_comparator_forward.2
$region0: #{mnist_comparator_forward.2}
  #allocation0 [shape = 'u32[]', space=smem, size = 0x4, offset = 0x4, fixed_abs, tag = 'smem constant byte address 0x4 - core index']
  #allocation1 [shape = 'u32[72,128]{1,0:T(1,128)}', space=vmem, size = 0x9000, scoped, tag = 'internal scratch']
  %s0 = inlined_call_operand.vmem [shape: bf16[4,288,25], index: 0, kind: input, shape index: {}]
  %s1 = inlined_call_operand.vmem [shape: bf16[25,128], index: 1, kind: input, shape index: {}]
  %s2 = inlined_call_operand.vmem [shape: f32[1,128], index: 2, kind: input, shape index: {}]
  %s3 = inlined_call_operand.vmem [shape: bf16[288,128], index: 3, kind: output, shape index: {}]
  %s4 = sld [smem:[#allocation0]]
  $region22: #{mnist_comparator_forward.2} parent=0
    _
  %s6 = ssub.s32 1, %s4
  %s7 = scalar_select 0, %s6, %s4
  // Predicated region
  $region2: #{mnist_comparator_forward.2} parent=0 // pred_check
    _
  $region3: #{mnist_comparator_forward.2} parent=0 // pred_check_branch
    %9 = sbr.rel (0) target = $region5
  $region4: #{mnist_comparator_forward.2} parent=0 // pred_region
    _
  $region5: #{mnist_comparator_forward.2} parent=0 // pred_fallthru
    _
  // Predicated region
  $region6: #{mnist_comparator_forward.2} parent=0 // pred_check
    _
  $region7: #{mnist_comparator_forward.2} parent=0 // pred_check_branch
    %11 = sbr.rel (0) target = $region9
  $region8: #{mnist_comparator_forward.2} parent=0 // pred_region
    _
  $region9: #{mnist_comparator_forward.2} parent=0 // pred_fallthru
    _
  // Predicated region
  $region10: #{mnist_comparator_forward.2} parent=0 // pred_check
    _
  $region11: #{mnist_comparator_forward.2} parent=0 // pred_check_branch
    %13 = sbr.rel (0) target = $region13
  $region12: #{mnist_comparator_forward.2} parent=0 // pred_region
    _
  $region13: #{mnist_comparator_forward.2} parent=0 // pred_fallthru
    _
  %v15 = vld [vmem:[%s0] sm:$0xf]
  %v16 = vld [vmem:[%s0 + $0x4] sm:$0xf]
  %v17 = vld [vmem:[%s0 + $0x8] sm:$0xf]
  %v18 = vld [vmem:[%s0 + $0xc] sm:$0xf]
  %v19 = vld [vmem:[%s0 + $0x10] sm:$0xf]
  %v20 = vld [vmem:[%s0 + $0x14] sm:$0xf]
  %v21 = vld [vmem:[%s0 + $0x18] sm:$0xf]
  %v22 = vld [vmem:[%s0 + $0x1c] sm:$0xf]
  %v23 = vld [vmem:[%s0 + $0x20] sm:$0xf]
  %v24 = vld [vmem:[%s0 + $0x24] sm:$0xf]
  %v25 = vld [vmem:[%s0 + $0x28] sm:$0xf]
  %v26 = vld [vmem:[%s0 + $0x2c] sm:$0xf]
  %v27 = vld [vmem:[%s0 + $0x30] sm:$0xf]
  %v28 = vld [vmem:[%s0 + $0x34] sm:$0xf]
  %v29 = vld [vmem:[%s0 + $0x38] sm:$0xf]
  %v30 = vld [vmem:[%s0 + $0x3c] sm:$0xf]
  %v31 = vld [vmem:[%s0 + $0x40] sm:$0xf]
  %v32 = vld [vmem:[%s0 + $0x44] sm:$0xf]
  %v33 = vld [vmem:[%s0 + $0x48] sm:$0xf]
  %v34 = vld [vmem:[%s0 + $0x4c] sm:$0xf]
  %v35 = vld [vmem:[%s0 + $0x50] sm:$0xf]
  %v36 = vld [vmem:[%s0 + $0x54] sm:$0xf]
  %v37 = vld [vmem:[%s0 + $0x58] sm:$0xf]
  %v38 = vld [vmem:[%s0 + $0x5c] sm:$0xf]
  %v39 = vld [vmem:[%s0 + $0x60] sm:$0xf]
  %v40 = vld [vmem:[%s0 + $0x64] sm:$0xf]
  %v41 = vld [vmem:[%s0 + $0x68] sm:$0xf]
  %v42 = vld [vmem:[%s0 + $0x6c] sm:$0xf]
  %v43 = vld [vmem:[%s0 + $0x70] sm:$0xf]
  %v44 = vld [vmem:[%s0 + $0x74] sm:$0xf]
  %v45 = vld [vmem:[%s0 + $0x78] sm:$0xf]
  %v46 = vld [vmem:[%s0 + $0x7c] sm:$0xf]
  %v47 = vld [vmem:[%s0 + $0x80] sm:$0xf]
  %v48 = vld [vmem:[%s0 + $0x84] sm:$0xf]
  %v49 = vld [vmem:[%s0 + $0x88] sm:$0xf]
  %v50 = vld [vmem:[%s0 + $0x8c] sm:$0xf]
  %v51 = vld [vmem:[%s0 + $0x90] sm:$0xf]
  %v52 = vld [vmem:[%s0 + $0x94] sm:$0xf]
  %v53 = vld [vmem:[%s0 + $0x98] sm:$0xf]
  %v54 = vld [vmem:[%s0 + $0x9c] sm:$0xf]
  %v55 = vld [vmem:[%s0 + $0xa0] sm:$0xf]
  %v56 = vld [vmem:[%s0 + $0xa4] sm:$0xf]
  %v57 = vld [vmem:[%s0 + $0xa8] sm:$0xf]
  %v58 = vld [vmem:[%s0 + $0xac] sm:$0xf]
  %v59 = vld [vmem:[%s0 + $0xb0] sm:$0xf]
  %v60 = vld [vmem:[%s0 + $0xb4] sm:$0xf]
  %v61 = vld [vmem:[%s0 + $0xb8] sm:$0xf]
  %v62 = vld [vmem:[%s0 + $0xbc] sm:$0xf]
  %v63 = vld [vmem:[%s0 + $0xc0] sm:$0xf]
  %v64 = vld [vmem:[%s0 + $0xc4] sm:$0xf]
  %v65 = vld [vmem:[%s0 + $0xc8] sm:$0xf]
  %v66 = vld [vmem:[%s0 + $0xcc] sm:$0xf]
  %v67 = vld [vmem:[%s0 + $0xd0] sm:$0xf]
  %v68 = vld [vmem:[%s0 + $0xd4] sm:$0xf]
  %v69 = vld [vmem:[%s0 + $0xd8] sm:$0xf]
  %v70 = vld [vmem:[%s0 + $0xdc] sm:$0xf]
  %v71 = vld [vmem:[%s0 + $0xe0] sm:$0xf]
  %v72 = vld [vmem:[%s0 + $0xe4] sm:$0xf]
  %v73 = vld [vmem:[%s0 + $0xe8] sm:$0xf]
  %v74 = vld [vmem:[%s0 + $0xec] sm:$0xf]
  %v75 = vld [vmem:[%s0 + $0xf0] sm:$0xf]
  %v76 = vld [vmem:[%s0 + $0xf4] sm:$0xf]
  %v77 = vld [vmem:[%s0 + $0xf8] sm:$0xf]
  %v78 = vld [vmem:[%s0 + $0xfc] sm:$0xf]
  %v79 = vld [vmem:[%s0 + $0x100] sm:$0xf]
  %v80 = vld [vmem:[%s0 + $0x104] sm:$0xf]
  %v81 = vld [vmem:[%s0 + $0x108] sm:$0xf]
  %v82 = vld [vmem:[%s0 + $0x10c] sm:$0xf]
  %v83 = vld [vmem:[%s0 + $0x110] sm:$0xf]
  %v84 = vld [vmem:[%s0 + $0x114] sm:$0xf]
  %v85 = vld [vmem:[%s0 + $0x118] sm:$0xf]
  %v86 = vld [vmem:[%s0 + $0x11c] sm:$0xf]
  %v87 = vld [vmem:[%s0 + $0x120] sm:$0xf]
  %v88 = vld [vmem:[%s0 + $0x124] sm:$0xf]
  %v89 = vld [vmem:[%s0 + $0x128] sm:$0xf]
  %v90 = vld [vmem:[%s0 + $0x12c] sm:$0xf]
  %v91 = vld [vmem:[%s0 + $0x130] sm:$0xf]
  %v92 = vld [vmem:[%s0 + $0x134] sm:$0xf]
  %v93 = vld [vmem:[%s0 + $0x138] sm:$0xf]
  %v94 = vld [vmem:[%s0 + $0x13c] sm:$0xf]
  %v95 = vld [vmem:[%s0 + $0x140] sm:$0xf]
  %v96 = vld [vmem:[%s0 + $0x144] sm:$0xf]
  %v97 = vld [vmem:[%s0 + $0x148] sm:$0xf]
  %v98 = vld [vmem:[%s0 + $0x14c] sm:$0xf]
  %v99 = vld [vmem:[%s0 + $0x150] sm:$0xf]
  %v100 = vld [vmem:[%s0 + $0x154] sm:$0xf]
  %v101 = vld [vmem:[%s0 + $0x158] sm:$0xf]
  %v102 = vld [vmem:[%s0 + $0x15c] sm:$0xf]
  %v103 = vld [vmem:[%s0 + $0x160] sm:$0xf]
  %v104 = vld [vmem:[%s0 + $0x164] sm:$0xf]
  %v105 = vld [vmem:[%s0 + $0x168] sm:$0xf]
  %v106 = vld [vmem:[%s0 + $0x16c] sm:$0xf]
  %v107 = vld [vmem:[%s0 + $0x170] sm:$0xf]
  %v108 = vld [vmem:[%s0 + $0x174] sm:$0xf]
  %v109 = vld [vmem:[%s0 + $0x178] sm:$0xf]
  %v110 = vld [vmem:[%s0 + $0x17c] sm:$0xf]
  %v111 = vld [vmem:[%s0 + $0x180] sm:$0xf]
  %v112 = vld [vmem:[%s0 + $0x184] sm:$0xf]
  %v113 = vld [vmem:[%s0 + $0x188] sm:$0xf]
  %v114 = vld [vmem:[%s0 + $0x18c] sm:$0xf]
  %v115 = vld [vmem:[%s0 + $0x190] sm:$0xf]
  %v116 = vld [vmem:[%s0 + $0x194] sm:$0xf]
  %v117 = vld [vmem:[%s0 + $0x198] sm:$0xf]
  %v118 = vld [vmem:[%s0 + $0x19c] sm:$0xf]
  %v119 = vld [vmem:[%s0 + $0x1a0] sm:$0xf]
  %v120 = vld [vmem:[%s0 + $0x1a4] sm:$0xf]
  %v121 = vld [vmem:[%s0 + $0x1a8] sm:$0xf]
  %v122 = vld [vmem:[%s0 + $0x1ac] sm:$0xf]
  %v123 = vld [vmem:[%s0 + $0x1b0] sm:$0xf]
  %v124 = vld [vmem:[%s0 + $0x1b4] sm:$0xf]
  %v125 = vld [vmem:[%s0 + $0x1b8] sm:$0xf]
  %v126 = vld [vmem:[%s0 + $0x1bc] sm:$0xf]
  %v127 = vld [vmem:[%s0 + $0x1c0] sm:$0xf]
  %v128 = vld [vmem:[%s0 + $0x1c4] sm:$0xf]
  %v129 = vld [vmem:[%s0 + $0x1c8] sm:$0xf]
  %v130 = vld [vmem:[%s0 + $0x1cc] sm:$0xf]
  %v131 = vld [vmem:[%s0 + $0x1d0] sm:$0xf]
  %v132 = vld [vmem:[%s0 + $0x1d4] sm:$0xf]
  %v133 = vld [vmem:[%s0 + $0x1d8] sm:$0xf]
  %v134 = vld [vmem:[%s0 + $0x1dc] sm:$0xf]
  %v135 = vld [vmem:[%s0 + $0x1e0] sm:$0xf]
  %v136 = vld [vmem:[%s0 + $0x1e4] sm:$0xf]
  %v137 = vld [vmem:[%s0 + $0x1e8] sm:$0xf]
  %v138 = vld [vmem:[%s0 + $0x1ec] sm:$0xf]
  %v139 = vld [vmem:[%s0 + $0x1f0] sm:$0xf]
  %v140 = vld [vmem:[%s0 + $0x1f4] sm:$0xf]
  %v141 = vld [vmem:[%s0 + $0x1f8] sm:$0xf]
  %v142 = vld [vmem:[%s0 + $0x1fc] sm:$0xf]
  %v143 = vld [vmem:[%s0 + $0x200] sm:$0xf]
  %v144 = vld [vmem:[%s0 + $0x204] sm:$0xf]
  %v145 = vld [vmem:[%s0 + $0x208] sm:$0xf]
  %v146 = vld [vmem:[%s0 + $0x20c] sm:$0xf]
  %v147 = vld [vmem:[%s0 + $0x210] sm:$0xf]
  %v148 = vld [vmem:[%s0 + $0x214] sm:$0xf]
  %v149 = vld [vmem:[%s0 + $0x218] sm:$0xf]
  %v150 = vld [vmem:[%s0 + $0x21c] sm:$0xf]
  %v151 = vld [vmem:[%s0 + $0x220] sm:$0xf]
  %v152 = vld [vmem:[%s0 + $0x224] sm:$0xf]
  %v153 = vld [vmem:[%s0 + $0x228] sm:$0xf]
  %v154 = vld [vmem:[%s0 + $0x22c] sm:$0xf]
  %v155 = vld [vmem:[%s0 + $0x230] sm:$0xf]
  %v156 = vld [vmem:[%s0 + $0x234] sm:$0xf]
  %v157 = vld [vmem:[%s0 + $0x238] sm:$0xf]
  %v158 = vld [vmem:[%s0 + $0x23c] sm:$0xf]
  %v159 = vld [vmem:[%s1] sm:$0xf]
  %v160 = vld [vmem:[%s1 + $0x4] sm:$0xf]
  %v161 = vld [vmem:[%s1 + $0x8] sm:$0xf]
  %v162 = vld [vmem:[%s1 + $0xc] sm:$0x1]
  %v307 = vunpack.c.l.b16 %v15
  %v308 = vunpack.c.l.b16 %v16
  %v309 = vunpack.c.l.b16 %v17
  %v310 = vunpack.c.l.b16 %v18
  %v311 = vunpack.c.l.b16 %v19
  %v312 = vunpack.c.l.b16 %v20
  %v313 = vunpack.c.l.b16 %v21
  %v314 = vunpack.c.l.b16 %v22
  %v315 = vunpack.c.l.b16 %v23
  %v316 = vunpack.c.l.b16 %v24
  %v317 = vunpack.c.l.b16 %v25
  %v318 = vunpack.c.l.b16 %v26
  %v319 = vunpack.c.l.b16 %v27
  %v320 = vunpack.c.l.b16 %v28
  %v321 = vunpack.c.l.b16 %v29
  %v322 = vunpack.c.l.b16 %v30
  %v323 = vunpack.c.l.b16 %v31
  %v324 = vunpack.c.l.b16 %v32
  %v325 = vunpack.c.l.b16 %v33
  %v326 = vunpack.c.l.b16 %v34
  %v327 = vunpack.c.l.b16 %v35
  %v328 = vunpack.c.l.b16 %v36
  %v329 = vunpack.c.l.b16 %v37
  %v330 = vunpack.c.l.b16 %v38
  %v331 = vunpack.c.l.b16 %v39
  %v332 = vunpack.c.l.b16 %v40
  %v333 = vunpack.c.l.b16 %v41
  %v334 = vunpack.c.l.b16 %v42
  %v335 = vunpack.c.l.b16 %v43
  %v336 = vunpack.c.l.b16 %v44
  %v337 = vunpack.c.l.b16 %v45
  %v338 = vunpack.c.l.b16 %v46
  %v339 = vunpack.c.l.b16 %v47
  %v340 = vunpack.c.l.b16 %v48
  %v341 = vunpack.c.l.b16 %v49
  %v342 = vunpack.c.l.b16 %v50
  %v343 = vunpack.c.l.b16 %v51
  %v344 = vunpack.c.l.b16 %v52
  %v345 = vunpack.c.l.b16 %v53
  %v346 = vunpack.c.l.b16 %v54
  %v347 = vunpack.c.l.b16 %v55
  %v348 = vunpack.c.l.b16 %v56
  %v349 = vunpack.c.l.b16 %v57
  %v350 = vunpack.c.l.b16 %v58
  %v351 = vunpack.c.l.b16 %v59
  %v352 = vunpack.c.l.b16 %v60
  %v353 = vunpack.c.l.b16 %v61
  %v354 = vunpack.c.l.b16 %v62
  %v355 = vunpack.c.l.b16 %v63
  %v356 = vunpack.c.l.b16 %v64
  %v357 = vunpack.c.l.b16 %v65
  %v358 = vunpack.c.l.b16 %v66
  %v359 = vunpack.c.l.b16 %v67
  %v360 = vunpack.c.l.b16 %v68
  %v361 = vunpack.c.l.b16 %v69
  %v362 = vunpack.c.l.b16 %v70
  %v363 = vunpack.c.l.b16 %v71
  %v364 = vunpack.c.l.b16 %v72
  %v365 = vunpack.c.l.b16 %v73
  %v366 = vunpack.c.l.b16 %v74
  %v367 = vunpack.c.l.b16 %v75
  %v368 = vunpack.c.l.b16 %v76
  %v369 = vunpack.c.l.b16 %v77
  %v370 = vunpack.c.l.b16 %v78
  %v371 = vunpack.c.l.b16 %v79
  %v372 = vunpack.c.l.b16 %v80
  %v373 = vunpack.c.l.b16 %v81
  %v374 = vunpack.c.l.b16 %v82
  %v375 = vunpack.c.l.b16 %v83
  %v376 = vunpack.c.l.b16 %v84
  %v377 = vunpack.c.l.b16 %v85
  %v378 = vunpack.c.l.b16 %v86
  %v379 = vunpack.c.l.b16 %v87
  %v380 = vunpack.c.l.b16 %v88
  %v381 = vunpack.c.l.b16 %v89
  %v382 = vunpack.c.l.b16 %v90
  %v383 = vunpack.c.l.b16 %v91
  %v384 = vunpack.c.l.b16 %v92
  %v385 = vunpack.c.l.b16 %v93
  %v386 = vunpack.c.l.b16 %v94
  %v387 = vunpack.c.l.b16 %v95
  %v388 = vunpack.c.l.b16 %v96
  %v389 = vunpack.c.l.b16 %v97
  %v390 = vunpack.c.l.b16 %v98
  %v391 = vunpack.c.l.b16 %v99
  %v392 = vunpack.c.l.b16 %v100
  %v393 = vunpack.c.l.b16 %v101
  %v394 = vunpack.c.l.b16 %v102
  %v395 = vunpack.c.l.b16 %v103
  %v396 = vunpack.c.l.b16 %v104
  %v397 = vunpack.c.l.b16 %v105
  %v398 = vunpack.c.l.b16 %v106
  %v399 = vunpack.c.l.b16 %v107
  %v400 = vunpack.c.l.b16 %v108
  %v401 = vunpack.c.l.b16 %v109
  %v402 = vunpack.c.l.b16 %v110
  %v403 = vunpack.c.l.b16 %v111
  %v404 = vunpack.c.l.b16 %v112
  %v405 = vunpack.c.l.b16 %v113
  %v406 = vunpack.c.l.b16 %v114
  %v407 = vunpack.c.l.b16 %v115
  %v408 = vunpack.c.l.b16 %v116
  %v409 = vunpack.c.l.b16 %v117
  %v410 = vunpack.c.l.b16 %v118
  %v411 = vunpack.c.l.b16 %v119
  %v412 = vunpack.c.l.b16 %v120
  %v413 = vunpack.c.l.b16 %v121
  %v414 = vunpack.c.l.b16 %v122
  %v415 = vunpack.c.l.b16 %v123
  %v416 = vunpack.c.l.b16 %v124
  %v417 = vunpack.c.l.b16 %v125
  %v418 = vunpack.c.l.b16 %v126
  %v419 = vunpack.c.l.b16 %v127
  %v420 = vunpack.c.l.b16 %v128
  %v421 = vunpack.c.l.b16 %v129
  %v422 = vunpack.c.l.b16 %v130
  %v423 = vunpack.c.l.b16 %v131
  %v424 = vunpack.c.l.b16 %v132
  %v425 = vunpack.c.l.b16 %v133
  %v426 = vunpack.c.l.b16 %v134
  %v427 = vunpack.c.l.b16 %v135
  %v428 = vunpack.c.l.b16 %v136
  %v429 = vunpack.c.l.b16 %v137
  %v430 = vunpack.c.l.b16 %v138
  %v431 = vunpack.c.l.b16 %v139
  %v432 = vunpack.c.l.b16 %v140
  %v433 = vunpack.c.l.b16 %v141
  %v434 = vunpack.c.l.b16 %v142
  %v435 = vunpack.c.l.b16 %v143
  %v436 = vunpack.c.l.b16 %v144
  %v437 = vunpack.c.l.b16 %v145
  %v438 = vunpack.c.l.b16 %v146
  %v439 = vunpack.c.l.b16 %v147
  %v440 = vunpack.c.l.b16 %v148
  %v441 = vunpack.c.l.b16 %v149
  %v442 = vunpack.c.l.b16 %v150
  %v443 = vunpack.c.l.b16 %v151
  %v444 = vunpack.c.l.b16 %v152
  %v445 = vunpack.c.l.b16 %v153
  %v446 = vunpack.c.l.b16 %v154
  %v447 = vunpack.c.l.b16 %v155
  %v448 = vunpack.c.l.b16 %v156
  %v449 = vunpack.c.l.b16 %v157
  %v450 = vunpack.c.l.b16 %v158
  %v451 = vpack.c.b16 %v308, %v307
  %v452 = vpack.c.b16 %v310, %v309
  %v453 = vpack.c.b16 %v312, %v311
  %v454 = vpack.c.b16 %v314, %v313
  %v455 = vpack.c.b16 %v316, %v315
  %v456 = vpack.c.b16 %v318, %v317
  %v457 = vpack.c.b16 %v320, %v319
  %v458 = vpack.c.b16 %v322, %v321
  %v459 = vpack.c.b16 %v324, %v323
  %v460 = vpack.c.b16 %v326, %v325
  %v461 = vpack.c.b16 %v328, %v327
  %v462 = vpack.c.b16 %v330, %v329
  %v463 = vpack.c.b16 %v332, %v331
  %v464 = vpack.c.b16 %v334, %v333
  %v465 = vpack.c.b16 %v336, %v335
  %v466 = vpack.c.b16 %v338, %v337
  %v467 = vpack.c.b16 %v340, %v339
  %v468 = vpack.c.b16 %v342, %v341
  %v469 = vpack.c.b16 %v344, %v343
  %v470 = vpack.c.b16 %v346, %v345
  %v471 = vpack.c.b16 %v348, %v347
  %v472 = vpack.c.b16 %v350, %v349
  %v473 = vpack.c.b16 %v352, %v351
  %v474 = vpack.c.b16 %v354, %v353
  %v475 = vpack.c.b16 %v356, %v355
  %v476 = vpack.c.b16 %v358, %v357
  %v477 = vpack.c.b16 %v360, %v359
  %v478 = vpack.c.b16 %v362, %v361
  %v479 = vpack.c.b16 %v364, %v363
  %v480 = vpack.c.b16 %v366, %v365
  %v481 = vpack.c.b16 %v368, %v367
  %v482 = vpack.c.b16 %v370, %v369
  %v483 = vpack.c.b16 %v372, %v371
  %v484 = vpack.c.b16 %v374, %v373
  %v485 = vpack.c.b16 %v376, %v375
  %v486 = vpack.c.b16 %v378, %v377
  %v487 = vpack.c.b16 %v380, %v379
  %v488 = vpack.c.b16 %v382, %v381
  %v489 = vpack.c.b16 %v384, %v383
  %v490 = vpack.c.b16 %v386, %v385
  %v491 = vpack.c.b16 %v388, %v387
  %v492 = vpack.c.b16 %v390, %v389
  %v493 = vpack.c.b16 %v392, %v391
  %v494 = vpack.c.b16 %v394, %v393
  %v495 = vpack.c.b16 %v396, %v395
  %v496 = vpack.c.b16 %v398, %v397
  %v497 = vpack.c.b16 %v400, %v399
  %v498 = vpack.c.b16 %v402, %v401
  %v499 = vpack.c.b16 %v404, %v403
  %v500 = vpack.c.b16 %v406, %v405
  %v501 = vpack.c.b16 %v408, %v407
  %v502 = vpack.c.b16 %v410, %v409
  %v503 = vpack.c.b16 %v412, %v411
  %v504 = vpack.c.b16 %v414, %v413
  %v505 = vpack.c.b16 %v416, %v415
  %v506 = vpack.c.b16 %v418, %v417
  %v507 = vpack.c.b16 %v420, %v419
  %v508 = vpack.c.b16 %v422, %v421
  %v509 = vpack.c.b16 %v424, %v423
  %v510 = vpack.c.b16 %v426, %v425
  %v511 = vpack.c.b16 %v428, %v427
  %v512 = vpack.c.b16 %v430, %v429
  %v513 = vpack.c.b16 %v432, %v431
  %v514 = vpack.c.b16 %v434, %v433
  %v515 = vpack.c.b16 %v436, %v435
  %v516 = vpack.c.b16 %v438, %v437
  %v517 = vpack.c.b16 %v440, %v439
  %v518 = vpack.c.b16 %v442, %v441
  %v519 = vpack.c.b16 %v444, %v443
  %v520 = vpack.c.b16 %v446, %v445
  %v521 = vpack.c.b16 %v448, %v447
  %v522 = vpack.c.b16 %v450, %v449
  %v527 = vunpack.c.l.b16 %v159
  %v528 = vunpack.c.l.b16 %v160
  %v529 = vunpack.c.l.b16 %v161
  %v530 = vunpack.c.l.b16 %v162
  %v531 = vpack.c.b16 %v528, %v527
  %v532 = vpack.c.b16 %v530, %v529
  %vm534 = vcmask 203776
  %v536 = vsel %vm534, %v451, 0
  %v539 = vsel %vm534, %v452, 0
  %v542 = vsel %vm534, %v453, 0
  %v545 = vsel %vm534, %v454, 0
  %v548 = vsel %vm534, %v455, 0
  %v551 = vsel %vm534, %v456, 0
  %v554 = vsel %vm534, %v457, 0
  %v557 = vsel %vm534, %v458, 0
  %v560 = vsel %vm534, %v459, 0
  %v563 = vsel %vm534, %v460, 0
  %v566 = vsel %vm534, %v461, 0
  %v569 = vsel %vm534, %v462, 0
  %v572 = vsel %vm534, %v463, 0
  %v575 = vsel %vm534, %v464, 0
  %v578 = vsel %vm534, %v465, 0
  %v581 = vsel %vm534, %v466, 0
  %v584 = vsel %vm534, %v467, 0
  %v587 = vsel %vm534, %v468, 0
  %v590 = vsel %vm534, %v469, 0
  %v593 = vsel %vm534, %v470, 0
  %v596 = vsel %vm534, %v471, 0
  %v599 = vsel %vm534, %v472, 0
  %v602 = vsel %vm534, %v473, 0
  %v605 = vsel %vm534, %v474, 0
  %v608 = vsel %vm534, %v475, 0
  %v611 = vsel %vm534, %v476, 0
  %v614 = vsel %vm534, %v477, 0
  %v617 = vsel %vm534, %v478, 0
  %v620 = vsel %vm534, %v479, 0
  %v623 = vsel %vm534, %v480, 0
  %v626 = vsel %vm534, %v481, 0
  %v629 = vsel %vm534, %v482, 0
  %v632 = vsel %vm534, %v483, 0
  %v635 = vsel %vm534, %v484, 0
  %v638 = vsel %vm534, %v485, 0
  %v641 = vsel %vm534, %v486, 0
  %v644 = vsel %vm534, %v487, 0
  %v647 = vsel %vm534, %v488, 0
  %v650 = vsel %vm534, %v489, 0
  %v653 = vsel %vm534, %v490, 0
  %v656 = vsel %vm534, %v491, 0
  %v659 = vsel %vm534, %v492, 0
  %v662 = vsel %vm534, %v493, 0
  %v665 = vsel %vm534, %v494, 0
  %v668 = vsel %vm534, %v495, 0
  %v671 = vsel %vm534, %v496, 0
  %v674 = vsel %vm534, %v497, 0
  %v677 = vsel %vm534, %v498, 0
  %v680 = vsel %vm534, %v499, 0
  %v683 = vsel %vm534, %v500, 0
  %v686 = vsel %vm534, %v501, 0
  %v689 = vsel %vm534, %v502, 0
  %v692 = vsel %vm534, %v503, 0
  %v695 = vsel %vm534, %v504, 0
  %v698 = vsel %vm534, %v505, 0
  %v701 = vsel %vm534, %v506, 0
  %v704 = vsel %vm534, %v507, 0
  %v707 = vsel %vm534, %v508, 0
  %v710 = vsel %vm534, %v509, 0
  %v713 = vsel %vm534, %v510, 0
  %v716 = vsel %vm534, %v511, 0
  %v719 = vsel %vm534, %v512, 0
  %v722 = vsel %vm534, %v513, 0
  %v725 = vsel %vm534, %v514, 0
  %v728 = vsel %vm534, %v515, 0
  %v731 = vsel %vm534, %v516, 0
  %v734 = vsel %vm534, %v517, 0
  %v737 = vsel %vm534, %v518, 0
  %v740 = vsel %vm534, %v519, 0
  %v743 = vsel %vm534, %v520, 0
  %v746 = vsel %vm534, %v521, 0
  %v749 = vsel %vm534, %v522, 0
  %vm751 = vcmask 1043456
  %vm752 = vcmask 1044480
  %v753 = vsel %vm751, 4294967295, 65535
  %v754 = vsel %vm752, %v753, 0
  %v756 = vand.u32 %v532, %v754
  %758 = vmatpush.bf16.msra.mxu0 0
  %759 = vmatpush.bf16.msra.mxu0 0
  %760 = vmatpush.bf16.msra.mxu0 0
  %761 = vmatpush.bf16.msra.mxu0 0
  %762 = vmatpush.bf16.msra.mxu0 0
  %763 = vmatpush.bf16.msra.mxu0 0
  %764 = vmatpush.bf16.msra.mxu0 %v756
  %765 = vmatpush.bf16.msra.mxu0 %v531
  %766 = vmatmul.bf16.gmra.mxu0 %v536
  %v767 = vpop.f32.mrf.mxu0
  %v768 = vadd.f32 0.0, %v767
  %v769 = vpop.f32.mrf.mxu0
  %v770 = vadd.f32 0.0, %v769
  %771 = vmatmul.bf16.gmra.mxu0 %v539
  %v772 = vpop.f32.mrf.mxu0
  %v773 = vadd.f32 0.0, %v772
  %v774 = vpop.f32.mrf.mxu0
  %v775 = vadd.f32 0.0, %v774
  %776 = vmatmul.bf16.gmra.mxu0 %v542
  %v777 = vpop.f32.mrf.mxu0
  %v778 = vadd.f32 0.0, %v777
  %v779 = vpop.f32.mrf.mxu0
  %v780 = vadd.f32 0.0, %v779
  %781 = vmatmul.bf16.gmra.mxu0 %v545
  %v782 = vpop.f32.mrf.mxu0
  %v783 = vadd.f32 0.0, %v782
  %v784 = vpop.f32.mrf.mxu0
  %v785 = vadd.f32 0.0, %v784
  %786 = vmatmul.bf16.gmra.mxu0 %v548
  %v787 = vpop.f32.mrf.mxu0
  %v788 = vadd.f32 0.0, %v787
  %v789 = vpop.f32.mrf.mxu0
  %v790 = vadd.f32 0.0, %v789
  %791 = vmatmul.bf16.gmra.mxu0 %v551
  %v792 = vpop.f32.mrf.mxu0
  %v793 = vadd.f32 0.0, %v792
  %v794 = vpop.f32.mrf.mxu0
  %v795 = vadd.f32 0.0, %v794
  %796 = vmatmul.bf16.gmra.mxu0 %v554
  %v797 = vpop.f32.mrf.mxu0
  %v798 = vadd.f32 0.0, %v797
  %v799 = vpop.f32.mrf.mxu0
  %v800 = vadd.f32 0.0, %v799
  %801 = vmatmul.bf16.gmra.mxu0 %v557
  %v802 = vpop.f32.mrf.mxu0
  %v803 = vadd.f32 0.0, %v802
  %v804 = vpop.f32.mrf.mxu0
  %v805 = vadd.f32 0.0, %v804
  %806 = vmatmul.bf16.gmra.mxu0 %v560
  %v807 = vpop.f32.mrf.mxu0
  %v808 = vadd.f32 0.0, %v807
  %v809 = vpop.f32.mrf.mxu0
  %v810 = vadd.f32 0.0, %v809
  %811 = vmatmul.bf16.gmra.mxu0 %v563
  %v812 = vpop.f32.mrf.mxu0
  %v813 = vadd.f32 0.0, %v812
  %v814 = vpop.f32.mrf.mxu0
  %v815 = vadd.f32 0.0, %v814
  %816 = vmatmul.bf16.gmra.mxu0 %v566
  %v817 = vpop.f32.mrf.mxu0
  %v818 = vadd.f32 0.0, %v817
  %v819 = vpop.f32.mrf.mxu0
  %v820 = vadd.f32 0.0, %v819
  %821 = vmatmul.bf16.gmra.mxu0 %v569
  %v822 = vpop.f32.mrf.mxu0
  %v823 = vadd.f32 0.0, %v822
  %v824 = vpop.f32.mrf.mxu0
  %v825 = vadd.f32 0.0, %v824
  %826 = vmatmul.bf16.gmra.mxu0 %v572
  %v827 = vpop.f32.mrf.mxu0
  %v828 = vadd.f32 0.0, %v827
  %v829 = vpop.f32.mrf.mxu0
  %v830 = vadd.f32 0.0, %v829
  %831 = vmatmul.bf16.gmra.mxu0 %v575
  %v832 = vpop.f32.mrf.mxu0
  %v833 = vadd.f32 0.0, %v832
  %v834 = vpop.f32.mrf.mxu0
  %v835 = vadd.f32 0.0, %v834
  %836 = vmatmul.bf16.gmra.mxu0 %v578
  %v837 = vpop.f32.mrf.mxu0
  %v838 = vadd.f32 0.0, %v837
  %v839 = vpop.f32.mrf.mxu0
  %v840 = vadd.f32 0.0, %v839
  %841 = vmatmul.bf16.gmra.mxu0 %v581
  %v842 = vpop.f32.mrf.mxu0
  %v843 = vadd.f32 0.0, %v842
  %v844 = vpop.f32.mrf.mxu0
  %v845 = vadd.f32 0.0, %v844
  %846 = vmatmul.bf16.gmra.mxu0 %v584
  %v847 = vpop.f32.mrf.mxu0
  %v848 = vadd.f32 0.0, %v847
  %v849 = vpop.f32.mrf.mxu0
  %v850 = vadd.f32 0.0, %v849
  %851 = vmatmul.bf16.gmra.mxu0 %v587
  %v852 = vpop.f32.mrf.mxu0
  %v853 = vadd.f32 0.0, %v852
  %v854 = vpop.f32.mrf.mxu0
  %v855 = vadd.f32 0.0, %v854
  %856 = vmatmul.bf16.gmra.mxu0 %v590
  %v857 = vpop.f32.mrf.mxu0
  %v858 = vadd.f32 0.0, %v857
  %v859 = vpop.f32.mrf.mxu0
  %v860 = vadd.f32 0.0, %v859
  %861 = vmatmul.bf16.gmra.mxu0 %v593
  %v862 = vpop.f32.mrf.mxu0
  %v863 = vadd.f32 0.0, %v862
  %v864 = vpop.f32.mrf.mxu0
  %v865 = vadd.f32 0.0, %v864
  %866 = vmatmul.bf16.gmra.mxu0 %v596
  %v867 = vpop.f32.mrf.mxu0
  %v868 = vadd.f32 0.0, %v867
  %v869 = vpop.f32.mrf.mxu0
  %v870 = vadd.f32 0.0, %v869
  %871 = vmatmul.bf16.gmra.mxu0 %v599
  %v872 = vpop.f32.mrf.mxu0
  %v873 = vadd.f32 0.0, %v872
  %v874 = vpop.f32.mrf.mxu0
  %v875 = vadd.f32 0.0, %v874
  %876 = vmatmul.bf16.gmra.mxu0 %v602
  %v877 = vpop.f32.mrf.mxu0
  %v878 = vadd.f32 0.0, %v877
  %v879 = vpop.f32.mrf.mxu0
  %v880 = vadd.f32 0.0, %v879
  %881 = vmatmul.bf16.gmra.mxu0 %v605
  %v882 = vpop.f32.mrf.mxu0
  %v883 = vadd.f32 0.0, %v882
  %v884 = vpop.f32.mrf.mxu0
  %v885 = vadd.f32 0.0, %v884
  %886 = vmatmul.bf16.gmra.mxu0 %v608
  %v887 = vpop.f32.mrf.mxu0
  %v888 = vadd.f32 0.0, %v887
  %v889 = vpop.f32.mrf.mxu0
  %v890 = vadd.f32 0.0, %v889
  %891 = vmatmul.bf16.gmra.mxu0 %v611
  %v892 = vpop.f32.mrf.mxu0
  %v893 = vadd.f32 0.0, %v892
  %v894 = vpop.f32.mrf.mxu0
  %v895 = vadd.f32 0.0, %v894
  %896 = vmatmul.bf16.gmra.mxu0 %v614
  %v897 = vpop.f32.mrf.mxu0
  %v898 = vadd.f32 0.0, %v897
  %v899 = vpop.f32.mrf.mxu0
  %v900 = vadd.f32 0.0, %v899
  %901 = vmatmul.bf16.gmra.mxu0 %v617
  %v902 = vpop.f32.mrf.mxu0
  %v903 = vadd.f32 0.0, %v902
  %v904 = vpop.f32.mrf.mxu0
  %v905 = vadd.f32 0.0, %v904
  %906 = vmatmul.bf16.gmra.mxu0 %v620
  %v907 = vpop.f32.mrf.mxu0
  %v908 = vadd.f32 0.0, %v907
  %v909 = vpop.f32.mrf.mxu0
  %v910 = vadd.f32 0.0, %v909
  %911 = vmatmul.bf16.gmra.mxu0 %v623
  %v912 = vpop.f32.mrf.mxu0
  %v913 = vadd.f32 0.0, %v912
  %v914 = vpop.f32.mrf.mxu0
  %v915 = vadd.f32 0.0, %v914
  %916 = vmatmul.bf16.gmra.mxu0 %v626
  %v917 = vpop.f32.mrf.mxu0
  %v918 = vadd.f32 0.0, %v917
  %v919 = vpop.f32.mrf.mxu0
  %v920 = vadd.f32 0.0, %v919
  %921 = vmatmul.bf16.gmra.mxu0 %v629
  %v922 = vpop.f32.mrf.mxu0
  %v923 = vadd.f32 0.0, %v922
  %v924 = vpop.f32.mrf.mxu0
  %v925 = vadd.f32 0.0, %v924
  %926 = vmatmul.bf16.gmra.mxu0 %v632
  %v927 = vpop.f32.mrf.mxu0
  %v928 = vadd.f32 0.0, %v927
  %v929 = vpop.f32.mrf.mxu0
  %v930 = vadd.f32 0.0, %v929
  %931 = vmatmul.bf16.gmra.mxu0 %v635
  %v932 = vpop.f32.mrf.mxu0
  %v933 = vadd.f32 0.0, %v932
  %v934 = vpop.f32.mrf.mxu0
  %v935 = vadd.f32 0.0, %v934
  %936 = vmatmul.bf16.gmra.mxu0 %v638
  %v937 = vpop.f32.mrf.mxu0
  %v938 = vadd.f32 0.0, %v937
  %v939 = vpop.f32.mrf.mxu0
  %v940 = vadd.f32 0.0, %v939
  %941 = vmatmul.bf16.gmra.mxu0 %v641
  %v942 = vpop.f32.mrf.mxu0
  %v943 = vadd.f32 0.0, %v942
  %v944 = vpop.f32.mrf.mxu0
  %v945 = vadd.f32 0.0, %v944
  %946 = vmatmul.bf16.gmra.mxu0 %v644
  %v947 = vpop.f32.mrf.mxu0
  %v948 = vadd.f32 0.0, %v947
  %v949 = vpop.f32.mrf.mxu0
  %v950 = vadd.f32 0.0, %v949
  %951 = vmatmul.bf16.gmra.mxu0 %v647
  %v952 = vpop.f32.mrf.mxu0
  %v953 = vadd.f32 0.0, %v952
  %v954 = vpop.f32.mrf.mxu0
  %v955 = vadd.f32 0.0, %v954
  %956 = vmatmul.bf16.gmra.mxu0 %v650
  %v957 = vpop.f32.mrf.mxu0
  %v958 = vadd.f32 0.0, %v957
  %v959 = vpop.f32.mrf.mxu0
  %v960 = vadd.f32 0.0, %v959
  %961 = vmatmul.bf16.gmra.mxu0 %v653
  %v962 = vpop.f32.mrf.mxu0
  %v963 = vadd.f32 0.0, %v962
  %v964 = vpop.f32.mrf.mxu0
  %v965 = vadd.f32 0.0, %v964
  %966 = vmatmul.bf16.gmra.mxu0 %v656
  %v967 = vpop.f32.mrf.mxu0
  %v968 = vadd.f32 0.0, %v967
  %v969 = vpop.f32.mrf.mxu0
  %v970 = vadd.f32 0.0, %v969
  %971 = vmatmul.bf16.gmra.mxu0 %v659
  %v972 = vpop.f32.mrf.mxu0
  %v973 = vadd.f32 0.0, %v972
  %v974 = vpop.f32.mrf.mxu0
  %v975 = vadd.f32 0.0, %v974
  %976 = vmatmul.bf16.gmra.mxu0 %v662
  %v977 = vpop.f32.mrf.mxu0
  %v978 = vadd.f32 0.0, %v977
  %v979 = vpop.f32.mrf.mxu0
  %v980 = vadd.f32 0.0, %v979
  %981 = vmatmul.bf16.gmra.mxu0 %v665
  %v982 = vpop.f32.mrf.mxu0
  %v983 = vadd.f32 0.0, %v982
  %v984 = vpop.f32.mrf.mxu0
  %v985 = vadd.f32 0.0, %v984
  %986 = vmatmul.bf16.gmra.mxu0 %v668
  %v987 = vpop.f32.mrf.mxu0
  %v988 = vadd.f32 0.0, %v987
  %v989 = vpop.f32.mrf.mxu0
  %v990 = vadd.f32 0.0, %v989
  %991 = vmatmul.bf16.gmra.mxu0 %v671
  %v992 = vpop.f32.mrf.mxu0
  %v993 = vadd.f32 0.0, %v992
  %v994 = vpop.f32.mrf.mxu0
  %v995 = vadd.f32 0.0, %v994
  %996 = vmatmul.bf16.gmra.mxu0 %v674
  %v997 = vpop.f32.mrf.mxu0
  %v998 = vadd.f32 0.0, %v997
  %v999 = vpop.f32.mrf.mxu0
  %v1000 = vadd.f32 0.0, %v999
  %1001 = vmatmul.bf16.gmra.mxu0 %v677
  %v1002 = vpop.f32.mrf.mxu0
  %v1003 = vadd.f32 0.0, %v1002
  %v1004 = vpop.f32.mrf.mxu0
  %v1005 = vadd.f32 0.0, %v1004
  %1006 = vmatmul.bf16.gmra.mxu0 %v680
  %v1007 = vpop.f32.mrf.mxu0
  %v1008 = vadd.f32 0.0, %v1007
  %v1009 = vpop.f32.mrf.mxu0
  %v1010 = vadd.f32 0.0, %v1009
  %1011 = vmatmul.bf16.gmra.mxu0 %v683
  %v1012 = vpop.f32.mrf.mxu0
  %v1013 = vadd.f32 0.0, %v1012
  %v1014 = vpop.f32.mrf.mxu0
  %v1015 = vadd.f32 0.0, %v1014
  %1016 = vmatmul.bf16.gmra.mxu0 %v686
  %v1017 = vpop.f32.mrf.mxu0
  %v1018 = vadd.f32 0.0, %v1017
  %v1019 = vpop.f32.mrf.mxu0
  %v1020 = vadd.f32 0.0, %v1019
  %1021 = vmatmul.bf16.gmra.mxu0 %v689
  %v1022 = vpop.f32.mrf.mxu0
  %v1023 = vadd.f32 0.0, %v1022
  %v1024 = vpop.f32.mrf.mxu0
  %v1025 = vadd.f32 0.0, %v1024
  %1026 = vmatmul.bf16.gmra.mxu0 %v692
  %v1027 = vpop.f32.mrf.mxu0
  %v1028 = vadd.f32 0.0, %v1027
  %v1029 = vpop.f32.mrf.mxu0
  %v1030 = vadd.f32 0.0, %v1029
  %1031 = vmatmul.bf16.gmra.mxu0 %v695
  %v1032 = vpop.f32.mrf.mxu0
  %v1033 = vadd.f32 0.0, %v1032
  %v1034 = vpop.f32.mrf.mxu0
  %v1035 = vadd.f32 0.0, %v1034
  %1036 = vmatmul.bf16.gmra.mxu0 %v698
  %v1037 = vpop.f32.mrf.mxu0
  %v1038 = vadd.f32 0.0, %v1037
  %v1039 = vpop.f32.mrf.mxu0
  %v1040 = vadd.f32 0.0, %v1039
  %1041 = vmatmul.bf16.gmra.mxu0 %v701
  %v1042 = vpop.f32.mrf.mxu0
  %v1043 = vadd.f32 0.0, %v1042
  %v1044 = vpop.f32.mrf.mxu0
  %v1045 = vadd.f32 0.0, %v1044
  %1046 = vmatmul.bf16.gmra.mxu0 %v704
  %v1047 = vpop.f32.mrf.mxu0
  %v1048 = vadd.f32 0.0, %v1047
  %v1049 = vpop.f32.mrf.mxu0
  %v1050 = vadd.f32 0.0, %v1049
  %1051 = vmatmul.bf16.gmra.mxu0 %v707
  %v1052 = vpop.f32.mrf.mxu0
  %v1053 = vadd.f32 0.0, %v1052
  %v1054 = vpop.f32.mrf.mxu0
  %v1055 = vadd.f32 0.0, %v1054
  %1056 = vmatmul.bf16.gmra.mxu0 %v710
  %v1057 = vpop.f32.mrf.mxu0
  %v1058 = vadd.f32 0.0, %v1057
  %v1059 = vpop.f32.mrf.mxu0
  %v1060 = vadd.f32 0.0, %v1059
  %1061 = vmatmul.bf16.gmra.mxu0 %v713
  %v1062 = vpop.f32.mrf.mxu0
  %v1063 = vadd.f32 0.0, %v1062
  %v1064 = vpop.f32.mrf.mxu0
  %v1065 = vadd.f32 0.0, %v1064
  %1066 = vmatmul.bf16.gmra.mxu0 %v716
  %v1067 = vpop.f32.mrf.mxu0
  %v1068 = vadd.f32 0.0, %v1067
  %v1069 = vpop.f32.mrf.mxu0
  %v1070 = vadd.f32 0.0, %v1069
  %1071 = vmatmul.bf16.gmra.mxu0 %v719
  %v1072 = vpop.f32.mrf.mxu0
  %v1073 = vadd.f32 0.0, %v1072
  %v1074 = vpop.f32.mrf.mxu0
  %v1075 = vadd.f32 0.0, %v1074
  %1076 = vmatmul.bf16.gmra.mxu0 %v722
  %v1077 = vpop.f32.mrf.mxu0
  %v1078 = vadd.f32 0.0, %v1077
  %v1079 = vpop.f32.mrf.mxu0
  %v1080 = vadd.f32 0.0, %v1079
  %1081 = vmatmul.bf16.gmra.mxu0 %v725
  %v1082 = vpop.f32.mrf.mxu0
  %v1083 = vadd.f32 0.0, %v1082
  %v1084 = vpop.f32.mrf.mxu0
  %v1085 = vadd.f32 0.0, %v1084
  %1086 = vmatmul.bf16.gmra.mxu0 %v728
  %v1087 = vpop.f32.mrf.mxu0
  %v1088 = vadd.f32 0.0, %v1087
  %v1089 = vpop.f32.mrf.mxu0
  %v1090 = vadd.f32 0.0, %v1089
  %1091 = vmatmul.bf16.gmra.mxu0 %v731
  %v1092 = vpop.f32.mrf.mxu0
  %v1093 = vadd.f32 0.0, %v1092
  %v1094 = vpop.f32.mrf.mxu0
  %v1095 = vadd.f32 0.0, %v1094
  %1096 = vmatmul.bf16.gmra.mxu0 %v734
  %v1097 = vpop.f32.mrf.mxu0
  %v1098 = vadd.f32 0.0, %v1097
  %v1099 = vpop.f32.mrf.mxu0
  %v1100 = vadd.f32 0.0, %v1099
  %1101 = vmatmul.bf16.gmra.mxu0 %v737
  %v1102 = vpop.f32.mrf.mxu0
  %v1103 = vadd.f32 0.0, %v1102
  %v1104 = vpop.f32.mrf.mxu0
  %v1105 = vadd.f32 0.0, %v1104
  %1106 = vmatmul.bf16.gmra.mxu0 %v740
  %v1107 = vpop.f32.mrf.mxu0
  %v1108 = vadd.f32 0.0, %v1107
  %v1109 = vpop.f32.mrf.mxu0
  %v1110 = vadd.f32 0.0, %v1109
  %1111 = vmatmul.bf16.gmra.mxu0 %v743
  %v1112 = vpop.f32.mrf.mxu0
  %v1113 = vadd.f32 0.0, %v1112
  %v1114 = vpop.f32.mrf.mxu0
  %v1115 = vadd.f32 0.0, %v1114
  %1116 = vmatmul.bf16.gmra.mxu0 %v746
  %v1117 = vpop.f32.mrf.mxu0
  %v1118 = vadd.f32 0.0, %v1117
  %v1119 = vpop.f32.mrf.mxu0
  %v1120 = vadd.f32 0.0, %v1119
  %1121 = vmatmul.bf16.gmra.mxu0 %v749
  %v1122 = vpop.f32.mrf.mxu0
  %v1123 = vadd.f32 0.0, %v1122
  %v1124 = vpop.f32.mrf.mxu0
  %v1125 = vadd.f32 0.0, %v1124
  %1126 = vdwg.mxu0
  %v1127 = vmax.f32 %v768, %v858
  %v1128 = vmax.f32 %v770, %v860
  %v1129 = vmax.f32 %v773, %v863
  %v1130 = vmax.f32 %v775, %v865
  %v1131 = vmax.f32 %v778, %v868
  %v1132 = vmax.f32 %v780, %v870
  %v1133 = vmax.f32 %v783, %v873
  %v1134 = vmax.f32 %v785, %v875
  %v1135 = vmax.f32 %v788, %v878
  %v1136 = vmax.f32 %v790, %v880
  %v1137 = vmax.f32 %v793, %v883
  %v1138 = vmax.f32 %v795, %v885
  %v1139 = vmax.f32 %v798, %v888
  %v1140 = vmax.f32 %v800, %v890
  %v1141 = vmax.f32 %v803, %v893
  %v1142 = vmax.f32 %v805, %v895
  %v1143 = vmax.f32 %v808, %v898
  %v1144 = vmax.f32 %v810, %v900
  %v1145 = vmax.f32 %v813, %v903
  %v1146 = vmax.f32 %v815, %v905
  %v1147 = vmax.f32 %v818, %v908
  %v1148 = vmax.f32 %v820, %v910
  %v1149 = vmax.f32 %v823, %v913
  %v1150 = vmax.f32 %v825, %v915
  %v1151 = vmax.f32 %v828, %v918
  %v1152 = vmax.f32 %v830, %v920
  %v1153 = vmax.f32 %v833, %v923
  %v1154 = vmax.f32 %v835, %v925
  %v1155 = vmax.f32 %v838, %v928
  %v1156 = vmax.f32 %v840, %v930
  %v1157 = vmax.f32 %v843, %v933
  %v1158 = vmax.f32 %v845, %v935
  %v1159 = vmax.f32 %v848, %v938
  %v1160 = vmax.f32 %v850, %v940
  %v1161 = vmax.f32 %v853, %v943
  %v1162 = vmax.f32 %v855, %v945
  %v1163 = vmax.f32 %v948, %v1038
  %v1164 = vmax.f32 %v950, %v1040
  %v1165 = vmax.f32 %v953, %v1043
  %v1166 = vmax.f32 %v955, %v1045
  %v1167 = vmax.f32 %v958, %v1048
  %v1168 = vmax.f32 %v960, %v1050
  %v1169 = vmax.f32 %v963, %v1053
  %v1170 = vmax.f32 %v965, %v1055
  %v1171 = vmax.f32 %v968, %v1058
  %v1172 = vmax.f32 %v970, %v1060
  %v1173 = vmax.f32 %v973, %v1063
  %v1174 = vmax.f32 %v975, %v1065
  %v1175 = vmax.f32 %v978, %v1068
  %v1176 = vmax.f32 %v980, %v1070
  %v1177 = vmax.f32 %v983, %v1073
  %v1178 = vmax.f32 %v985, %v1075
  %v1179 = vmax.f32 %v988, %v1078
  %v1180 = vmax.f32 %v990, %v1080
  %v1181 = vmax.f32 %v993, %v1083
  %v1182 = vmax.f32 %v995, %v1085
  %v1183 = vmax.f32 %v998, %v1088
  %v1184 = vmax.f32 %v1000, %v1090
  %v1185 = vmax.f32 %v1003, %v1093
  %v1186 = vmax.f32 %v1005, %v1095
  %v1187 = vmax.f32 %v1008, %v1098
  %v1188 = vmax.f32 %v1010, %v1100
  %v1189 = vmax.f32 %v1013, %v1103
  %v1190 = vmax.f32 %v1015, %v1105
  %v1191 = vmax.f32 %v1018, %v1108
  %v1192 = vmax.f32 %v1020, %v1110
  %v1193 = vmax.f32 %v1023, %v1113
  %v1194 = vmax.f32 %v1025, %v1115
  %v1195 = vmax.f32 %v1028, %v1118
  %v1196 = vmax.f32 %v1030, %v1120
  %v1197 = vmax.f32 %v1033, %v1123
  %v1198 = vmax.f32 %v1035, %v1125
  %v1199 = vmax.f32 %v1127, %v1163
  %v1200 = vmax.f32 %v1128, %v1164
  %v1201 = vmax.f32 %v1129, %v1165
  %v1202 = vmax.f32 %v1130, %v1166
  %v1203 = vmax.f32 %v1131, %v1167
  %v1204 = vmax.f32 %v1132, %v1168
  %v1205 = vmax.f32 %v1133, %v1169
  %v1206 = vmax.f32 %v1134, %v1170
  %v1207 = vmax.f32 %v1135, %v1171
  %v1208 = vmax.f32 %v1136, %v1172
  %v1209 = vmax.f32 %v1137, %v1173
  %v1210 = vmax.f32 %v1138, %v1174
  %v1211 = vmax.f32 %v1139, %v1175
  %v1212 = vmax.f32 %v1140, %v1176
  %v1213 = vmax.f32 %v1141, %v1177
  %v1214 = vmax.f32 %v1142, %v1178
  %v1215 = vmax.f32 %v1143, %v1179
  %v1216 = vmax.f32 %v1144, %v1180
  %v1217 = vmax.f32 %v1145, %v1181
  %v1218 = vmax.f32 %v1146, %v1182
  %v1219 = vmax.f32 %v1147, %v1183
  %v1220 = vmax.f32 %v1148, %v1184
  %v1221 = vmax.f32 %v1149, %v1185
  %v1222 = vmax.f32 %v1150, %v1186
  %v1223 = vmax.f32 %v1151, %v1187
  %v1224 = vmax.f32 %v1152, %v1188
  %v1225 = vmax.f32 %v1153, %v1189
  %v1226 = vmax.f32 %v1154, %v1190
  %v1227 = vmax.f32 %v1155, %v1191
  %v1228 = vmax.f32 %v1156, %v1192
  %v1229 = vmax.f32 %v1157, %v1193
  %v1230 = vmax.f32 %v1158, %v1194
  %v1231 = vmax.f32 %v1159, %v1195
  %v1232 = vmax.f32 %v1160, %v1196
  %v1233 = vmax.f32 %v1161, %v1197
  %v1234 = vmax.f32 %v1162, %v1198
  %v1235 = vld [vmem:[%s2] sm:$0x1]
  %v1237 = vperm.slane %v1235, 0
  %v1239 = vadd.f32 %v1199, %v1237
  %v1240 = vadd.f32 %v1200, %v1237
  %v1241 = vadd.f32 %v1201, %v1237
  %v1242 = vadd.f32 %v1202, %v1237
  %v1243 = vadd.f32 %v1203, %v1237
  %v1244 = vadd.f32 %v1204, %v1237
  %v1245 = vadd.f32 %v1205, %v1237
  %v1246 = vadd.f32 %v1206, %v1237
  %v1247 = vadd.f32 %v1207, %v1237
  %v1248 = vadd.f32 %v1208, %v1237
  %v1249 = vadd.f32 %v1209, %v1237
  %v1250 = vadd.f32 %v1210, %v1237
  %v1251 = vadd.f32 %v1211, %v1237
  %v1252 = vadd.f32 %v1212, %v1237
  %v1253 = vadd.f32 %v1213, %v1237
  %v1254 = vadd.f32 %v1214, %v1237
  %v1255 = vadd.f32 %v1215, %v1237
  %v1256 = vadd.f32 %v1216, %v1237
  %v1257 = vadd.f32 %v1217, %v1237
  %v1258 = vadd.f32 %v1218, %v1237
  %v1259 = vadd.f32 %v1219, %v1237
  %v1260 = vadd.f32 %v1220, %v1237
  %v1261 = vadd.f32 %v1221, %v1237
  %v1262 = vadd.f32 %v1222, %v1237
  %v1263 = vadd.f32 %v1223, %v1237
  %v1264 = vadd.f32 %v1224, %v1237
  %v1265 = vadd.f32 %v1225, %v1237
  %v1266 = vadd.f32 %v1226, %v1237
  %v1267 = vadd.f32 %v1227, %v1237
  %v1268 = vadd.f32 %v1228, %v1237
  %v1269 = vadd.f32 %v1229, %v1237
  %v1270 = vadd.f32 %v1230, %v1237
  %v1271 = vadd.f32 %v1231, %v1237
  %v1272 = vadd.f32 %v1232, %v1237
  %v1273 = vadd.f32 %v1233, %v1237
  %v1274 = vadd.f32 %v1234, %v1237
  %v1275 = vmax.f32 %v1239, 0.0
  %v1276 = vmax.f32 %v1240, 0.0
  %v1277 = vmax.f32 %v1241, 0.0
  %v1278 = vmax.f32 %v1242, 0.0
  %v1279 = vmax.f32 %v1243, 0.0
  %v1280 = vmax.f32 %v1244, 0.0
  %v1281 = vmax.f32 %v1245, 0.0
  %v1282 = vmax.f32 %v1246, 0.0
  %v1283 = vmax.f32 %v1247, 0.0
  %v1284 = vmax.f32 %v1248, 0.0
  %v1285 = vmax.f32 %v1249, 0.0
  %v1286 = vmax.f32 %v1250, 0.0
  %v1287 = vmax.f32 %v1251, 0.0
  %v1288 = vmax.f32 %v1252, 0.0
  %v1289 = vmax.f32 %v1253, 0.0
  %v1290 = vmax.f32 %v1254, 0.0
  %v1291 = vmax.f32 %v1255, 0.0
  %v1292 = vmax.f32 %v1256, 0.0
  %v1293 = vmax.f32 %v1257, 0.0
  %v1294 = vmax.f32 %v1258, 0.0
  %v1295 = vmax.f32 %v1259, 0.0
  %v1296 = vmax.f32 %v1260, 0.0
  %v1297 = vmax.f32 %v1261, 0.0
  %v1298 = vmax.f32 %v1262, 0.0
  %v1299 = vmax.f32 %v1263, 0.0
  %v1300 = vmax.f32 %v1264, 0.0
  %v1301 = vmax.f32 %v1265, 0.0
  %v1302 = vmax.f32 %v1266, 0.0
  %v1303 = vmax.f32 %v1267, 0.0
  %v1304 = vmax.f32 %v1268, 0.0
  %v1305 = vmax.f32 %v1269, 0.0
  %v1306 = vmax.f32 %v1270, 0.0
  %v1307 = vmax.f32 %v1271, 0.0
  %v1308 = vmax.f32 %v1272, 0.0
  %v1309 = vmax.f32 %v1273, 0.0
  %v1310 = vmax.f32 %v1274, 0.0
  %v1311 = vpack.c.bf16 %v1275, %v1275
  %v1312 = vpack.c.bf16 %v1276, %v1276
  %v1313 = vpack.c.bf16 %v1277, %v1277
  %v1314 = vpack.c.bf16 %v1278, %v1278
  %v1315 = vpack.c.bf16 %v1279, %v1279
  %v1316 = vpack.c.bf16 %v1280, %v1280
  %v1317 = vpack.c.bf16 %v1281, %v1281
  %v1318 = vpack.c.bf16 %v1282, %v1282
  %v1319 = vpack.c.bf16 %v1283, %v1283
  %v1320 = vpack.c.bf16 %v1284, %v1284
  %v1321 = vpack.c.bf16 %v1285, %v1285
  %v1322 = vpack.c.bf16 %v1286, %v1286
  %v1323 = vpack.c.bf16 %v1287, %v1287
  %v1324 = vpack.c.bf16 %v1288, %v1288
  %v1325 = vpack.c.bf16 %v1289, %v1289
  %v1326 = vpack.c.bf16 %v1290, %v1290
  %v1327 = vpack.c.bf16 %v1291, %v1291
  %v1328 = vpack.c.bf16 %v1292, %v1292
  %v1329 = vpack.c.bf16 %v1293, %v1293
  %v1330 = vpack.c.bf16 %v1294, %v1294
  %v1331 = vpack.c.bf16 %v1295, %v1295
  %v1332 = vpack.c.bf16 %v1296, %v1296
  %v1333 = vpack.c.bf16 %v1297, %v1297
  %v1334 = vpack.c.bf16 %v1298, %v1298
  %v1335 = vpack.c.bf16 %v1299, %v1299
  %v1336 = vpack.c.bf16 %v1300, %v1300
  %v1337 = vpack.c.bf16 %v1301, %v1301
  %v1338 = vpack.c.bf16 %v1302, %v1302
  %v1339 = vpack.c.bf16 %v1303, %v1303
  %v1340 = vpack.c.bf16 %v1304, %v1304
  %v1341 = vpack.c.bf16 %v1305, %v1305
  %v1342 = vpack.c.bf16 %v1306, %v1306
  %v1343 = vpack.c.bf16 %v1307, %v1307
  %v1344 = vpack.c.bf16 %v1308, %v1308
  %v1345 = vpack.c.bf16 %v1309, %v1309
  %v1346 = vpack.c.bf16 %v1310, %v1310
  %1347 = vst [vmem:[%s3] sm:$0xf] %v1311
  %1348 = vst [vmem:[%s3 + $0x4] sm:$0xf] %v1312
  %1349 = vst [vmem:[%s3 + $0x8] sm:$0xf] %v1313
  %1350 = vst [vmem:[%s3 + $0xc] sm:$0xf] %v1314
  %1351 = vst [vmem:[%s3 + $0x10] sm:$0xf] %v1315
  %1352 = vst [vmem:[%s3 + $0x14] sm:$0xf] %v1316
  %1353 = vst [vmem:[%s3 + $0x18] sm:$0xf] %v1317
  %1354 = vst [vmem:[%s3 + $0x1c] sm:$0xf] %v1318
  %1355 = vst [vmem:[%s3 + $0x20] sm:$0xf] %v1319
  %1356 = vst [vmem:[%s3 + $0x24] sm:$0xf] %v1320
  %1357 = vst [vmem:[%s3 + $0x28] sm:$0xf] %v1321
  %1358 = vst [vmem:[%s3 + $0x2c] sm:$0xf] %v1322
  %1359 = vst [vmem:[%s3 + $0x30] sm:$0xf] %v1323
  %1360 = vst [vmem:[%s3 + $0x34] sm:$0xf] %v1324
  %1361 = vst [vmem:[%s3 + $0x38] sm:$0xf] %v1325
  %1362 = vst [vmem:[%s3 + $0x3c] sm:$0xf] %v1326
  %1363 = vst [vmem:[%s3 + $0x40] sm:$0xf] %v1327
  %1364 = vst [vmem:[%s3 + $0x44] sm:$0xf] %v1328
  %1365 = vst [vmem:[%s3 + $0x48] sm:$0xf] %v1329
  %1366 = vst [vmem:[%s3 + $0x4c] sm:$0xf] %v1330
  %1367 = vst [vmem:[%s3 + $0x50] sm:$0xf] %v1331
  %1368 = vst [vmem:[%s3 + $0x54] sm:$0xf] %v1332
  %1369 = vst [vmem:[%s3 + $0x58] sm:$0xf] %v1333
  %1370 = vst [vmem:[%s3 + $0x5c] sm:$0xf] %v1334
  %1371 = vst [vmem:[%s3 + $0x60] sm:$0xf] %v1335
  %1372 = vst [vmem:[%s3 + $0x64] sm:$0xf] %v1336
  %1373 = vst [vmem:[%s3 + $0x68] sm:$0xf] %v1337
  %1374 = vst [vmem:[%s3 + $0x6c] sm:$0xf] %v1338
  %1375 = vst [vmem:[%s3 + $0x70] sm:$0xf] %v1339
  %1376 = vst [vmem:[%s3 + $0x74] sm:$0xf] %v1340
  %1377 = vst [vmem:[%s3 + $0x78] sm:$0xf] %v1341
  %1378 = vst [vmem:[%s3 + $0x7c] sm:$0xf] %v1342
  %1379 = vst [vmem:[%s3 + $0x80] sm:$0xf] %v1343
  %1380 = vst [vmem:[%s3 + $0x84] sm:$0xf] %v1344
  %1381 = vst [vmem:[%s3 + $0x88] sm:$0xf] %v1345
  %1382 = vst [vmem:[%s3 + $0x8c] sm:$0xf] %v1346
  // Predicated region
  $region14: #{mnist_comparator_forward.2} parent=0 // pred_check
    _
  $region15: #{mnist_comparator_forward.2} parent=0 // pred_check_branch
    %1384 = sbr.rel (0) target = $region17
  $region16: #{mnist_comparator_forward.2} parent=0 // pred_region
    _
  $region17: #{mnist_comparator_forward.2} parent=0 // pred_fallthru
    _
  // Predicated region
  $region18: #{mnist_comparator_forward.2} parent=0 // pred_check
    _
  $region19: #{mnist_comparator_forward.2} parent=0 // pred_check_branch
    %1386 = sbr.rel (0) target = $region21
  $region20: #{mnist_comparator_forward.2} parent=0 // pred_region
    _
  $region21: #{mnist_comparator_forward.2} parent=0 // pred_fallthru
    _

// kernel: mnist_comparator_forward.3
$region0: #{mnist_comparator_forward.3}
  #allocation0 [shape = 'u32[]', space=smem, size = 0x4, offset = 0x4, fixed_abs, tag = 'smem constant byte address 0x4 - core index']
  #allocation1 [shape = 'u32[72,128]{1,0:T(1,128)}', space=vmem, size = 0x9000, scoped, tag = 'internal scratch']
  %s0 = inlined_call_operand.vmem [shape: bf16[4,16,16,250], index: 0, kind: input, shape index: {}]
  %s1 = inlined_call_operand.vmem [shape: bf16[250,128], index: 1, kind: input, shape index: {}]
  %s2 = inlined_call_operand.vmem [shape: f32[1,128], index: 2, kind: input, shape index: {}]
  %s3 = inlined_call_operand.vmem [shape: bf16[16,128,64], index: 3, kind: input, shape index: {}]
  %s4 = inlined_call_operand.vmem [shape: f32[1,64], index: 4, kind: input, shape index: {}]
  %s5 = inlined_call_operand.vmem [shape: bf16[64,128], index: 5, kind: input, shape index: {}]
  %s6 = inlined_call_operand.vmem [shape: f32[1,128], index: 6, kind: input, shape index: {}]
  %s7 = inlined_call_operand.vmem [shape: f32[16,128], index: 7, kind: output, shape index: {}]
  %s8 = sld [smem:[#allocation0]]
  $region38: #{mnist_comparator_forward.3} parent=0
    _
  %s10 = ssub.s32 1, %s8
  %s11 = scalar_select 0, %s10, %s8
  // Predicated region
  $region2: #{mnist_comparator_forward.3} parent=0 // pred_check
    _
  $region3: #{mnist_comparator_forward.3} parent=0 // pred_check_branch
    %13 = sbr.rel (0) target = $region5
  $region4: #{mnist_comparator_forward.3} parent=0 // pred_region
    _
  $region5: #{mnist_comparator_forward.3} parent=0 // pred_fallthru
    _
  // Predicated region
  $region6: #{mnist_comparator_forward.3} parent=0 // pred_check
    _
  $region7: #{mnist_comparator_forward.3} parent=0 // pred_check_branch
    %15 = sbr.rel (0) target = $region9
  $region8: #{mnist_comparator_forward.3} parent=0 // pred_region
    _
  $region9: #{mnist_comparator_forward.3} parent=0 // pred_fallthru
    _
  // Predicated region
  $region10: #{mnist_comparator_forward.3} parent=0 // pred_check
    _
  $region11: #{mnist_comparator_forward.3} parent=0 // pred_check_branch
    %17 = sbr.rel (0) target = $region13
  $region12: #{mnist_comparator_forward.3} parent=0 // pred_region
    _
  $region13: #{mnist_comparator_forward.3} parent=0 // pred_fallthru
    _
  // Predicated region
  $region14: #{mnist_comparator_forward.3} parent=0 // pred_check
    _
  $region15: #{mnist_comparator_forward.3} parent=0 // pred_check_branch
    %19 = sbr.rel (0) target = $region17
  $region16: #{mnist_comparator_forward.3} parent=0 // pred_region
    _
  $region17: #{mnist_comparator_forward.3} parent=0 // pred_fallthru
    _
  // Predicated region
  $region18: #{mnist_comparator_forward.3} parent=0 // pred_check
    _
  $region19: #{mnist_comparator_forward.3} parent=0 // pred_check_branch
    %21 = sbr.rel (0) target = $region21
  $region20: #{mnist_comparator_forward.3} parent=0 // pred_region
    _
  $region21: #{mnist_comparator_forward.3} parent=0 // pred_fallthru
    _
  // Predicated region
  $region22: #{mnist_comparator_forward.3} parent=0 // pred_check
    _
  $region23: #{mnist_comparator_forward.3} parent=0 // pred_check_branch
    %23 = sbr.rel (0) target = $region25
  $region24: #{mnist_comparator_forward.3} parent=0 // pred_region
    _
  $region25: #{mnist_comparator_forward.3} parent=0 // pred_fallthru
    _
  // Predicated region
  $region26: #{mnist_comparator_forward.3} parent=0 // pred_check
    _
  $region27: #{mnist_comparator_forward.3} parent=0 // pred_check_branch
    %25 = sbr.rel (0) target = $region29
  $region28: #{mnist_comparator_forward.3} parent=0 // pred_region
    _
  $region29: #{mnist_comparator_forward.3} parent=0 // pred_fallthru
    _
  %v27 = vld [vmem:[%s0] sm:$0xff]
  %v28 = vld [vmem:[%s0 + $0x8] sm:$0xff]
  %v29 = vld [vmem:[%s0 + $0x10] sm:$0xff]
  %v30 = vld [vmem:[%s0 + $0x18] sm:$0xff]
  %v31 = vld [vmem:[%s0 + $0x20] sm:$0xff]
  %v32 = vld [vmem:[%s0 + $0x28] sm:$0xff]
  %v33 = vld [vmem:[%s0 + $0x30] sm:$0xff]
  %v34 = vld [vmem:[%s0 + $0x38] sm:$0xff]
  %v35 = vld [vmem:[%s0 + $0x40] sm:$0xff]
  %v36 = vld [vmem:[%s0 + $0x48] sm:$0xff]
  %v37 = vld [vmem:[%s0 + $0x50] sm:$0xff]
  %v38 = vld [vmem:[%s0 + $0x58] sm:$0xff]
  %v39 = vld [vmem:[%s0 + $0x60] sm:$0xff]
  %v40 = vld [vmem:[%s0 + $0x68] sm:$0xff]
  %v41 = vld [vmem:[%s0 + $0x70] sm:$0xff]
  %v42 = vld [vmem:[%s0 + $0x78] sm:$0xff]
  %v43 = vld [vmem:[%s0 + $0x80] sm:$0xff]
  %v44 = vld [vmem:[%s0 + $0x88] sm:$0xff]
  %v45 = vld [vmem:[%s0 + $0x90] sm:$0xff]
  %v46 = vld [vmem:[%s0 + $0x98] sm:$0xff]
  %v47 = vld [vmem:[%s0 + $0xa0] sm:$0xff]
  %v48 = vld [vmem:[%s0 + $0xa8] sm:$0xff]
  %v49 = vld [vmem:[%s0 + $0xb0] sm:$0xff]
  %v50 = vld [vmem:[%s0 + $0xb8] sm:$0xff]
  %v51 = vld [vmem:[%s0 + $0xc0] sm:$0xff]
  %v52 = vld [vmem:[%s0 + $0xc8] sm:$0xff]
  %v53 = vld [vmem:[%s0 + $0xd0] sm:$0xff]
  %v54 = vld [vmem:[%s0 + $0xd8] sm:$0xff]
  %v55 = vld [vmem:[%s0 + $0xe0] sm:$0xff]
  %v56 = vld [vmem:[%s0 + $0xe8] sm:$0xff]
  %v57 = vld [vmem:[%s0 + $0xf0] sm:$0xff]
  %v58 = vld [vmem:[%s0 + $0xf8] sm:$0xff]
  %v59 = vld [vmem:[%s0 + $0x100] sm:$0xff]
  %v60 = vld [vmem:[%s0 + $0x108] sm:$0xff]
  %v61 = vld [vmem:[%s0 + $0x110] sm:$0xff]
  %v62 = vld [vmem:[%s0 + $0x118] sm:$0xff]
  %v63 = vld [vmem:[%s0 + $0x120] sm:$0xff]
  %v64 = vld [vmem:[%s0 + $0x128] sm:$0xff]
  %v65 = vld [vmem:[%s0 + $0x130] sm:$0xff]
  %v66 = vld [vmem:[%s0 + $0x138] sm:$0xff]
  %v67 = vld [vmem:[%s0 + $0x140] sm:$0xff]
  %v68 = vld [vmem:[%s0 + $0x148] sm:$0xff]
  %v69 = vld [vmem:[%s0 + $0x150] sm:$0xff]
  %v70 = vld [vmem:[%s0 + $0x158] sm:$0xff]
  %v71 = vld [vmem:[%s0 + $0x160] sm:$0xff]
  %v72 = vld [vmem:[%s0 + $0x168] sm:$0xff]
  %v73 = vld [vmem:[%s0 + $0x170] sm:$0xff]
  %v74 = vld [vmem:[%s0 + $0x178] sm:$0xff]
  %v75 = vld [vmem:[%s0 + $0x180] sm:$0xff]
  %v76 = vld [vmem:[%s0 + $0x188] sm:$0xff]
  %v77 = vld [vmem:[%s0 + $0x190] sm:$0xff]
  %v78 = vld [vmem:[%s0 + $0x198] sm:$0xff]
  %v79 = vld [vmem:[%s0 + $0x1a0] sm:$0xff]
  %v80 = vld [vmem:[%s0 + $0x1a8] sm:$0xff]
  %v81 = vld [vmem:[%s0 + $0x1b0] sm:$0xff]
  %v82 = vld [vmem:[%s0 + $0x1b8] sm:$0xff]
  %v83 = vld [vmem:[%s0 + $0x1c0] sm:$0xff]
  %v84 = vld [vmem:[%s0 + $0x1c8] sm:$0xff]
  %v85 = vld [vmem:[%s0 + $0x1d0] sm:$0xff]
  %v86 = vld [vmem:[%s0 + $0x1d8] sm:$0xff]
  %v87 = vld [vmem:[%s0 + $0x1e0] sm:$0xff]
  %v88 = vld [vmem:[%s0 + $0x1e8] sm:$0xff]
  %v89 = vld [vmem:[%s0 + $0x1f0] sm:$0xff]
  %v90 = vld [vmem:[%s0 + $0x1f8] sm:$0xff]
  %v91 = vld [vmem:[%s0 + $0x200] sm:$0xff]
  %v92 = vld [vmem:[%s0 + $0x208] sm:$0xff]
  %v93 = vld [vmem:[%s0 + $0x210] sm:$0xff]
  %v94 = vld [vmem:[%s0 + $0x218] sm:$0xff]
  %v95 = vld [vmem:[%s0 + $0x220] sm:$0xff]
  %v96 = vld [vmem:[%s0 + $0x228] sm:$0xff]
  %v97 = vld [vmem:[%s0 + $0x230] sm:$0xff]
  %v98 = vld [vmem:[%s0 + $0x238] sm:$0xff]
  %v99 = vld [vmem:[%s0 + $0x240] sm:$0xff]
  %v100 = vld [vmem:[%s0 + $0x248] sm:$0xff]
  %v101 = vld [vmem:[%s0 + $0x250] sm:$0xff]
  %v102 = vld [vmem:[%s0 + $0x258] sm:$0xff]
  %v103 = vld [vmem:[%s0 + $0x260] sm:$0xff]
  %v104 = vld [vmem:[%s0 + $0x268] sm:$0xff]
  %v105 = vld [vmem:[%s0 + $0x270] sm:$0xff]
  %v106 = vld [vmem:[%s0 + $0x278] sm:$0xff]
  %v107 = vld [vmem:[%s0 + $0x280] sm:$0xff]
  %v108 = vld [vmem:[%s0 + $0x288] sm:$0xff]
  %v109 = vld [vmem:[%s0 + $0x290] sm:$0xff]
  %v110 = vld [vmem:[%s0 + $0x298] sm:$0xff]
  %v111 = vld [vmem:[%s0 + $0x2a0] sm:$0xff]
  %v112 = vld [vmem:[%s0 + $0x2a8] sm:$0xff]
  %v113 = vld [vmem:[%s0 + $0x2b0] sm:$0xff]
  %v114 = vld [vmem:[%s0 + $0x2b8] sm:$0xff]
  %v115 = vld [vmem:[%s0 + $0x2c0] sm:$0xff]
  %v116 = vld [vmem:[%s0 + $0x2c8] sm:$0xff]
  %v117 = vld [vmem:[%s0 + $0x2d0] sm:$0xff]
  %v118 = vld [vmem:[%s0 + $0x2d8] sm:$0xff]
  %v119 = vld [vmem:[%s0 + $0x2e0] sm:$0xff]
  %v120 = vld [vmem:[%s0 + $0x2e8] sm:$0xff]
  %v121 = vld [vmem:[%s0 + $0x2f0] sm:$0xff]
  %v122 = vld [vmem:[%s0 + $0x2f8] sm:$0xff]
  %v123 = vld [vmem:[%s0 + $0x300] sm:$0xff]
  %v124 = vld [vmem:[%s0 + $0x308] sm:$0xff]
  %v125 = vld [vmem:[%s0 + $0x310] sm:$0xff]
  %v126 = vld [vmem:[%s0 + $0x318] sm:$0xff]
  %v127 = vld [vmem:[%s0 + $0x320] sm:$0xff]
  %v128 = vld [vmem:[%s0 + $0x328] sm:$0xff]
  %v129 = vld [vmem:[%s0 + $0x330] sm:$0xff]
  %v130 = vld [vmem:[%s0 + $0x338] sm:$0xff]
  %v131 = vld [vmem:[%s0 + $0x340] sm:$0xff]
  %v132 = vld [vmem:[%s0 + $0x348] sm:$0xff]
  %v133 = vld [vmem:[%s0 + $0x350] sm:$0xff]
  %v134 = vld [vmem:[%s0 + $0x358] sm:$0xff]
  %v135 = vld [vmem:[%s0 + $0x360] sm:$0xff]
  %v136 = vld [vmem:[%s0 + $0x368] sm:$0xff]
  %v137 = vld [vmem:[%s0 + $0x370] sm:$0xff]
  %v138 = vld [vmem:[%s0 + $0x378] sm:$0xff]
  %v139 = vld [vmem:[%s0 + $0x380] sm:$0xff]
  %v140 = vld [vmem:[%s0 + $0x388] sm:$0xff]
  %v141 = vld [vmem:[%s0 + $0x390] sm:$0xff]
  %v142 = vld [vmem:[%s0 + $0x398] sm:$0xff]
  %v143 = vld [vmem:[%s0 + $0x3a0] sm:$0xff]
  %v144 = vld [vmem:[%s0 + $0x3a8] sm:$0xff]
  %v145 = vld [vmem:[%s0 + $0x3b0] sm:$0xff]
  %v146 = vld [vmem:[%s0 + $0x3b8] sm:$0xff]
  %v147 = vld [vmem:[%s0 + $0x3c0] sm:$0xff]
  %v148 = vld [vmem:[%s0 + $0x3c8] sm:$0xff]
  %v149 = vld [vmem:[%s0 + $0x3d0] sm:$0xff]
  %v150 = vld [vmem:[%s0 + $0x3d8] sm:$0xff]
  %v151 = vld [vmem:[%s0 + $0x3e0] sm:$0xff]
  %v152 = vld [vmem:[%s0 + $0x3e8] sm:$0xff]
  %v153 = vld [vmem:[%s0 + $0x3f0] sm:$0xff]
  %v154 = vld [vmem:[%s0 + $0x3f8] sm:$0xff]
  %v155 = vld [vmem:[%s1] sm:$0xf]
  %v156 = vld [vmem:[%s1 + $0x4] sm:$0xf]
  %v157 = vld [vmem:[%s1 + $0x8] sm:$0xf]
  %v158 = vld [vmem:[%s1 + $0xc] sm:$0xf]
  %v159 = vld [vmem:[%s1 + $0x10] sm:$0xf]
  %v160 = vld [vmem:[%s1 + $0x14] sm:$0xf]
  %v161 = vld [vmem:[%s1 + $0x18] sm:$0xf]
  %v162 = vld [vmem:[%s1 + $0x1c] sm:$0xf]
  %v163 = vld [vmem:[%s1 + $0x20] sm:$0xf]
  %v164 = vld [vmem:[%s1 + $0x24] sm:$0xf]
  %v165 = vld [vmem:[%s1 + $0x28] sm:$0xf]
  %v166 = vld [vmem:[%s1 + $0x2c] sm:$0xf]
  %v167 = vld [vmem:[%s1 + $0x30] sm:$0xf]
  %v168 = vld [vmem:[%s1 + $0x34] sm:$0xf]
  %v169 = vld [vmem:[%s1 + $0x38] sm:$0xf]
  %v170 = vld [vmem:[%s1 + $0x3c] sm:$0xf]
  %v171 = vld [vmem:[%s1 + $0x40] sm:$0xf]
  %v172 = vld [vmem:[%s1 + $0x44] sm:$0xf]
  %v173 = vld [vmem:[%s1 + $0x48] sm:$0xf]
  %v174 = vld [vmem:[%s1 + $0x4c] sm:$0xf]
  %v175 = vld [vmem:[%s1 + $0x50] sm:$0xf]
  %v176 = vld [vmem:[%s1 + $0x54] sm:$0xf]
  %v177 = vld [vmem:[%s1 + $0x58] sm:$0xf]
  %v178 = vld [vmem:[%s1 + $0x5c] sm:$0xf]
  %v179 = vld [vmem:[%s1 + $0x60] sm:$0xf]
  %v180 = vld [vmem:[%s1 + $0x64] sm:$0xf]
  %v181 = vld [vmem:[%s1 + $0x68] sm:$0xf]
  %v182 = vld [vmem:[%s1 + $0x6c] sm:$0xf]
  %v183 = vld [vmem:[%s1 + $0x70] sm:$0xf]
  %v184 = vld [vmem:[%s1 + $0x74] sm:$0xf]
  %v185 = vld [vmem:[%s1 + $0x78] sm:$0xf]
  %v186 = vld [vmem:[%s1 + $0x7c] sm:$0x1]
  %v315 = vunpack.c.l.b16 %v27
  %v316 = vunpack.c.h.b16 %v27
  %v317 = vunpack.c.l.b16 %v28
  %v318 = vunpack.c.h.b16 %v28
  %v319 = vunpack.c.l.b16 %v29
  %v320 = vunpack.c.h.b16 %v29
  %v321 = vunpack.c.l.b16 %v30
  %v322 = vunpack.c.h.b16 %v30
  %v323 = vunpack.c.l.b16 %v31
  %v324 = vunpack.c.h.b16 %v31
  %v325 = vunpack.c.l.b16 %v32
  %v326 = vunpack.c.h.b16 %v32
  %v327 = vunpack.c.l.b16 %v33
  %v328 = vunpack.c.h.b16 %v33
  %v329 = vunpack.c.l.b16 %v34
  %v330 = vunpack.c.h.b16 %v34
  %v331 = vunpack.c.l.b16 %v35
  %v332 = vunpack.c.h.b16 %v35
  %v333 = vunpack.c.l.b16 %v36
  %v334 = vunpack.c.h.b16 %v36
  %v335 = vunpack.c.l.b16 %v37
  %v336 = vunpack.c.h.b16 %v37
  %v337 = vunpack.c.l.b16 %v38
  %v338 = vunpack.c.h.b16 %v38
  %v339 = vunpack.c.l.b16 %v39
  %v340 = vunpack.c.h.b16 %v39
  %v341 = vunpack.c.l.b16 %v40
  %v342 = vunpack.c.h.b16 %v40
  %v343 = vunpack.c.l.b16 %v41
  %v344 = vunpack.c.h.b16 %v41
  %v345 = vunpack.c.l.b16 %v42
  %v346 = vunpack.c.h.b16 %v42
  %v347 = vunpack.c.l.b16 %v43
  %v348 = vunpack.c.h.b16 %v43
  %v349 = vunpack.c.l.b16 %v44
  %v350 = vunpack.c.h.b16 %v44
  %v351 = vunpack.c.l.b16 %v45
  %v352 = vunpack.c.h.b16 %v45
  %v353 = vunpack.c.l.b16 %v46
  %v354 = vunpack.c.h.b16 %v46
  %v355 = vunpack.c.l.b16 %v47
  %v356 = vunpack.c.h.b16 %v47
  %v357 = vunpack.c.l.b16 %v48
  %v358 = vunpack.c.h.b16 %v48
  %v359 = vunpack.c.l.b16 %v49
  %v360 = vunpack.c.h.b16 %v49
  %v361 = vunpack.c.l.b16 %v50
  %v362 = vunpack.c.h.b16 %v50
  %v363 = vunpack.c.l.b16 %v51
  %v364 = vunpack.c.h.b16 %v51
  %v365 = vunpack.c.l.b16 %v52
  %v366 = vunpack.c.h.b16 %v52
  %v367 = vunpack.c.l.b16 %v53
  %v368 = vunpack.c.h.b16 %v53
  %v369 = vunpack.c.l.b16 %v54
  %v370 = vunpack.c.h.b16 %v54
  %v371 = vunpack.c.l.b16 %v55
  %v372 = vunpack.c.h.b16 %v55
  %v373 = vunpack.c.l.b16 %v56
  %v374 = vunpack.c.h.b16 %v56
  %v375 = vunpack.c.l.b16 %v57
  %v376 = vunpack.c.h.b16 %v57
  %v377 = vunpack.c.l.b16 %v58
  %v378 = vunpack.c.h.b16 %v58
  %v379 = vunpack.c.l.b16 %v59
  %v380 = vunpack.c.h.b16 %v59
  %v381 = vunpack.c.l.b16 %v60
  %v382 = vunpack.c.h.b16 %v60
  %v383 = vunpack.c.l.b16 %v61
  %v384 = vunpack.c.h.b16 %v61
  %v385 = vunpack.c.l.b16 %v62
  %v386 = vunpack.c.h.b16 %v62
  %v387 = vunpack.c.l.b16 %v63
  %v388 = vunpack.c.h.b16 %v63
  %v389 = vunpack.c.l.b16 %v64
  %v390 = vunpack.c.h.b16 %v64
  %v391 = vunpack.c.l.b16 %v65
  %v392 = vunpack.c.h.b16 %v65
  %v393 = vunpack.c.l.b16 %v66
  %v394 = vunpack.c.h.b16 %v66
  %v395 = vunpack.c.l.b16 %v67
  %v396 = vunpack.c.h.b16 %v67
  %v397 = vunpack.c.l.b16 %v68
  %v398 = vunpack.c.h.b16 %v68
  %v399 = vunpack.c.l.b16 %v69
  %v400 = vunpack.c.h.b16 %v69
  %v401 = vunpack.c.l.b16 %v70
  %v402 = vunpack.c.h.b16 %v70
  %v403 = vunpack.c.l.b16 %v71
  %v404 = vunpack.c.h.b16 %v71
  %v405 = vunpack.c.l.b16 %v72
  %v406 = vunpack.c.h.b16 %v72
  %v407 = vunpack.c.l.b16 %v73
  %v408 = vunpack.c.h.b16 %v73
  %v409 = vunpack.c.l.b16 %v74
  %v410 = vunpack.c.h.b16 %v74
  %v411 = vunpack.c.l.b16 %v75
  %v412 = vunpack.c.h.b16 %v75
  %v413 = vunpack.c.l.b16 %v76
  %v414 = vunpack.c.h.b16 %v76
  %v415 = vunpack.c.l.b16 %v77
  %v416 = vunpack.c.h.b16 %v77
  %v417 = vunpack.c.l.b16 %v78
  %v418 = vunpack.c.h.b16 %v78
  %v419 = vunpack.c.l.b16 %v79
  %v420 = vunpack.c.h.b16 %v79
  %v421 = vunpack.c.l.b16 %v80
  %v422 = vunpack.c.h.b16 %v80
  %v423 = vunpack.c.l.b16 %v81
  %v424 = vunpack.c.h.b16 %v81
  %v425 = vunpack.c.l.b16 %v82
  %v426 = vunpack.c.h.b16 %v82
  %v427 = vunpack.c.l.b16 %v83
  %v428 = vunpack.c.h.b16 %v83
  %v429 = vunpack.c.l.b16 %v84
  %v430 = vunpack.c.h.b16 %v84
  %v431 = vunpack.c.l.b16 %v85
  %v432 = vunpack.c.h.b16 %v85
  %v433 = vunpack.c.l.b16 %v86
  %v434 = vunpack.c.h.b16 %v86
  %v435 = vunpack.c.l.b16 %v87
  %v436 = vunpack.c.h.b16 %v87
  %v437 = vunpack.c.l.b16 %v88
  %v438 = vunpack.c.h.b16 %v88
  %v439 = vunpack.c.l.b16 %v89
  %v440 = vunpack.c.h.b16 %v89
  %v441 = vunpack.c.l.b16 %v90
  %v442 = vunpack.c.h.b16 %v90
  %v443 = vunpack.c.l.b16 %v91
  %v444 = vunpack.c.h.b16 %v91
  %v445 = vunpack.c.l.b16 %v92
  %v446 = vunpack.c.h.b16 %v92
  %v447 = vunpack.c.l.b16 %v93
  %v448 = vunpack.c.h.b16 %v93
  %v449 = vunpack.c.l.b16 %v94
  %v450 = vunpack.c.h.b16 %v94
  %v451 = vunpack.c.l.b16 %v95
  %v452 = vunpack.c.h.b16 %v95
  %v453 = vunpack.c.l.b16 %v96
  %v454 = vunpack.c.h.b16 %v96
  %v455 = vunpack.c.l.b16 %v97
  %v456 = vunpack.c.h.b16 %v97
  %v457 = vunpack.c.l.b16 %v98
  %v458 = vunpack.c.h.b16 %v98
  %v459 = vunpack.c.l.b16 %v99
  %v460 = vunpack.c.h.b16 %v99
  %v461 = vunpack.c.l.b16 %v100
  %v462 = vunpack.c.h.b16 %v100
  %v463 = vunpack.c.l.b16 %v101
  %v464 = vunpack.c.h.b16 %v101
  %v465 = vunpack.c.l.b16 %v102
  %v466 = vunpack.c.h.b16 %v102
  %v467 = vunpack.c.l.b16 %v103
  %v468 = vunpack.c.h.b16 %v103
  %v469 = vunpack.c.l.b16 %v104
  %v470 = vunpack.c.h.b16 %v104
  %v471 = vunpack.c.l.b16 %v105
  %v472 = vunpack.c.h.b16 %v105
  %v473 = vunpack.c.l.b16 %v106
  %v474 = vunpack.c.h.b16 %v106
  %v475 = vunpack.c.l.b16 %v107
  %v476 = vunpack.c.h.b16 %v107
  %v477 = vunpack.c.l.b16 %v108
  %v478 = vunpack.c.h.b16 %v108
  %v479 = vunpack.c.l.b16 %v109
  %v480 = vunpack.c.h.b16 %v109
  %v481 = vunpack.c.l.b16 %v110
  %v482 = vunpack.c.h.b16 %v110
  %v483 = vunpack.c.l.b16 %v111
  %v484 = vunpack.c.h.b16 %v111
  %v485 = vunpack.c.l.b16 %v112
  %v486 = vunpack.c.h.b16 %v112
  %v487 = vunpack.c.l.b16 %v113
  %v488 = vunpack.c.h.b16 %v113
  %v489 = vunpack.c.l.b16 %v114
  %v490 = vunpack.c.h.b16 %v114
  %v491 = vunpack.c.l.b16 %v115
  %v492 = vunpack.c.h.b16 %v115
  %v493 = vunpack.c.l.b16 %v116
  %v494 = vunpack.c.h.b16 %v116
  %v495 = vunpack.c.l.b16 %v117
  %v496 = vunpack.c.h.b16 %v117
  %v497 = vunpack.c.l.b16 %v118
  %v498 = vunpack.c.h.b16 %v118
  %v499 = vunpack.c.l.b16 %v119
  %v500 = vunpack.c.h.b16 %v119
  %v501 = vunpack.c.l.b16 %v120
  %v502 = vunpack.c.h.b16 %v120
  %v503 = vunpack.c.l.b16 %v121
  %v504 = vunpack.c.h.b16 %v121
  %v505 = vunpack.c.l.b16 %v122
  %v506 = vunpack.c.h.b16 %v122
  %v507 = vunpack.c.l.b16 %v123
  %v508 = vunpack.c.h.b16 %v123
  %v509 = vunpack.c.l.b16 %v124
  %v510 = vunpack.c.h.b16 %v124
  %v511 = vunpack.c.l.b16 %v125
  %v512 = vunpack.c.h.b16 %v125
  %v513 = vunpack.c.l.b16 %v126
  %v514 = vunpack.c.h.b16 %v126
  %v515 = vunpack.c.l.b16 %v127
  %v516 = vunpack.c.h.b16 %v127
  %v517 = vunpack.c.l.b16 %v128
  %v518 = vunpack.c.h.b16 %v128
  %v519 = vunpack.c.l.b16 %v129
  %v520 = vunpack.c.h.b16 %v129
  %v521 = vunpack.c.l.b16 %v130
  %v522 = vunpack.c.h.b16 %v130
  %v523 = vunpack.c.l.b16 %v131
  %v524 = vunpack.c.h.b16 %v131
  %v525 = vunpack.c.l.b16 %v132
  %v526 = vunpack.c.h.b16 %v132
  %v527 = vunpack.c.l.b16 %v133
  %v528 = vunpack.c.h.b16 %v133
  %v529 = vunpack.c.l.b16 %v134
  %v530 = vunpack.c.h.b16 %v134
  %v531 = vunpack.c.l.b16 %v135
  %v532 = vunpack.c.h.b16 %v135
  %v533 = vunpack.c.l.b16 %v136
  %v534 = vunpack.c.h.b16 %v136
  %v535 = vunpack.c.l.b16 %v137
  %v536 = vunpack.c.h.b16 %v137
  %v537 = vunpack.c.l.b16 %v138
  %v538 = vunpack.c.h.b16 %v138
  %v539 = vunpack.c.l.b16 %v139
  %v540 = vunpack.c.h.b16 %v139
  %v541 = vunpack.c.l.b16 %v140
  %v542 = vunpack.c.h.b16 %v140
  %v543 = vunpack.c.l.b16 %v141
  %v544 = vunpack.c.h.b16 %v141
  %v545 = vunpack.c.l.b16 %v142
  %v546 = vunpack.c.h.b16 %v142
  %v547 = vunpack.c.l.b16 %v143
  %v548 = vunpack.c.h.b16 %v143
  %v549 = vunpack.c.l.b16 %v144
  %v550 = vunpack.c.h.b16 %v144
  %v551 = vunpack.c.l.b16 %v145
  %v552 = vunpack.c.h.b16 %v145
  %v553 = vunpack.c.l.b16 %v146
  %v554 = vunpack.c.h.b16 %v146
  %v555 = vunpack.c.l.b16 %v147
  %v556 = vunpack.c.h.b16 %v147
  %v557 = vunpack.c.l.b16 %v148
  %v558 = vunpack.c.h.b16 %v148
  %v559 = vunpack.c.l.b16 %v149
  %v560 = vunpack.c.h.b16 %v149
  %v561 = vunpack.c.l.b16 %v150
  %v562 = vunpack.c.h.b16 %v150
  %v563 = vunpack.c.l.b16 %v151
  %v564 = vunpack.c.h.b16 %v151
  %v565 = vunpack.c.l.b16 %v152
  %v566 = vunpack.c.h.b16 %v152
  %v567 = vunpack.c.l.b16 %v153
  %v568 = vunpack.c.h.b16 %v153
  %v569 = vunpack.c.l.b16 %v154
  %v570 = vunpack.c.h.b16 %v154
  %v571 = vpack.c.b16 %v317, %v315
  %v572 = vpack.c.b16 %v318, %v316
  %v573 = vpack.c.b16 %v321, %v319
  %v574 = vpack.c.b16 %v322, %v320
  %v575 = vpack.c.b16 %v325, %v323
  %v576 = vpack.c.b16 %v326, %v324
  %v577 = vpack.c.b16 %v329, %v327
  %v578 = vpack.c.b16 %v330, %v328
  %v579 = vpack.c.b16 %v333, %v331
  %v580 = vpack.c.b16 %v334, %v332
  %v581 = vpack.c.b16 %v337, %v335
  %v582 = vpack.c.b16 %v338, %v336
  %v583 = vpack.c.b16 %v341, %v339
  %v584 = vpack.c.b16 %v342, %v340
  %v585 = vpack.c.b16 %v345, %v343
  %v586 = vpack.c.b16 %v346, %v344
  %v587 = vpack.c.b16 %v349, %v347
  %v588 = vpack.c.b16 %v350, %v348
  %v589 = vpack.c.b16 %v353, %v351
  %v590 = vpack.c.b16 %v354, %v352
  %v591 = vpack.c.b16 %v357, %v355
  %v592 = vpack.c.b16 %v358, %v356
  %v593 = vpack.c.b16 %v361, %v359
  %v594 = vpack.c.b16 %v362, %v360
  %v595 = vpack.c.b16 %v365, %v363
  %v596 = vpack.c.b16 %v366, %v364
  %v597 = vpack.c.b16 %v369, %v367
  %v598 = vpack.c.b16 %v370, %v368
  %v599 = vpack.c.b16 %v373, %v371
  %v600 = vpack.c.b16 %v374, %v372
  %v601 = vpack.c.b16 %v377, %v375
  %v602 = vpack.c.b16 %v378, %v376
  %v603 = vpack.c.b16 %v381, %v379
  %v604 = vpack.c.b16 %v382, %v380
  %v605 = vpack.c.b16 %v385, %v383
  %v606 = vpack.c.b16 %v386, %v384
  %v607 = vpack.c.b16 %v389, %v387
  %v608 = vpack.c.b16 %v390, %v388
  %v609 = vpack.c.b16 %v393, %v391
  %v610 = vpack.c.b16 %v394, %v392
  %v611 = vpack.c.b16 %v397, %v395
  %v612 = vpack.c.b16 %v398, %v396
  %v613 = vpack.c.b16 %v401, %v399
  %v614 = vpack.c.b16 %v402, %v400
  %v615 = vpack.c.b16 %v405, %v403
  %v616 = vpack.c.b16 %v406, %v404
  %v617 = vpack.c.b16 %v409, %v407
  %v618 = vpack.c.b16 %v410, %v408
  %v619 = vpack.c.b16 %v413, %v411
  %v620 = vpack.c.b16 %v414, %v412
  %v621 = vpack.c.b16 %v417, %v415
  %v622 = vpack.c.b16 %v418, %v416
  %v623 = vpack.c.b16 %v421, %v419
  %v624 = vpack.c.b16 %v422, %v420
  %v625 = vpack.c.b16 %v425, %v423
  %v626 = vpack.c.b16 %v426, %v424
  %v627 = vpack.c.b16 %v429, %v427
  %v628 = vpack.c.b16 %v430, %v428
  %v629 = vpack.c.b16 %v433, %v431
  %v630 = vpack.c.b16 %v434, %v432
  %v631 = vpack.c.b16 %v437, %v435
  %v632 = vpack.c.b16 %v438, %v436
  %v633 = vpack.c.b16 %v441, %v439
  %v634 = vpack.c.b16 %v442, %v440
  %v635 = vpack.c.b16 %v445, %v443
  %v636 = vpack.c.b16 %v446, %v444
  %v637 = vpack.c.b16 %v449, %v447
  %v638 = vpack.c.b16 %v450, %v448
  %v639 = vpack.c.b16 %v453, %v451
  %v640 = vpack.c.b16 %v454, %v452
  %v641 = vpack.c.b16 %v457, %v455
  %v642 = vpack.c.b16 %v458, %v456
  %v643 = vpack.c.b16 %v461, %v459
  %v644 = vpack.c.b16 %v462, %v460
  %v645 = vpack.c.b16 %v465, %v463
  %v646 = vpack.c.b16 %v466, %v464
  %v647 = vpack.c.b16 %v469, %v467
  %v648 = vpack.c.b16 %v470, %v468
  %v649 = vpack.c.b16 %v473, %v471
  %v650 = vpack.c.b16 %v474, %v472
  %v651 = vpack.c.b16 %v477, %v475
  %v652 = vpack.c.b16 %v478, %v476
  %v653 = vpack.c.b16 %v481, %v479
  %v654 = vpack.c.b16 %v482, %v480
  %v655 = vpack.c.b16 %v485, %v483
  %v656 = vpack.c.b16 %v486, %v484
  %v657 = vpack.c.b16 %v489, %v487
  %v658 = vpack.c.b16 %v490, %v488
  %v659 = vpack.c.b16 %v493, %v491
  %v660 = vpack.c.b16 %v494, %v492
  %v661 = vpack.c.b16 %v497, %v495
  %v662 = vpack.c.b16 %v498, %v496
  %v663 = vpack.c.b16 %v501, %v499
  %v664 = vpack.c.b16 %v502, %v500
  %v665 = vpack.c.b16 %v505, %v503
  %v666 = vpack.c.b16 %v506, %v504
  %v667 = vpack.c.b16 %v509, %v507
  %v668 = vpack.c.b16 %v510, %v508
  %v669 = vpack.c.b16 %v513, %v511
  %v670 = vpack.c.b16 %v514, %v512
  %v671 = vpack.c.b16 %v517, %v515
  %v672 = vpack.c.b16 %v518, %v516
  %v673 = vpack.c.b16 %v521, %v519
  %v674 = vpack.c.b16 %v522, %v520
  %v675 = vpack.c.b16 %v525, %v523
  %v676 = vpack.c.b16 %v526, %v524
  %v677 = vpack.c.b16 %v529, %v527
  %v678 = vpack.c.b16 %v530, %v528
  %v679 = vpack.c.b16 %v533, %v531
  %v680 = vpack.c.b16 %v534, %v532
  %v681 = vpack.c.b16 %v537, %v535
  %v682 = vpack.c.b16 %v538, %v536
  %v683 = vpack.c.b16 %v541, %v539
  %v684 = vpack.c.b16 %v542, %v540
  %v685 = vpack.c.b16 %v545, %v543
  %v686 = vpack.c.b16 %v546, %v544
  %v687 = vpack.c.b16 %v549, %v547
  %v688 = vpack.c.b16 %v550, %v548
  %v689 = vpack.c.b16 %v553, %v551
  %v690 = vpack.c.b16 %v554, %v552
  %v691 = vpack.c.b16 %v557, %v555
  %v692 = vpack.c.b16 %v558, %v556
  %v693 = vpack.c.b16 %v561, %v559
  %v694 = vpack.c.b16 %v562, %v560
  %v695 = vpack.c.b16 %v565, %v563
  %v696 = vpack.c.b16 %v566, %v564
  %v697 = vpack.c.b16 %v569, %v567
  %v698 = vpack.c.b16 %v570, %v568
  %v795 = vunpack.c.l.b16 %v155
  %v796 = vunpack.c.l.b16 %v156
  %v797 = vunpack.c.l.b16 %v157
  %v798 = vunpack.c.l.b16 %v158
  %v799 = vunpack.c.l.b16 %v159
  %v800 = vunpack.c.l.b16 %v160
  %v801 = vunpack.c.l.b16 %v161
  %v802 = vunpack.c.l.b16 %v162
  %v803 = vunpack.c.l.b16 %v163
  %v804 = vunpack.c.l.b16 %v164
  %v805 = vunpack.c.l.b16 %v165
  %v806 = vunpack.c.l.b16 %v166
  %v807 = vunpack.c.l.b16 %v167
  %v808 = vunpack.c.l.b16 %v168
  %v809 = vunpack.c.l.b16 %v169
  %v810 = vunpack.c.l.b16 %v170
  %v811 = vunpack.c.l.b16 %v171
  %v812 = vunpack.c.l.b16 %v172
  %v813 = vunpack.c.l.b16 %v173
  %v814 = vunpack.c.l.b16 %v174
  %v815 = vunpack.c.l.b16 %v175
  %v816 = vunpack.c.l.b16 %v176
  %v817 = vunpack.c.l.b16 %v177
  %v818 = vunpack.c.l.b16 %v178
  %v819 = vunpack.c.l.b16 %v179
  %v820 = vunpack.c.l.b16 %v180
  %v821 = vunpack.c.l.b16 %v181
  %v822 = vunpack.c.l.b16 %v182
  %v823 = vunpack.c.l.b16 %v183
  %v824 = vunpack.c.l.b16 %v184
  %v825 = vunpack.c.l.b16 %v185
  %v826 = vunpack.c.l.b16 %v186
  %v827 = vpack.c.b16 %v796, %v795
  %v828 = vpack.c.b16 %v798, %v797
  %v829 = vpack.c.b16 %v800, %v799
  %v830 = vpack.c.b16 %v802, %v801
  %v831 = vpack.c.b16 %v804, %v803
  %v832 = vpack.c.b16 %v806, %v805
  %v833 = vpack.c.b16 %v808, %v807
  %v834 = vpack.c.b16 %v810, %v809
  %v835 = vpack.c.b16 %v812, %v811
  %v836 = vpack.c.b16 %v814, %v813
  %v837 = vpack.c.b16 %v816, %v815
  %v838 = vpack.c.b16 %v818, %v817
  %v839 = vpack.c.b16 %v820, %v819
  %v840 = vpack.c.b16 %v822, %v821
  %v841 = vpack.c.b16 %v824, %v823
  %v842 = vpack.c.b16 %v826, %v825
  %vm858 = vcmask 998400
  %v860 = vsel %vm858, %v572, 0
  %v863 = vsel %vm858, %v574, 0
  %v866 = vsel %vm858, %v576, 0
  %v869 = vsel %vm858, %v578, 0
  %v872 = vsel %vm858, %v580, 0
  %v875 = vsel %vm858, %v582, 0
  %v878 = vsel %vm858, %v584, 0
  %v881 = vsel %vm858, %v586, 0
  %v884 = vsel %vm858, %v588, 0
  %v887 = vsel %vm858, %v590, 0
  %v890 = vsel %vm858, %v592, 0
  %v893 = vsel %vm858, %v594, 0
  %v896 = vsel %vm858, %v596, 0
  %v899 = vsel %vm858, %v598, 0
  %v902 = vsel %vm858, %v600, 0
  %v905 = vsel %vm858, %v602, 0
  %v908 = vsel %vm858, %v604, 0
  %v911 = vsel %vm858, %v606, 0
  %v914 = vsel %vm858, %v608, 0
  %v917 = vsel %vm858, %v610, 0
  %v920 = vsel %vm858, %v612, 0
  %v923 = vsel %vm858, %v614, 0
  %v926 = vsel %vm858, %v616, 0
  %v929 = vsel %vm858, %v618, 0
  %v932 = vsel %vm858, %v620, 0
  %v935 = vsel %vm858, %v622, 0
  %v938 = vsel %vm858, %v624, 0
  %v941 = vsel %vm858, %v626, 0
  %v944 = vsel %vm858, %v628, 0
  %v947 = vsel %vm858, %v630, 0
  %v950 = vsel %vm858, %v632, 0
  %v953 = vsel %vm858, %v634, 0
  %v956 = vsel %vm858, %v636, 0
  %v959 = vsel %vm858, %v638, 0
  %v962 = vsel %vm858, %v640, 0
  %v965 = vsel %vm858, %v642, 0
  %v968 = vsel %vm858, %v644, 0
  %v971 = vsel %vm858, %v646, 0
  %v974 = vsel %vm858, %v648, 0
  %v977 = vsel %vm858, %v650, 0
  %v980 = vsel %vm858, %v652, 0
  %v983 = vsel %vm858, %v654, 0
  %v986 = vsel %vm858, %v656, 0
  %v989 = vsel %vm858, %v658, 0
  %v992 = vsel %vm858, %v660, 0
  %v995 = vsel %vm858, %v662, 0
  %v998 = vsel %vm858, %v664, 0
  %v1001 = vsel %vm858, %v666, 0
  %v1004 = vsel %vm858, %v668, 0
  %v1007 = vsel %vm858, %v670, 0
  %v1010 = vsel %vm858, %v672, 0
  %v1013 = vsel %vm858, %v674, 0
  %v1016 = vsel %vm858, %v676, 0
  %v1019 = vsel %vm858, %v678, 0
  %v1022 = vsel %vm858, %v680, 0
  %v1025 = vsel %vm858, %v682, 0
  %v1028 = vsel %vm858, %v684, 0
  %v1031 = vsel %vm858, %v686, 0
  %v1034 = vsel %vm858, %v688, 0
  %v1037 = vsel %vm858, %v690, 0
  %v1040 = vsel %vm858, %v692, 0
  %v1043 = vsel %vm858, %v694, 0
  %v1046 = vsel %vm858, %v696, 0
  %v1049 = vsel %vm858, %v698, 0
  %vm1051 = vcmask 1044480
  %v1053 = vsel %vm1051, %v842, 0
  %1055 = vmatpush.bf16.msra.mxu0 %v834
  %1056 = vmatpush.bf16.msra.mxu0 %v833
  %1057 = vmatpush.bf16.msra.mxu0 %v832
  %1058 = vmatpush.bf16.msra.mxu0 %v831
  %1059 = vmatpush.bf16.msra.mxu0 %v830
  %1060 = vmatpush.bf16.msra.mxu0 %v829
  %1061 = vmatpush.bf16.msra.mxu0 %v828
  %1062 = vmatpush.bf16.msra.mxu0 %v827
  %1063 = vmatmul.bf16.gmra.mxu0 %v571
  %v1064 = vpop.f32.mrf.mxu0
  %v1065 = vadd.f32 0.0, %v1064
  %v1066 = vpop.f32.mrf.mxu0
  %v1067 = vadd.f32 0.0, %v1066
  %1068 = vmatmul.bf16.gmra.mxu0 %v573
  %v1069 = vpop.f32.mrf.mxu0
  %v1070 = vadd.f32 0.0, %v1069
  %v1071 = vpop.f32.mrf.mxu0
  %v1072 = vadd.f32 0.0, %v1071
  %1073 = vmatmul.bf16.gmra.mxu0 %v575
  %v1074 = vpop.f32.mrf.mxu0
  %v1075 = vadd.f32 0.0, %v1074
  %v1076 = vpop.f32.mrf.mxu0
  %v1077 = vadd.f32 0.0, %v1076
  %1078 = vmatmul.bf16.gmra.mxu0 %v577
  %v1079 = vpop.f32.mrf.mxu0
  %v1080 = vadd.f32 0.0, %v1079
  %v1081 = vpop.f32.mrf.mxu0
  %v1082 = vadd.f32 0.0, %v1081
  %1083 = vmatmul.bf16.gmra.mxu0 %v579
  %v1084 = vpop.f32.mrf.mxu0
  %v1085 = vadd.f32 0.0, %v1084
  %v1086 = vpop.f32.mrf.mxu0
  %v1087 = vadd.f32 0.0, %v1086
  %1088 = vmatmul.bf16.gmra.mxu0 %v581
  %v1089 = vpop.f32.mrf.mxu0
  %v1090 = vadd.f32 0.0, %v1089
  %v1091 = vpop.f32.mrf.mxu0
  %v1092 = vadd.f32 0.0, %v1091
  %1093 = vmatmul.bf16.gmra.mxu0 %v583
  %v1094 = vpop.f32.mrf.mxu0
  %v1095 = vadd.f32 0.0, %v1094
  %v1096 = vpop.f32.mrf.mxu0
  %v1097 = vadd.f32 0.0, %v1096
  %1098 = vmatmul.bf16.gmra.mxu0 %v585
  %v1099 = vpop.f32.mrf.mxu0
  %v1100 = vadd.f32 0.0, %v1099
  %v1101 = vpop.f32.mrf.mxu0
  %v1102 = vadd.f32 0.0, %v1101
  %1103 = vmatmul.bf16.gmra.mxu0 %v587
  %v1104 = vpop.f32.mrf.mxu0
  %v1105 = vadd.f32 0.0, %v1104
  %v1106 = vpop.f32.mrf.mxu0
  %v1107 = vadd.f32 0.0, %v1106
  %1108 = vmatmul.bf16.gmra.mxu0 %v589
  %v1109 = vpop.f32.mrf.mxu0
  %v1110 = vadd.f32 0.0, %v1109
  %v1111 = vpop.f32.mrf.mxu0
  %v1112 = vadd.f32 0.0, %v1111
  %1113 = vmatmul.bf16.gmra.mxu0 %v591
  %v1114 = vpop.f32.mrf.mxu0
  %v1115 = vadd.f32 0.0, %v1114
  %v1116 = vpop.f32.mrf.mxu0
  %v1117 = vadd.f32 0.0, %v1116
  %1118 = vmatmul.bf16.gmra.mxu0 %v593
  %v1119 = vpop.f32.mrf.mxu0
  %v1120 = vadd.f32 0.0, %v1119
  %v1121 = vpop.f32.mrf.mxu0
  %v1122 = vadd.f32 0.0, %v1121
  %1123 = vmatmul.bf16.gmra.mxu0 %v595
  %v1124 = vpop.f32.mrf.mxu0
  %v1125 = vadd.f32 0.0, %v1124
  %v1126 = vpop.f32.mrf.mxu0
  %v1127 = vadd.f32 0.0, %v1126
  %1128 = vmatmul.bf16.gmra.mxu0 %v597
  %v1129 = vpop.f32.mrf.mxu0
  %v1130 = vadd.f32 0.0, %v1129
  %v1131 = vpop.f32.mrf.mxu0
  %v1132 = vadd.f32 0.0, %v1131
  %1133 = vmatmul.bf16.gmra.mxu0 %v599
  %v1134 = vpop.f32.mrf.mxu0
  %v1135 = vadd.f32 0.0, %v1134
  %v1136 = vpop.f32.mrf.mxu0
  %v1137 = vadd.f32 0.0, %v1136
  %1138 = vmatmul.bf16.gmra.mxu0 %v601
  %v1139 = vpop.f32.mrf.mxu0
  %v1140 = vadd.f32 0.0, %v1139
  %v1141 = vpop.f32.mrf.mxu0
  %v1142 = vadd.f32 0.0, %v1141
  %1143 = vmatmul.bf16.gmra.mxu0 %v603
  %v1144 = vpop.f32.mrf.mxu0
  %v1145 = vadd.f32 0.0, %v1144
  %v1146 = vpop.f32.mrf.mxu0
  %v1147 = vadd.f32 0.0, %v1146
  %1148 = vmatmul.bf16.gmra.mxu0 %v605
  %v1149 = vpop.f32.mrf.mxu0
  %v1150 = vadd.f32 0.0, %v1149
  %v1151 = vpop.f32.mrf.mxu0
  %v1152 = vadd.f32 0.0, %v1151
  %1153 = vmatmul.bf16.gmra.mxu0 %v607
  %v1154 = vpop.f32.mrf.mxu0
  %v1155 = vadd.f32 0.0, %v1154
  %v1156 = vpop.f32.mrf.mxu0
  %v1157 = vadd.f32 0.0, %v1156
  %1158 = vmatmul.bf16.gmra.mxu0 %v609
  %v1159 = vpop.f32.mrf.mxu0
  %v1160 = vadd.f32 0.0, %v1159
  %v1161 = vpop.f32.mrf.mxu0
  %v1162 = vadd.f32 0.0, %v1161
  %1163 = vmatmul.bf16.gmra.mxu0 %v611
  %v1164 = vpop.f32.mrf.mxu0
  %v1165 = vadd.f32 0.0, %v1164
  %v1166 = vpop.f32.mrf.mxu0
  %v1167 = vadd.f32 0.0, %v1166
  %1168 = vmatmul.bf16.gmra.mxu0 %v613
  %v1169 = vpop.f32.mrf.mxu0
  %v1170 = vadd.f32 0.0, %v1169
  %v1171 = vpop.f32.mrf.mxu0
  %v1172 = vadd.f32 0.0, %v1171
  %1173 = vmatmul.bf16.gmra.mxu0 %v615
  %v1174 = vpop.f32.mrf.mxu0
  %v1175 = vadd.f32 0.0, %v1174
  %v1176 = vpop.f32.mrf.mxu0
  %v1177 = vadd.f32 0.0, %v1176
  %1178 = vmatmul.bf16.gmra.mxu0 %v617
  %v1179 = vpop.f32.mrf.mxu0
  %v1180 = vadd.f32 0.0, %v1179
  %v1181 = vpop.f32.mrf.mxu0
  %v1182 = vadd.f32 0.0, %v1181
  %1183 = vmatmul.bf16.gmra.mxu0 %v619
  %v1184 = vpop.f32.mrf.mxu0
  %v1185 = vadd.f32 0.0, %v1184
  %v1186 = vpop.f32.mrf.mxu0
  %v1187 = vadd.f32 0.0, %v1186
  %1188 = vmatmul.bf16.gmra.mxu0 %v621
  %v1189 = vpop.f32.mrf.mxu0
  %v1190 = vadd.f32 0.0, %v1189
  %v1191 = vpop.f32.mrf.mxu0
  %v1192 = vadd.f32 0.0, %v1191
  %1193 = vmatmul.bf16.gmra.mxu0 %v623
  %v1194 = vpop.f32.mrf.mxu0
  %v1195 = vadd.f32 0.0, %v1194
  %v1196 = vpop.f32.mrf.mxu0
  %v1197 = vadd.f32 0.0, %v1196
  %1198 = vmatmul.bf16.gmra.mxu0 %v625
  %v1199 = vpop.f32.mrf.mxu0
  %v1200 = vadd.f32 0.0, %v1199
  %v1201 = vpop.f32.mrf.mxu0
  %v1202 = vadd.f32 0.0, %v1201
  %1203 = vmatmul.bf16.gmra.mxu0 %v627
  %v1204 = vpop.f32.mrf.mxu0
  %v1205 = vadd.f32 0.0, %v1204
  %v1206 = vpop.f32.mrf.mxu0
  %v1207 = vadd.f32 0.0, %v1206
  %1208 = vmatmul.bf16.gmra.mxu0 %v629
  %v1209 = vpop.f32.mrf.mxu0
  %v1210 = vadd.f32 0.0, %v1209
  %v1211 = vpop.f32.mrf.mxu0
  %v1212 = vadd.f32 0.0, %v1211
  %1213 = vmatmul.bf16.gmra.mxu0 %v631
  %v1214 = vpop.f32.mrf.mxu0
  %v1215 = vadd.f32 0.0, %v1214
  %v1216 = vpop.f32.mrf.mxu0
  %v1217 = vadd.f32 0.0, %v1216
  %1218 = vmatmul.bf16.gmra.mxu0 %v633
  %v1219 = vpop.f32.mrf.mxu0
  %v1220 = vadd.f32 0.0, %v1219
  %v1221 = vpop.f32.mrf.mxu0
  %v1222 = vadd.f32 0.0, %v1221
  %1223 = vmatmul.bf16.gmra.mxu0 %v635
  %v1224 = vpop.f32.mrf.mxu0
  %v1225 = vadd.f32 0.0, %v1224
  %v1226 = vpop.f32.mrf.mxu0
  %v1227 = vadd.f32 0.0, %v1226
  %1228 = vmatmul.bf16.gmra.mxu0 %v637
  %v1229 = vpop.f32.mrf.mxu0
  %v1230 = vadd.f32 0.0, %v1229
  %v1231 = vpop.f32.mrf.mxu0
  %v1232 = vadd.f32 0.0, %v1231
  %1233 = vmatmul.bf16.gmra.mxu0 %v639
  %v1234 = vpop.f32.mrf.mxu0
  %v1235 = vadd.f32 0.0, %v1234
  %v1236 = vpop.f32.mrf.mxu0
  %v1237 = vadd.f32 0.0, %v1236
  %1238 = vmatmul.bf16.gmra.mxu0 %v641
  %v1239 = vpop.f32.mrf.mxu0
  %v1240 = vadd.f32 0.0, %v1239
  %v1241 = vpop.f32.mrf.mxu0
  %v1242 = vadd.f32 0.0, %v1241
  %1243 = vmatmul.bf16.gmra.mxu0 %v643
  %v1244 = vpop.f32.mrf.mxu0
  %v1245 = vadd.f32 0.0, %v1244
  %v1246 = vpop.f32.mrf.mxu0
  %v1247 = vadd.f32 0.0, %v1246
  %1248 = vmatmul.bf16.gmra.mxu0 %v645
  %v1249 = vpop.f32.mrf.mxu0
  %v1250 = vadd.f32 0.0, %v1249
  %v1251 = vpop.f32.mrf.mxu0
  %v1252 = vadd.f32 0.0, %v1251
  %1253 = vmatmul.bf16.gmra.mxu0 %v647
  %v1254 = vpop.f32.mrf.mxu0
  %v1255 = vadd.f32 0.0, %v1254
  %v1256 = vpop.f32.mrf.mxu0
  %v1257 = vadd.f32 0.0, %v1256
  %1258 = vmatmul.bf16.gmra.mxu0 %v649
  %v1259 = vpop.f32.mrf.mxu0
  %v1260 = vadd.f32 0.0, %v1259
  %v1261 = vpop.f32.mrf.mxu0
  %v1262 = vadd.f32 0.0, %v1261
  %1263 = vmatmul.bf16.gmra.mxu0 %v651
  %v1264 = vpop.f32.mrf.mxu0
  %v1265 = vadd.f32 0.0, %v1264
  %v1266 = vpop.f32.mrf.mxu0
  %v1267 = vadd.f32 0.0, %v1266
  %1268 = vmatmul.bf16.gmra.mxu0 %v653
  %v1269 = vpop.f32.mrf.mxu0
  %v1270 = vadd.f32 0.0, %v1269
  %v1271 = vpop.f32.mrf.mxu0
  %v1272 = vadd.f32 0.0, %v1271
  %1273 = vmatmul.bf16.gmra.mxu0 %v655
  %v1274 = vpop.f32.mrf.mxu0
  %v1275 = vadd.f32 0.0, %v1274
  %v1276 = vpop.f32.mrf.mxu0
  %v1277 = vadd.f32 0.0, %v1276
  %1278 = vmatmul.bf16.gmra.mxu0 %v657
  %v1279 = vpop.f32.mrf.mxu0
  %v1280 = vadd.f32 0.0, %v1279
  %v1281 = vpop.f32.mrf.mxu0
  %v1282 = vadd.f32 0.0, %v1281
  %1283 = vmatmul.bf16.gmra.mxu0 %v659
  %v1284 = vpop.f32.mrf.mxu0
  %v1285 = vadd.f32 0.0, %v1284
  %v1286 = vpop.f32.mrf.mxu0
  %v1287 = vadd.f32 0.0, %v1286
  %1288 = vmatmul.bf16.gmra.mxu0 %v661
  %v1289 = vpop.f32.mrf.mxu0
  %v1290 = vadd.f32 0.0, %v1289
  %v1291 = vpop.f32.mrf.mxu0
  %v1292 = vadd.f32 0.0, %v1291
  %1293 = vmatmul.bf16.gmra.mxu0 %v663
  %v1294 = vpop.f32.mrf.mxu0
  %v1295 = vadd.f32 0.0, %v1294
  %v1296 = vpop.f32.mrf.mxu0
  %v1297 = vadd.f32 0.0, %v1296
  %1298 = vmatmul.bf16.gmra.mxu0 %v665
  %v1299 = vpop.f32.mrf.mxu0
  %v1300 = vadd.f32 0.0, %v1299
  %v1301 = vpop.f32.mrf.mxu0
  %v1302 = vadd.f32 0.0, %v1301
  %1303 = vmatmul.bf16.gmra.mxu0 %v667
  %v1304 = vpop.f32.mrf.mxu0
  %v1305 = vadd.f32 0.0, %v1304
  %v1306 = vpop.f32.mrf.mxu0
  %v1307 = vadd.f32 0.0, %v1306
  %1308 = vmatmul.bf16.gmra.mxu0 %v669
  %v1309 = vpop.f32.mrf.mxu0
  %v1310 = vadd.f32 0.0, %v1309
  %v1311 = vpop.f32.mrf.mxu0
  %v1312 = vadd.f32 0.0, %v1311
  %1313 = vmatmul.bf16.gmra.mxu0 %v671
  %v1314 = vpop.f32.mrf.mxu0
  %v1315 = vadd.f32 0.0, %v1314
  %v1316 = vpop.f32.mrf.mxu0
  %v1317 = vadd.f32 0.0, %v1316
  %1318 = vmatmul.bf16.gmra.mxu0 %v673
  %v1319 = vpop.f32.mrf.mxu0
  %v1320 = vadd.f32 0.0, %v1319
  %v1321 = vpop.f32.mrf.mxu0
  %v1322 = vadd.f32 0.0, %v1321
  %1323 = vmatmul.bf16.gmra.mxu0 %v675
  %v1324 = vpop.f32.mrf.mxu0
  %v1325 = vadd.f32 0.0, %v1324
  %v1326 = vpop.f32.mrf.mxu0
  %v1327 = vadd.f32 0.0, %v1326
  %1328 = vmatmul.bf16.gmra.mxu0 %v677
  %v1329 = vpop.f32.mrf.mxu0
  %v1330 = vadd.f32 0.0, %v1329
  %v1331 = vpop.f32.mrf.mxu0
  %v1332 = vadd.f32 0.0, %v1331
  %1333 = vmatmul.bf16.gmra.mxu0 %v679
  %v1334 = vpop.f32.mrf.mxu0
  %v1335 = vadd.f32 0.0, %v1334
  %v1336 = vpop.f32.mrf.mxu0
  %v1337 = vadd.f32 0.0, %v1336
  %1338 = vmatmul.bf16.gmra.mxu0 %v681
  %v1339 = vpop.f32.mrf.mxu0
  %v1340 = vadd.f32 0.0, %v1339
  %v1341 = vpop.f32.mrf.mxu0
  %v1342 = vadd.f32 0.0, %v1341
  %1343 = vmatmul.bf16.gmra.mxu0 %v683
  %v1344 = vpop.f32.mrf.mxu0
  %v1345 = vadd.f32 0.0, %v1344
  %v1346 = vpop.f32.mrf.mxu0
  %v1347 = vadd.f32 0.0, %v1346
  %1348 = vmatmul.bf16.gmra.mxu0 %v685
  %v1349 = vpop.f32.mrf.mxu0
  %v1350 = vadd.f32 0.0, %v1349
  %v1351 = vpop.f32.mrf.mxu0
  %v1352 = vadd.f32 0.0, %v1351
  %1353 = vmatmul.bf16.gmra.mxu0 %v687
  %v1354 = vpop.f32.mrf.mxu0
  %v1355 = vadd.f32 0.0, %v1354
  %v1356 = vpop.f32.mrf.mxu0
  %v1357 = vadd.f32 0.0, %v1356
  %1358 = vmatmul.bf16.gmra.mxu0 %v689
  %v1359 = vpop.f32.mrf.mxu0
  %v1360 = vadd.f32 0.0, %v1359
  %v1361 = vpop.f32.mrf.mxu0
  %v1362 = vadd.f32 0.0, %v1361
  %1363 = vmatmul.bf16.gmra.mxu0 %v691
  %v1364 = vpop.f32.mrf.mxu0
  %v1365 = vadd.f32 0.0, %v1364
  %v1366 = vpop.f32.mrf.mxu0
  %v1367 = vadd.f32 0.0, %v1366
  %1368 = vmatmul.bf16.gmra.mxu0 %v693
  %v1369 = vpop.f32.mrf.mxu0
  %v1370 = vadd.f32 0.0, %v1369
  %v1371 = vpop.f32.mrf.mxu0
  %v1372 = vadd.f32 0.0, %v1371
  %1373 = vmatmul.bf16.gmra.mxu0 %v695
  %v1374 = vpop.f32.mrf.mxu0
  %v1375 = vadd.f32 0.0, %v1374
  %v1376 = vpop.f32.mrf.mxu0
  %v1377 = vadd.f32 0.0, %v1376
  %1378 = vmatmul.bf16.gmra.mxu0 %v697
  %v1379 = vpop.f32.mrf.mxu0
  %v1380 = vadd.f32 0.0, %v1379
  %v1381 = vpop.f32.mrf.mxu0
  %v1382 = vadd.f32 0.0, %v1381
  %1383 = vdwg.mxu0
  %1384 = vmatpush.bf16.msra.mxu0 %v1053
  %1385 = vmatpush.bf16.msra.mxu0 %v841
  %1386 = vmatpush.bf16.msra.mxu0 %v840
  %1387 = vmatpush.bf16.msra.mxu0 %v839
  %1388 = vmatpush.bf16.msra.mxu0 %v838
  %1389 = vmatpush.bf16.msra.mxu0 %v837
  %1390 = vmatpush.bf16.msra.mxu0 %v836
  %1391 = vmatpush.bf16.msra.mxu0 %v835
  %1392 = vmatmul.bf16.gmra.mxu0 %v860
  %v1393 = vpop.f32.mrf.mxu0
  %v1394 = vadd.f32 %v1065, %v1393
  %v1395 = vpop.f32.mrf.mxu0
  %v1396 = vadd.f32 %v1067, %v1395
  %1397 = vmatmul.bf16.gmra.mxu0 %v863
  %v1398 = vpop.f32.mrf.mxu0
  %v1399 = vadd.f32 %v1070, %v1398
  %v1400 = vpop.f32.mrf.mxu0
  %v1401 = vadd.f32 %v1072, %v1400
  %1402 = vmatmul.bf16.gmra.mxu0 %v866
  %v1403 = vpop.f32.mrf.mxu0
  %v1404 = vadd.f32 %v1075, %v1403
  %v1405 = vpop.f32.mrf.mxu0
  %v1406 = vadd.f32 %v1077, %v1405
  %1407 = vmatmul.bf16.gmra.mxu0 %v869
  %v1408 = vpop.f32.mrf.mxu0
  %v1409 = vadd.f32 %v1080, %v1408
  %v1410 = vpop.f32.mrf.mxu0
  %v1411 = vadd.f32 %v1082, %v1410
  %1412 = vmatmul.bf16.gmra.mxu0 %v872
  %v1413 = vpop.f32.mrf.mxu0
  %v1414 = vadd.f32 %v1085, %v1413
  %v1415 = vpop.f32.mrf.mxu0
  %v1416 = vadd.f32 %v1087, %v1415
  %1417 = vmatmul.bf16.gmra.mxu0 %v875
  %v1418 = vpop.f32.mrf.mxu0
  %v1419 = vadd.f32 %v1090, %v1418
  %v1420 = vpop.f32.mrf.mxu0
  %v1421 = vadd.f32 %v1092, %v1420
  %1422 = vmatmul.bf16.gmra.mxu0 %v878
  %v1423 = vpop.f32.mrf.mxu0
  %v1424 = vadd.f32 %v1095, %v1423
  %v1425 = vpop.f32.mrf.mxu0
  %v1426 = vadd.f32 %v1097, %v1425
  %1427 = vmatmul.bf16.gmra.mxu0 %v881
  %v1428 = vpop.f32.mrf.mxu0
  %v1429 = vadd.f32 %v1100, %v1428
  %v1430 = vpop.f32.mrf.mxu0
  %v1431 = vadd.f32 %v1102, %v1430
  %1432 = vmatmul.bf16.gmra.mxu0 %v884
  %v1433 = vpop.f32.mrf.mxu0
  %v1434 = vadd.f32 %v1105, %v1433
  %v1435 = vpop.f32.mrf.mxu0
  %v1436 = vadd.f32 %v1107, %v1435
  %1437 = vmatmul.bf16.gmra.mxu0 %v887
  %v1438 = vpop.f32.mrf.mxu0
  %v1439 = vadd.f32 %v1110, %v1438
  %v1440 = vpop.f32.mrf.mxu0
  %v1441 = vadd.f32 %v1112, %v1440
  %1442 = vmatmul.bf16.gmra.mxu0 %v890
  %v1443 = vpop.f32.mrf.mxu0
  %v1444 = vadd.f32 %v1115, %v1443
  %v1445 = vpop.f32.mrf.mxu0
  %v1446 = vadd.f32 %v1117, %v1445
  %1447 = vmatmul.bf16.gmra.mxu0 %v893
  %v1448 = vpop.f32.mrf.mxu0
  %v1449 = vadd.f32 %v1120, %v1448
  %v1450 = vpop.f32.mrf.mxu0
  %v1451 = vadd.f32 %v1122, %v1450
  %1452 = vmatmul.bf16.gmra.mxu0 %v896
  %v1453 = vpop.f32.mrf.mxu0
  %v1454 = vadd.f32 %v1125, %v1453
  %v1455 = vpop.f32.mrf.mxu0
  %v1456 = vadd.f32 %v1127, %v1455
  %1457 = vmatmul.bf16.gmra.mxu0 %v899
  %v1458 = vpop.f32.mrf.mxu0
  %v1459 = vadd.f32 %v1130, %v1458
  %v1460 = vpop.f32.mrf.mxu0
  %v1461 = vadd.f32 %v1132, %v1460
  %1462 = vmatmul.bf16.gmra.mxu0 %v902
  %v1463 = vpop.f32.mrf.mxu0
  %v1464 = vadd.f32 %v1135, %v1463
  %v1465 = vpop.f32.mrf.mxu0
  %v1466 = vadd.f32 %v1137, %v1465
  %1467 = vmatmul.bf16.gmra.mxu0 %v905
  %v1468 = vpop.f32.mrf.mxu0
  %v1469 = vadd.f32 %v1140, %v1468
  %v1470 = vpop.f32.mrf.mxu0
  %v1471 = vadd.f32 %v1142, %v1470
  %1472 = vmatmul.bf16.gmra.mxu0 %v908
  %v1473 = vpop.f32.mrf.mxu0
  %v1474 = vadd.f32 %v1145, %v1473
  %v1475 = vpop.f32.mrf.mxu0
  %v1476 = vadd.f32 %v1147, %v1475
  %1477 = vmatmul.bf16.gmra.mxu0 %v911
  %v1478 = vpop.f32.mrf.mxu0
  %v1479 = vadd.f32 %v1150, %v1478
  %v1480 = vpop.f32.mrf.mxu0
  %v1481 = vadd.f32 %v1152, %v1480
  %1482 = vmatmul.bf16.gmra.mxu0 %v914
  %v1483 = vpop.f32.mrf.mxu0
  %v1484 = vadd.f32 %v1155, %v1483
  %v1485 = vpop.f32.mrf.mxu0
  %v1486 = vadd.f32 %v1157, %v1485
  %1487 = vmatmul.bf16.gmra.mxu0 %v917
  %v1488 = vpop.f32.mrf.mxu0
  %v1489 = vadd.f32 %v1160, %v1488
  %v1490 = vpop.f32.mrf.mxu0
  %v1491 = vadd.f32 %v1162, %v1490
  %1492 = vmatmul.bf16.gmra.mxu0 %v920
  %v1493 = vpop.f32.mrf.mxu0
  %v1494 = vadd.f32 %v1165, %v1493
  %v1495 = vpop.f32.mrf.mxu0
  %v1496 = vadd.f32 %v1167, %v1495
  %1497 = vmatmul.bf16.gmra.mxu0 %v923
  %v1498 = vpop.f32.mrf.mxu0
  %v1499 = vadd.f32 %v1170, %v1498
  %v1500 = vpop.f32.mrf.mxu0
  %v1501 = vadd.f32 %v1172, %v1500
  %1502 = vmatmul.bf16.gmra.mxu0 %v926
  %v1503 = vpop.f32.mrf.mxu0
  %v1504 = vadd.f32 %v1175, %v1503
  %v1505 = vpop.f32.mrf.mxu0
  %v1506 = vadd.f32 %v1177, %v1505
  %1507 = vmatmul.bf16.gmra.mxu0 %v929
  %v1508 = vpop.f32.mrf.mxu0
  %v1509 = vadd.f32 %v1180, %v1508
  %v1510 = vpop.f32.mrf.mxu0
  %v1511 = vadd.f32 %v1182, %v1510
  %1512 = vmatmul.bf16.gmra.mxu0 %v932
  %v1513 = vpop.f32.mrf.mxu0
  %v1514 = vadd.f32 %v1185, %v1513
  %v1515 = vpop.f32.mrf.mxu0
  %v1516 = vadd.f32 %v1187, %v1515
  %1517 = vmatmul.bf16.gmra.mxu0 %v935
  %v1518 = vpop.f32.mrf.mxu0
  %v1519 = vadd.f32 %v1190, %v1518
  %v1520 = vpop.f32.mrf.mxu0
  %v1521 = vadd.f32 %v1192, %v1520
  %1522 = vmatmul.bf16.gmra.mxu0 %v938
  %v1523 = vpop.f32.mrf.mxu0
  %v1524 = vadd.f32 %v1195, %v1523
  %v1525 = vpop.f32.mrf.mxu0
  %v1526 = vadd.f32 %v1197, %v1525
  %1527 = vmatmul.bf16.gmra.mxu0 %v941
  %v1528 = vpop.f32.mrf.mxu0
  %v1529 = vadd.f32 %v1200, %v1528
  %v1530 = vpop.f32.mrf.mxu0
  %v1531 = vadd.f32 %v1202, %v1530
  %1532 = vmatmul.bf16.gmra.mxu0 %v944
  %v1533 = vpop.f32.mrf.mxu0
  %v1534 = vadd.f32 %v1205, %v1533
  %v1535 = vpop.f32.mrf.mxu0
  %v1536 = vadd.f32 %v1207, %v1535
  %1537 = vmatmul.bf16.gmra.mxu0 %v947
  %v1538 = vpop.f32.mrf.mxu0
  %v1539 = vadd.f32 %v1210, %v1538
  %v1540 = vpop.f32.mrf.mxu0
  %v1541 = vadd.f32 %v1212, %v1540
  %1542 = vmatmul.bf16.gmra.mxu0 %v950
  %v1543 = vpop.f32.mrf.mxu0
  %v1544 = vadd.f32 %v1215, %v1543
  %v1545 = vpop.f32.mrf.mxu0
  %v1546 = vadd.f32 %v1217, %v1545
  %1547 = vmatmul.bf16.gmra.mxu0 %v953
  %v1548 = vpop.f32.mrf.mxu0
  %v1549 = vadd.f32 %v1220, %v1548
  %v1550 = vpop.f32.mrf.mxu0
  %v1551 = vadd.f32 %v1222, %v1550
  %1552 = vmatmul.bf16.gmra.mxu0 %v956
  %v1553 = vpop.f32.mrf.mxu0
  %v1554 = vadd.f32 %v1225, %v1553
  %v1555 = vpop.f32.mrf.mxu0
  %v1556 = vadd.f32 %v1227, %v1555
  %1557 = vmatmul.bf16.gmra.mxu0 %v959
  %v1558 = vpop.f32.mrf.mxu0
  %v1559 = vadd.f32 %v1230, %v1558
  %v1560 = vpop.f32.mrf.mxu0
  %v1561 = vadd.f32 %v1232, %v1560
  %1562 = vmatmul.bf16.gmra.mxu0 %v962
  %v1563 = vpop.f32.mrf.mxu0
  %v1564 = vadd.f32 %v1235, %v1563
  %v1565 = vpop.f32.mrf.mxu0
  %v1566 = vadd.f32 %v1237, %v1565
  %1567 = vmatmul.bf16.gmra.mxu0 %v965
  %v1568 = vpop.f32.mrf.mxu0
  %v1569 = vadd.f32 %v1240, %v1568
  %v1570 = vpop.f32.mrf.mxu0
  %v1571 = vadd.f32 %v1242, %v1570
  %1572 = vmatmul.bf16.gmra.mxu0 %v968
  %v1573 = vpop.f32.mrf.mxu0
  %v1574 = vadd.f32 %v1245, %v1573
  %v1575 = vpop.f32.mrf.mxu0
  %v1576 = vadd.f32 %v1247, %v1575
  %1577 = vmatmul.bf16.gmra.mxu0 %v971
  %v1578 = vpop.f32.mrf.mxu0
  %v1579 = vadd.f32 %v1250, %v1578
  %v1580 = vpop.f32.mrf.mxu0
  %v1581 = vadd.f32 %v1252, %v1580
  %1582 = vmatmul.bf16.gmra.mxu0 %v974
  %v1583 = vpop.f32.mrf.mxu0
  %v1584 = vadd.f32 %v1255, %v1583
  %v1585 = vpop.f32.mrf.mxu0
  %v1586 = vadd.f32 %v1257, %v1585
  %1587 = vmatmul.bf16.gmra.mxu0 %v977
  %v1588 = vpop.f32.mrf.mxu0
  %v1589 = vadd.f32 %v1260, %v1588
  %v1590 = vpop.f32.mrf.mxu0
  %v1591 = vadd.f32 %v1262, %v1590
  %1592 = vmatmul.bf16.gmra.mxu0 %v980
  %v1593 = vpop.f32.mrf.mxu0
  %v1594 = vadd.f32 %v1265, %v1593
  %v1595 = vpop.f32.mrf.mxu0
  %v1596 = vadd.f32 %v1267, %v1595
  %1597 = vmatmul.bf16.gmra.mxu0 %v983
  %v1598 = vpop.f32.mrf.mxu0
  %v1599 = vadd.f32 %v1270, %v1598
  %v1600 = vpop.f32.mrf.mxu0
  %v1601 = vadd.f32 %v1272, %v1600
  %1602 = vmatmul.bf16.gmra.mxu0 %v986
  %v1603 = vpop.f32.mrf.mxu0
  %v1604 = vadd.f32 %v1275, %v1603
  %v1605 = vpop.f32.mrf.mxu0
  %v1606 = vadd.f32 %v1277, %v1605
  %1607 = vmatmul.bf16.gmra.mxu0 %v989
  %v1608 = vpop.f32.mrf.mxu0
  %v1609 = vadd.f32 %v1280, %v1608
  %v1610 = vpop.f32.mrf.mxu0
  %v1611 = vadd.f32 %v1282, %v1610
  %1612 = vmatmul.bf16.gmra.mxu0 %v992
  %v1613 = vpop.f32.mrf.mxu0
  %v1614 = vadd.f32 %v1285, %v1613
  %v1615 = vpop.f32.mrf.mxu0
  %v1616 = vadd.f32 %v1287, %v1615
  %1617 = vmatmul.bf16.gmra.mxu0 %v995
  %v1618 = vpop.f32.mrf.mxu0
  %v1619 = vadd.f32 %v1290, %v1618
  %v1620 = vpop.f32.mrf.mxu0
  %v1621 = vadd.f32 %v1292, %v1620
  %1622 = vmatmul.bf16.gmra.mxu0 %v998
  %v1623 = vpop.f32.mrf.mxu0
  %v1624 = vadd.f32 %v1295, %v1623
  %v1625 = vpop.f32.mrf.mxu0
  %v1626 = vadd.f32 %v1297, %v1625
  %1627 = vmatmul.bf16.gmra.mxu0 %v1001
  %v1628 = vpop.f32.mrf.mxu0
  %v1629 = vadd.f32 %v1300, %v1628
  %v1630 = vpop.f32.mrf.mxu0
  %v1631 = vadd.f32 %v1302, %v1630
  %1632 = vmatmul.bf16.gmra.mxu0 %v1004
  %v1633 = vpop.f32.mrf.mxu0
  %v1634 = vadd.f32 %v1305, %v1633
  %v1635 = vpop.f32.mrf.mxu0
  %v1636 = vadd.f32 %v1307, %v1635
  %1637 = vmatmul.bf16.gmra.mxu0 %v1007
  %v1638 = vpop.f32.mrf.mxu0
  %v1639 = vadd.f32 %v1310, %v1638
  %v1640 = vpop.f32.mrf.mxu0
  %v1641 = vadd.f32 %v1312, %v1640
  %1642 = vmatmul.bf16.gmra.mxu0 %v1010
  %v1643 = vpop.f32.mrf.mxu0
  %v1644 = vadd.f32 %v1315, %v1643
  %v1645 = vpop.f32.mrf.mxu0
  %v1646 = vadd.f32 %v1317, %v1645
  %1647 = vmatmul.bf16.gmra.mxu0 %v1013
  %v1648 = vpop.f32.mrf.mxu0
  %v1649 = vadd.f32 %v1320, %v1648
  %v1650 = vpop.f32.mrf.mxu0
  %v1651 = vadd.f32 %v1322, %v1650
  %1652 = vmatmul.bf16.gmra.mxu0 %v1016
  %v1653 = vpop.f32.mrf.mxu0
  %v1654 = vadd.f32 %v1325, %v1653
  %v1655 = vpop.f32.mrf.mxu0
  %v1656 = vadd.f32 %v1327, %v1655
  %1657 = vmatmul.bf16.gmra.mxu0 %v1019
  %v1658 = vpop.f32.mrf.mxu0
  %v1659 = vadd.f32 %v1330, %v1658
  %v1660 = vpop.f32.mrf.mxu0
  %v1661 = vadd.f32 %v1332, %v1660
  %1662 = vmatmul.bf16.gmra.mxu0 %v1022
  %v1663 = vpop.f32.mrf.mxu0
  %v1664 = vadd.f32 %v1335, %v1663
  %v1665 = vpop.f32.mrf.mxu0
  %v1666 = vadd.f32 %v1337, %v1665
  %1667 = vmatmul.bf16.gmra.mxu0 %v1025
  %v1668 = vpop.f32.mrf.mxu0
  %v1669 = vadd.f32 %v1340, %v1668
  %v1670 = vpop.f32.mrf.mxu0
  %v1671 = vadd.f32 %v1342, %v1670
  %1672 = vmatmul.bf16.gmra.mxu0 %v1028
  %v1673 = vpop.f32.mrf.mxu0
  %v1674 = vadd.f32 %v1345, %v1673
  %v1675 = vpop.f32.mrf.mxu0
  %v1676 = vadd.f32 %v1347, %v1675
  %1677 = vmatmul.bf16.gmra.mxu0 %v1031
  %v1678 = vpop.f32.mrf.mxu0
  %v1679 = vadd.f32 %v1350, %v1678
  %v1680 = vpop.f32.mrf.mxu0
  %v1681 = vadd.f32 %v1352, %v1680
  %1682 = vmatmul.bf16.gmra.mxu0 %v1034
  %v1683 = vpop.f32.mrf.mxu0
  %v1684 = vadd.f32 %v1355, %v1683
  %v1685 = vpop.f32.mrf.mxu0
  %v1686 = vadd.f32 %v1357, %v1685
  %1687 = vmatmul.bf16.gmra.mxu0 %v1037
  %v1688 = vpop.f32.mrf.mxu0
  %v1689 = vadd.f32 %v1360, %v1688
  %v1690 = vpop.f32.mrf.mxu0
  %v1691 = vadd.f32 %v1362, %v1690
  %1692 = vmatmul.bf16.gmra.mxu0 %v1040
  %v1693 = vpop.f32.mrf.mxu0
  %v1694 = vadd.f32 %v1365, %v1693
  %v1695 = vpop.f32.mrf.mxu0
  %v1696 = vadd.f32 %v1367, %v1695
  %1697 = vmatmul.bf16.gmra.mxu0 %v1043
  %v1698 = vpop.f32.mrf.mxu0
  %v1699 = vadd.f32 %v1370, %v1698
  %v1700 = vpop.f32.mrf.mxu0
  %v1701 = vadd.f32 %v1372, %v1700
  %1702 = vmatmul.bf16.gmra.mxu0 %v1046
  %v1703 = vpop.f32.mrf.mxu0
  %v1704 = vadd.f32 %v1375, %v1703
  %v1705 = vpop.f32.mrf.mxu0
  %v1706 = vadd.f32 %v1377, %v1705
  %1707 = vmatmul.bf16.gmra.mxu0 %v1049
  %v1708 = vpop.f32.mrf.mxu0
  %v1709 = vadd.f32 %v1380, %v1708
  %v1710 = vpop.f32.mrf.mxu0
  %v1711 = vadd.f32 %v1382, %v1710
  %1712 = vdwg.mxu0
  %v1713 = vmax.f32 %v1394, %v1474
  %v1714 = vmax.f32 %v1396, %v1476
  %v1715 = vmax.f32 %v1399, %v1479
  %v1716 = vmax.f32 %v1401, %v1481
  %v1717 = vmax.f32 %v1404, %v1484
  %v1718 = vmax.f32 %v1406, %v1486
  %v1719 = vmax.f32 %v1409, %v1489
  %v1720 = vmax.f32 %v1411, %v1491
  %v1721 = vmax.f32 %v1414, %v1494
  %v1722 = vmax.f32 %v1416, %v1496
  %v1723 = vmax.f32 %v1419, %v1499
  %v1724 = vmax.f32 %v1421, %v1501
  %v1725 = vmax.f32 %v1424, %v1504
  %v1726 = vmax.f32 %v1426, %v1506
  %v1727 = vmax.f32 %v1429, %v1509
  %v1728 = vmax.f32 %v1431, %v1511
  %v1729 = vmax.f32 %v1434, %v1514
  %v1730 = vmax.f32 %v1436, %v1516
  %v1731 = vmax.f32 %v1439, %v1519
  %v1732 = vmax.f32 %v1441, %v1521
  %v1733 = vmax.f32 %v1444, %v1524
  %v1734 = vmax.f32 %v1446, %v1526
  %v1735 = vmax.f32 %v1449, %v1529
  %v1736 = vmax.f32 %v1451, %v1531
  %v1737 = vmax.f32 %v1454, %v1534
  %v1738 = vmax.f32 %v1456, %v1536
  %v1739 = vmax.f32 %v1459, %v1539
  %v1740 = vmax.f32 %v1461, %v1541
  %v1741 = vmax.f32 %v1464, %v1544
  %v1742 = vmax.f32 %v1466, %v1546
  %v1743 = vmax.f32 %v1469, %v1549
  %v1744 = vmax.f32 %v1471, %v1551
  %v1745 = vmax.f32 %v1554, %v1634
  %v1746 = vmax.f32 %v1556, %v1636
  %v1747 = vmax.f32 %v1559, %v1639
  %v1748 = vmax.f32 %v1561, %v1641
  %v1749 = vmax.f32 %v1564, %v1644
  %v1750 = vmax.f32 %v1566, %v1646
  %v1751 = vmax.f32 %v1569, %v1649
  %v1752 = vmax.f32 %v1571, %v1651
  %v1753 = vmax.f32 %v1574, %v1654
  %v1754 = vmax.f32 %v1576, %v1656
  %v1755 = vmax.f32 %v1579, %v1659
  %v1756 = vmax.f32 %v1581, %v1661
  %v1757 = vmax.f32 %v1584, %v1664
  %v1758 = vmax.f32 %v1586, %v1666
  %v1759 = vmax.f32 %v1589, %v1669
  %v1760 = vmax.f32 %v1591, %v1671
  %v1761 = vmax.f32 %v1594, %v1674
  %v1762 = vmax.f32 %v1596, %v1676
  %v1763 = vmax.f32 %v1599, %v1679
  %v1764 = vmax.f32 %v1601, %v1681
  %v1765 = vmax.f32 %v1604, %v1684
  %v1766 = vmax.f32 %v1606, %v1686
  %v1767 = vmax.f32 %v1609, %v1689
  %v1768 = vmax.f32 %v1611, %v1691
  %v1769 = vmax.f32 %v1614, %v1694
  %v1770 = vmax.f32 %v1616, %v1696
  %v1771 = vmax.f32 %v1619, %v1699
  %v1772 = vmax.f32 %v1621, %v1701
  %v1773 = vmax.f32 %v1624, %v1704
  %v1774 = vmax.f32 %v1626, %v1706
  %v1775 = vmax.f32 %v1629, %v1709
  %v1776 = vmax.f32 %v1631, %v1711
  %v1777 = vmax.f32 %v1713, %v1745
  %v1778 = vmax.f32 %v1714, %v1746
  %v1779 = vmax.f32 %v1715, %v1747
  %v1780 = vmax.f32 %v1716, %v1748
  %v1781 = vmax.f32 %v1717, %v1749
  %v1782 = vmax.f32 %v1718, %v1750
  %v1783 = vmax.f32 %v1719, %v1751
  %v1784 = vmax.f32 %v1720, %v1752
  %v1785 = vmax.f32 %v1721, %v1753
  %v1786 = vmax.f32 %v1722, %v1754
  %v1787 = vmax.f32 %v1723, %v1755
  %v1788 = vmax.f32 %v1724, %v1756
  %v1789 = vmax.f32 %v1725, %v1757
  %v1790 = vmax.f32 %v1726, %v1758
  %v1791 = vmax.f32 %v1727, %v1759
  %v1792 = vmax.f32 %v1728, %v1760
  %v1793 = vmax.f32 %v1729, %v1761
  %v1794 = vmax.f32 %v1730, %v1762
  %v1795 = vmax.f32 %v1731, %v1763
  %v1796 = vmax.f32 %v1732, %v1764
  %v1797 = vmax.f32 %v1733, %v1765
  %v1798 = vmax.f32 %v1734, %v1766
  %v1799 = vmax.f32 %v1735, %v1767
  %v1800 = vmax.f32 %v1736, %v1768
  %v1801 = vmax.f32 %v1737, %v1769
  %v1802 = vmax.f32 %v1738, %v1770
  %v1803 = vmax.f32 %v1739, %v1771
  %v1804 = vmax.f32 %v1740, %v1772
  %v1805 = vmax.f32 %v1741, %v1773
  %v1806 = vmax.f32 %v1742, %v1774
  %v1807 = vmax.f32 %v1743, %v1775
  %v1808 = vmax.f32 %v1744, %v1776
  %v1809 = vld [vmem:[%s2] sm:$0x1]
  %v1811 = vperm.slane %v1809, 0
  %v1813 = vadd.f32 %v1777, %v1811
  %v1814 = vadd.f32 %v1778, %v1811
  %v1815 = vadd.f32 %v1779, %v1811
  %v1816 = vadd.f32 %v1780, %v1811
  %v1817 = vadd.f32 %v1781, %v1811
  %v1818 = vadd.f32 %v1782, %v1811
  %v1819 = vadd.f32 %v1783, %v1811
  %v1820 = vadd.f32 %v1784, %v1811
  %v1821 = vadd.f32 %v1785, %v1811
  %v1822 = vadd.f32 %v1786, %v1811
  %v1823 = vadd.f32 %v1787, %v1811
  %v1824 = vadd.f32 %v1788, %v1811
  %v1825 = vadd.f32 %v1789, %v1811
  %v1826 = vadd.f32 %v1790, %v1811
  %v1827 = vadd.f32 %v1791, %v1811
  %v1828 = vadd.f32 %v1792, %v1811
  %v1829 = vadd.f32 %v1793, %v1811
  %v1830 = vadd.f32 %v1794, %v1811
  %v1831 = vadd.f32 %v1795, %v1811
  %v1832 = vadd.f32 %v1796, %v1811
  %v1833 = vadd.f32 %v1797, %v1811
  %v1834 = vadd.f32 %v1798, %v1811
  %v1835 = vadd.f32 %v1799, %v1811
  %v1836 = vadd.f32 %v1800, %v1811
  %v1837 = vadd.f32 %v1801, %v1811
  %v1838 = vadd.f32 %v1802, %v1811
  %v1839 = vadd.f32 %v1803, %v1811
  %v1840 = vadd.f32 %v1804, %v1811
  %v1841 = vadd.f32 %v1805, %v1811
  %v1842 = vadd.f32 %v1806, %v1811
  %v1843 = vadd.f32 %v1807, %v1811
  %v1844 = vadd.f32 %v1808, %v1811
  %v1845 = vmax.f32 %v1813, 0.0
  %v1846 = vmax.f32 %v1814, 0.0
  %v1847 = vmax.f32 %v1815, 0.0
  %v1848 = vmax.f32 %v1816, 0.0
  %v1849 = vmax.f32 %v1817, 0.0
  %v1850 = vmax.f32 %v1818, 0.0
  %v1851 = vmax.f32 %v1819, 0.0
  %v1852 = vmax.f32 %v1820, 0.0
  %v1853 = vmax.f32 %v1821, 0.0
  %v1854 = vmax.f32 %v1822, 0.0
  %v1855 = vmax.f32 %v1823, 0.0
  %v1856 = vmax.f32 %v1824, 0.0
  %v1857 = vmax.f32 %v1825, 0.0
  %v1858 = vmax.f32 %v1826, 0.0
  %v1859 = vmax.f32 %v1827, 0.0
  %v1860 = vmax.f32 %v1828, 0.0
  %v1861 = vmax.f32 %v1829, 0.0
  %v1862 = vmax.f32 %v1830, 0.0
  %v1863 = vmax.f32 %v1831, 0.0
  %v1864 = vmax.f32 %v1832, 0.0
  %v1865 = vmax.f32 %v1833, 0.0
  %v1866 = vmax.f32 %v1834, 0.0
  %v1867 = vmax.f32 %v1835, 0.0
  %v1868 = vmax.f32 %v1836, 0.0
  %v1869 = vmax.f32 %v1837, 0.0
  %v1870 = vmax.f32 %v1838, 0.0
  %v1871 = vmax.f32 %v1839, 0.0
  %v1872 = vmax.f32 %v1840, 0.0
  %v1873 = vmax.f32 %v1841, 0.0
  %v1874 = vmax.f32 %v1842, 0.0
  %v1875 = vmax.f32 %v1843, 0.0
  %v1876 = vmax.f32 %v1844, 0.0
  %v1877 = vpack.c.bf16 %v1845, %v1845
  %v1878 = vpack.c.bf16 %v1846, %v1846
  %v1879 = vpack.c.bf16 %v1847, %v1847
  %v1880 = vpack.c.bf16 %v1848, %v1848
  %v1881 = vpack.c.bf16 %v1849, %v1849
  %v1882 = vpack.c.bf16 %v1850, %v1850
  %v1883 = vpack.c.bf16 %v1851, %v1851
  %v1884 = vpack.c.bf16 %v1852, %v1852
  %v1885 = vpack.c.bf16 %v1853, %v1853
  %v1886 = vpack.c.bf16 %v1854, %v1854
  %v1887 = vpack.c.bf16 %v1855, %v1855
  %v1888 = vpack.c.bf16 %v1856, %v1856
  %v1889 = vpack.c.bf16 %v1857, %v1857
  %v1890 = vpack.c.bf16 %v1858, %v1858
  %v1891 = vpack.c.bf16 %v1859, %v1859
  %v1892 = vpack.c.bf16 %v1860, %v1860
  %v1893 = vpack.c.bf16 %v1861, %v1861
  %v1894 = vpack.c.bf16 %v1862, %v1862
  %v1895 = vpack.c.bf16 %v1863, %v1863
  %v1896 = vpack.c.bf16 %v1864, %v1864
  %v1897 = vpack.c.bf16 %v1865, %v1865
  %v1898 = vpack.c.bf16 %v1866, %v1866
  %v1899 = vpack.c.bf16 %v1867, %v1867
  %v1900 = vpack.c.bf16 %v1868, %v1868
  %v1901 = vpack.c.bf16 %v1869, %v1869
  %v1902 = vpack.c.bf16 %v1870, %v1870
  %v1903 = vpack.c.bf16 %v1871, %v1871
  %v1904 = vpack.c.bf16 %v1872, %v1872
  %v1905 = vpack.c.bf16 %v1873, %v1873
  %v1906 = vpack.c.bf16 %v1874, %v1874
  %v1907 = vpack.c.bf16 %v1875, %v1875
  %v1908 = vpack.c.bf16 %v1876, %v1876
  %v1909 = vld [vmem:[%s3] sm:$0xf]
  %v1910 = vld [vmem:[%s3 + $0x4] sm:$0xf]
  %v1911 = vld [vmem:[%s3 + $0x8] sm:$0xf]
  %v1912 = vld [vmem:[%s3 + $0xc] sm:$0xf]
  %v1913 = vld [vmem:[%s3 + $0x10] sm:$0xf]
  %v1914 = vld [vmem:[%s3 + $0x14] sm:$0xf]
  %v1915 = vld [vmem:[%s3 + $0x18] sm:$0xf]
  %v1916 = vld [vmem:[%s3 + $0x1c] sm:$0xf]
  %v1917 = vld [vmem:[%s3 + $0x20] sm:$0xf]
  %v1918 = vld [vmem:[%s3 + $0x24] sm:$0xf]
  %v1919 = vld [vmem:[%s3 + $0x28] sm:$0xf]
  %v1920 = vld [vmem:[%s3 + $0x2c] sm:$0xf]
  %v1921 = vld [vmem:[%s3 + $0x30] sm:$0xf]
  %v1922 = vld [vmem:[%s3 + $0x34] sm:$0xf]
  %v1923 = vld [vmem:[%s3 + $0x38] sm:$0xf]
  %v1924 = vld [vmem:[%s3 + $0x3c] sm:$0xf]
  %s1925 = scalar_lea.vmem %s3, 64
  %v1926 = vld [vmem:[%s1925] sm:$0xf]
  %v1927 = vld [vmem:[%s1925 + $0x4] sm:$0xf]
  %v1928 = vld [vmem:[%s1925 + $0x8] sm:$0xf]
  %v1929 = vld [vmem:[%s1925 + $0xc] sm:$0xf]
  %v1930 = vld [vmem:[%s1925 + $0x10] sm:$0xf]
  %v1931 = vld [vmem:[%s1925 + $0x14] sm:$0xf]
  %v1932 = vld [vmem:[%s1925 + $0x18] sm:$0xf]
  %v1933 = vld [vmem:[%s1925 + $0x1c] sm:$0xf]
  %v1934 = vld [vmem:[%s1925 + $0x20] sm:$0xf]
  %v1935 = vld [vmem:[%s1925 + $0x24] sm:$0xf]
  %v1936 = vld [vmem:[%s1925 + $0x28] sm:$0xf]
  %v1937 = vld [vmem:[%s1925 + $0x2c] sm:$0xf]
  %v1938 = vld [vmem:[%s1925 + $0x30] sm:$0xf]
  %v1939 = vld [vmem:[%s1925 + $0x34] sm:$0xf]
  %v1940 = vld [vmem:[%s1925 + $0x38] sm:$0xf]
  %v1941 = vld [vmem:[%s1925 + $0x3c] sm:$0xf]
  %v1944 = vunpack.c.l.b16 %v1879
  %v1945 = vunpack.c.l.b16 %v1880
  %v1946 = vpack.c.b16 %v1945, %v1944
  %v1964 = vunpack.c.l.b16 %v1926
  %v1965 = vunpack.c.l.b16 %v1927
  %v1966 = vunpack.c.l.b16 %v1928
  %v1967 = vunpack.c.l.b16 %v1929
  %v1968 = vunpack.c.l.b16 %v1930
  %v1969 = vunpack.c.l.b16 %v1931
  %v1970 = vunpack.c.l.b16 %v1932
  %v1971 = vunpack.c.l.b16 %v1933
  %v1972 = vunpack.c.l.b16 %v1934
  %v1973 = vunpack.c.l.b16 %v1935
  %v1974 = vunpack.c.l.b16 %v1936
  %v1975 = vunpack.c.l.b16 %v1937
  %v1976 = vunpack.c.l.b16 %v1938
  %v1977 = vunpack.c.l.b16 %v1939
  %v1978 = vunpack.c.l.b16 %v1940
  %v1979 = vunpack.c.l.b16 %v1941
  %v1980 = vpack.c.b16 %v1965, %v1964
  %v1981 = vpack.c.b16 %v1967, %v1966
  %v1982 = vpack.c.b16 %v1969, %v1968
  %v1983 = vpack.c.b16 %v1971, %v1970
  %v1984 = vpack.c.b16 %v1973, %v1972
  %v1985 = vpack.c.b16 %v1975, %v1974
  %v1986 = vpack.c.b16 %v1977, %v1976
  %v1987 = vpack.c.b16 %v1979, %v1978
  %1996 = vmatpush.bf16.msra.mxu0 %v1987
  %1997 = vmatpush.bf16.msra.mxu0 %v1986
  %1998 = vmatpush.bf16.msra.mxu0 %v1985
  %1999 = vmatpush.bf16.msra.mxu0 %v1984
  %2000 = vmatpush.bf16.msra.mxu0 %v1983
  %2001 = vmatpush.bf16.msra.mxu0 %v1982
  %2002 = vmatpush.bf16.msra.mxu0 %v1981
  %2003 = vmatpush.bf16.msra.mxu0 %v1980
  %2004 = vmatmul.bf16.gmra.mxu0 %v1946
  %v2005 = vpop.f32.mrf.mxu0
  %v2006 = vadd.f32 0.0, %v2005
  %v2007 = vpop.f32.mrf.mxu0
  %v2008 = vadd.f32 0.0, %v2007
  %2009 = vdwg.mxu0
  %v2012 = vunpack.c.l.b16 %v1877
  %v2013 = vunpack.c.l.b16 %v1878
  %v2014 = vpack.c.b16 %v2013, %v2012
  %v2032 = vunpack.c.l.b16 %v1909
  %v2033 = vunpack.c.l.b16 %v1910
  %v2034 = vunpack.c.l.b16 %v1911
  %v2035 = vunpack.c.l.b16 %v1912
  %v2036 = vunpack.c.l.b16 %v1913
  %v2037 = vunpack.c.l.b16 %v1914
  %v2038 = vunpack.c.l.b16 %v1915
  %v2039 = vunpack.c.l.b16 %v1916
  %v2040 = vunpack.c.l.b16 %v1917
  %v2041 = vunpack.c.l.b16 %v1918
  %v2042 = vunpack.c.l.b16 %v1919
  %v2043 = vunpack.c.l.b16 %v1920
  %v2044 = vunpack.c.l.b16 %v1921
  %v2045 = vunpack.c.l.b16 %v1922
  %v2046 = vunpack.c.l.b16 %v1923
  %v2047 = vunpack.c.l.b16 %v1924
  %v2048 = vpack.c.b16 %v2033, %v2032
  %v2049 = vpack.c.b16 %v2035, %v2034
  %v2050 = vpack.c.b16 %v2037, %v2036
  %v2051 = vpack.c.b16 %v2039, %v2038
  %v2052 = vpack.c.b16 %v2041, %v2040
  %v2053 = vpack.c.b16 %v2043, %v2042
  %v2054 = vpack.c.b16 %v2045, %v2044
  %v2055 = vpack.c.b16 %v2047, %v2046
  %2064 = vmatpush.bf16.msra.mxu0 %v2055
  %2065 = vmatpush.bf16.msra.mxu0 %v2054
  %2066 = vmatpush.bf16.msra.mxu0 %v2053
  %2067 = vmatpush.bf16.msra.mxu0 %v2052
  %2068 = vmatpush.bf16.msra.mxu0 %v2051
  %2069 = vmatpush.bf16.msra.mxu0 %v2050
  %2070 = vmatpush.bf16.msra.mxu0 %v2049
  %2071 = vmatpush.bf16.msra.mxu0 %v2048
  %2072 = vmatmul.bf16.gmra.mxu0 %v2014
  %v2073 = vpop.f32.mrf.mxu0
  %v2074 = vadd.f32 %v2006, %v2073
  %v2075 = vpop.f32.mrf.mxu0
  %v2076 = vadd.f32 %v2008, %v2075
  %2077 = vdwg.mxu0
  %s2078 = scalar_lea.vmem %s3, 128
  %v2079 = vld [vmem:[%s2078] sm:$0xf]
  %v2080 = vld [vmem:[%s2078 + $0x4] sm:$0xf]
  %v2081 = vld [vmem:[%s2078 + $0x8] sm:$0xf]
  %v2082 = vld [vmem:[%s2078 + $0xc] sm:$0xf]
  %v2083 = vld [vmem:[%s2078 + $0x10] sm:$0xf]
  %v2084 = vld [vmem:[%s2078 + $0x14] sm:$0xf]
  %v2085 = vld [vmem:[%s2078 + $0x18] sm:$0xf]
  %v2086 = vld [vmem:[%s2078 + $0x1c] sm:$0xf]
  %v2087 = vld [vmem:[%s2078 + $0x20] sm:$0xf]
  %v2088 = vld [vmem:[%s2078 + $0x24] sm:$0xf]
  %v2089 = vld [vmem:[%s2078 + $0x28] sm:$0xf]
  %v2090 = vld [vmem:[%s2078 + $0x2c] sm:$0xf]
  %v2091 = vld [vmem:[%s2078 + $0x30] sm:$0xf]
  %v2092 = vld [vmem:[%s2078 + $0x34] sm:$0xf]
  %v2093 = vld [vmem:[%s2078 + $0x38] sm:$0xf]
  %v2094 = vld [vmem:[%s2078 + $0x3c] sm:$0xf]
  %v2097 = vunpack.c.l.b16 %v1881
  %v2098 = vunpack.c.l.b16 %v1882
  %v2099 = vpack.c.b16 %v2098, %v2097
  %v2117 = vunpack.c.l.b16 %v2079
  %v2118 = vunpack.c.l.b16 %v2080
  %v2119 = vunpack.c.l.b16 %v2081
  %v2120 = vunpack.c.l.b16 %v2082
  %v2121 = vunpack.c.l.b16 %v2083
  %v2122 = vunpack.c.l.b16 %v2084
  %v2123 = vunpack.c.l.b16 %v2085
  %v2124 = vunpack.c.l.b16 %v2086
  %v2125 = vunpack.c.l.b16 %v2087
  %v2126 = vunpack.c.l.b16 %v2088
  %v2127 = vunpack.c.l.b16 %v2089
  %v2128 = vunpack.c.l.b16 %v2090
  %v2129 = vunpack.c.l.b16 %v2091
  %v2130 = vunpack.c.l.b16 %v2092
  %v2131 = vunpack.c.l.b16 %v2093
  %v2132 = vunpack.c.l.b16 %v2094
  %v2133 = vpack.c.b16 %v2118, %v2117
  %v2134 = vpack.c.b16 %v2120, %v2119
  %v2135 = vpack.c.b16 %v2122, %v2121
  %v2136 = vpack.c.b16 %v2124, %v2123
  %v2137 = vpack.c.b16 %v2126, %v2125
  %v2138 = vpack.c.b16 %v2128, %v2127
  %v2139 = vpack.c.b16 %v2130, %v2129
  %v2140 = vpack.c.b16 %v2132, %v2131
  %2149 = vmatpush.bf16.msra.mxu0 %v2140
  %2150 = vmatpush.bf16.msra.mxu0 %v2139
  %2151 = vmatpush.bf16.msra.mxu0 %v2138
  %2152 = vmatpush.bf16.msra.mxu0 %v2137
  %2153 = vmatpush.bf16.msra.mxu0 %v2136
  %2154 = vmatpush.bf16.msra.mxu0 %v2135
  %2155 = vmatpush.bf16.msra.mxu0 %v2134
  %2156 = vmatpush.bf16.msra.mxu0 %v2133
  %2157 = vmatmul.bf16.gmra.mxu0 %v2099
  %v2158 = vpop.f32.mrf.mxu0
  %v2159 = vadd.f32 0.0, %v2158
  %v2160 = vpop.f32.mrf.mxu0
  %v2161 = vadd.f32 0.0, %v2160
  %2162 = vdwg.mxu0
  %v2163 = vadd.f32 %v2074, %v2159
  %v2164 = vadd.f32 %v2076, %v2161
  %s2165 = scalar_lea.vmem %s3, 192
  %v2166 = vld [vmem:[%s2165] sm:$0xf]
  %v2167 = vld [vmem:[%s2165 + $0x4] sm:$0xf]
  %v2168 = vld [vmem:[%s2165 + $0x8] sm:$0xf]
  %v2169 = vld [vmem:[%s2165 + $0xc] sm:$0xf]
  %v2170 = vld [vmem:[%s2165 + $0x10] sm:$0xf]
  %v2171 = vld [vmem:[%s2165 + $0x14] sm:$0xf]
  %v2172 = vld [vmem:[%s2165 + $0x18] sm:$0xf]
  %v2173 = vld [vmem:[%s2165 + $0x1c] sm:$0xf]
  %v2174 = vld [vmem:[%s2165 + $0x20] sm:$0xf]
  %v2175 = vld [vmem:[%s2165 + $0x24] sm:$0xf]
  %v2176 = vld [vmem:[%s2165 + $0x28] sm:$0xf]
  %v2177 = vld [vmem:[%s2165 + $0x2c] sm:$0xf]
  %v2178 = vld [vmem:[%s2165 + $0x30] sm:$0xf]
  %v2179 = vld [vmem:[%s2165 + $0x34] sm:$0xf]
  %v2180 = vld [vmem:[%s2165 + $0x38] sm:$0xf]
  %v2181 = vld [vmem:[%s2165 + $0x3c] sm:$0xf]
  %v2184 = vunpack.c.l.b16 %v1883
  %v2185 = vunpack.c.l.b16 %v1884
  %v2186 = vpack.c.b16 %v2185, %v2184
  %v2204 = vunpack.c.l.b16 %v2166
  %v2205 = vunpack.c.l.b16 %v2167
  %v2206 = vunpack.c.l.b16 %v2168
  %v2207 = vunpack.c.l.b16 %v2169
  %v2208 = vunpack.c.l.b16 %v2170
  %v2209 = vunpack.c.l.b16 %v2171
  %v2210 = vunpack.c.l.b16 %v2172
  %v2211 = vunpack.c.l.b16 %v2173
  %v2212 = vunpack.c.l.b16 %v2174
  %v2213 = vunpack.c.l.b16 %v2175
  %v2214 = vunpack.c.l.b16 %v2176
  %v2215 = vunpack.c.l.b16 %v2177
  %v2216 = vunpack.c.l.b16 %v2178
  %v2217 = vunpack.c.l.b16 %v2179
  %v2218 = vunpack.c.l.b16 %v2180
  %v2219 = vunpack.c.l.b16 %v2181
  %v2220 = vpack.c.b16 %v2205, %v2204
  %v2221 = vpack.c.b16 %v2207, %v2206
  %v2222 = vpack.c.b16 %v2209, %v2208
  %v2223 = vpack.c.b16 %v2211, %v2210
  %v2224 = vpack.c.b16 %v2213, %v2212
  %v2225 = vpack.c.b16 %v2215, %v2214
  %v2226 = vpack.c.b16 %v2217, %v2216
  %v2227 = vpack.c.b16 %v2219, %v2218
  %2236 = vmatpush.bf16.msra.mxu0 %v2227
  %2237 = vmatpush.bf16.msra.mxu0 %v2226
  %2238 = vmatpush.bf16.msra.mxu0 %v2225
  %2239 = vmatpush.bf16.msra.mxu0 %v2224
  %2240 = vmatpush.bf16.msra.mxu0 %v2223
  %2241 = vmatpush.bf16.msra.mxu0 %v2222
  %2242 = vmatpush.bf16.msra.mxu0 %v2221
  %2243 = vmatpush.bf16.msra.mxu0 %v2220
  %2244 = vmatmul.bf16.gmra.mxu0 %v2186
  %v2245 = vpop.f32.mrf.mxu0
  %v2246 = vadd.f32 0.0, %v2245
  %v2247 = vpop.f32.mrf.mxu0
  %v2248 = vadd.f32 0.0, %v2247
  %2249 = vdwg.mxu0
  %v2250 = vadd.f32 %v2163, %v2246
  %v2251 = vadd.f32 %v2164, %v2248
  %s2252 = scalar_lea.vmem %s3, 256
  %v2253 = vld [vmem:[%s2252] sm:$0xf]
  %v2254 = vld [vmem:[%s2252 + $0x4] sm:$0xf]
  %v2255 = vld [vmem:[%s2252 + $0x8] sm:$0xf]
  %v2256 = vld [vmem:[%s2252 + $0xc] sm:$0xf]
  %v2257 = vld [vmem:[%s2252 + $0x10] sm:$0xf]
  %v2258 = vld [vmem:[%s2252 + $0x14] sm:$0xf]
  %v2259 = vld [vmem:[%s2252 + $0x18] sm:$0xf]
  %v2260 = vld [vmem:[%s2252 + $0x1c] sm:$0xf]
  %v2261 = vld [vmem:[%s2252 + $0x20] sm:$0xf]
  %v2262 = vld [vmem:[%s2252 + $0x24] sm:$0xf]
  %v2263 = vld [vmem:[%s2252 + $0x28] sm:$0xf]
  %v2264 = vld [vmem:[%s2252 + $0x2c] sm:$0xf]
  %v2265 = vld [vmem:[%s2252 + $0x30] sm:$0xf]
  %v2266 = vld [vmem:[%s2252 + $0x34] sm:$0xf]
  %v2267 = vld [vmem:[%s2252 + $0x38] sm:$0xf]
  %v2268 = vld [vmem:[%s2252 + $0x3c] sm:$0xf]
  %v2271 = vunpack.c.l.b16 %v1885
  %v2272 = vunpack.c.l.b16 %v1886
  %v2273 = vpack.c.b16 %v2272, %v2271
  %v2291 = vunpack.c.l.b16 %v2253
  %v2292 = vunpack.c.l.b16 %v2254
  %v2293 = vunpack.c.l.b16 %v2255
  %v2294 = vunpack.c.l.b16 %v2256
  %v2295 = vunpack.c.l.b16 %v2257
  %v2296 = vunpack.c.l.b16 %v2258
  %v2297 = vunpack.c.l.b16 %v2259
  %v2298 = vunpack.c.l.b16 %v2260
  %v2299 = vunpack.c.l.b16 %v2261
  %v2300 = vunpack.c.l.b16 %v2262
  %v2301 = vunpack.c.l.b16 %v2263
  %v2302 = vunpack.c.l.b16 %v2264
  %v2303 = vunpack.c.l.b16 %v2265
  %v2304 = vunpack.c.l.b16 %v2266
  %v2305 = vunpack.c.l.b16 %v2267
  %v2306 = vunpack.c.l.b16 %v2268
  %v2307 = vpack.c.b16 %v2292, %v2291
  %v2308 = vpack.c.b16 %v2294, %v2293
  %v2309 = vpack.c.b16 %v2296, %v2295
  %v2310 = vpack.c.b16 %v2298, %v2297
  %v2311 = vpack.c.b16 %v2300, %v2299
  %v2312 = vpack.c.b16 %v2302, %v2301
  %v2313 = vpack.c.b16 %v2304, %v2303
  %v2314 = vpack.c.b16 %v2306, %v2305
  %2323 = vmatpush.bf16.msra.mxu0 %v2314
  %2324 = vmatpush.bf16.msra.mxu0 %v2313
  %2325 = vmatpush.bf16.msra.mxu0 %v2312
  %2326 = vmatpush.bf16.msra.mxu0 %v2311
  %2327 = vmatpush.bf16.msra.mxu0 %v2310
  %2328 = vmatpush.bf16.msra.mxu0 %v2309
  %2329 = vmatpush.bf16.msra.mxu0 %v2308
  %2330 = vmatpush.bf16.msra.mxu0 %v2307
  %2331 = vmatmul.bf16.gmra.mxu0 %v2273
  %v2332 = vpop.f32.mrf.mxu0
  %v2333 = vadd.f32 0.0, %v2332
  %v2334 = vpop.f32.mrf.mxu0
  %v2335 = vadd.f32 0.0, %v2334
  %2336 = vdwg.mxu0
  %v2337 = vadd.f32 %v2250, %v2333
  %v2338 = vadd.f32 %v2251, %v2335
  %s2339 = scalar_lea.vmem %s3, 320
  %v2340 = vld [vmem:[%s2339] sm:$0xf]
  %v2341 = vld [vmem:[%s2339 + $0x4] sm:$0xf]
  %v2342 = vld [vmem:[%s2339 + $0x8] sm:$0xf]
  %v2343 = vld [vmem:[%s2339 + $0xc] sm:$0xf]
  %v2344 = vld [vmem:[%s2339 + $0x10] sm:$0xf]
  %v2345 = vld [vmem:[%s2339 + $0x14] sm:$0xf]
  %v2346 = vld [vmem:[%s2339 + $0x18] sm:$0xf]
  %v2347 = vld [vmem:[%s2339 + $0x1c] sm:$0xf]
  %v2348 = vld [vmem:[%s2339 + $0x20] sm:$0xf]
  %v2349 = vld [vmem:[%s2339 + $0x24] sm:$0xf]
  %v2350 = vld [vmem:[%s2339 + $0x28] sm:$0xf]
  %v2351 = vld [vmem:[%s2339 + $0x2c] sm:$0xf]
  %v2352 = vld [vmem:[%s2339 + $0x30] sm:$0xf]
  %v2353 = vld [vmem:[%s2339 + $0x34] sm:$0xf]
  %v2354 = vld [vmem:[%s2339 + $0x38] sm:$0xf]
  %v2355 = vld [vmem:[%s2339 + $0x3c] sm:$0xf]
  %v2358 = vunpack.c.l.b16 %v1887
  %v2359 = vunpack.c.l.b16 %v1888
  %v2360 = vpack.c.b16 %v2359, %v2358
  %v2378 = vunpack.c.l.b16 %v2340
  %v2379 = vunpack.c.l.b16 %v2341
  %v2380 = vunpack.c.l.b16 %v2342
  %v2381 = vunpack.c.l.b16 %v2343
  %v2382 = vunpack.c.l.b16 %v2344
  %v2383 = vunpack.c.l.b16 %v2345
  %v2384 = vunpack.c.l.b16 %v2346
  %v2385 = vunpack.c.l.b16 %v2347
  %v2386 = vunpack.c.l.b16 %v2348
  %v2387 = vunpack.c.l.b16 %v2349
  %v2388 = vunpack.c.l.b16 %v2350
  %v2389 = vunpack.c.l.b16 %v2351
  %v2390 = vunpack.c.l.b16 %v2352
  %v2391 = vunpack.c.l.b16 %v2353
  %v2392 = vunpack.c.l.b16 %v2354
  %v2393 = vunpack.c.l.b16 %v2355
  %v2394 = vpack.c.b16 %v2379, %v2378
  %v2395 = vpack.c.b16 %v2381, %v2380
  %v2396 = vpack.c.b16 %v2383, %v2382
  %v2397 = vpack.c.b16 %v2385, %v2384
  %v2398 = vpack.c.b16 %v2387, %v2386
  %v2399 = vpack.c.b16 %v2389, %v2388
  %v2400 = vpack.c.b16 %v2391, %v2390
  %v2401 = vpack.c.b16 %v2393, %v2392
  %2410 = vmatpush.bf16.msra.mxu0 %v2401
  %2411 = vmatpush.bf16.msra.mxu0 %v2400
  %2412 = vmatpush.bf16.msra.mxu0 %v2399
  %2413 = vmatpush.bf16.msra.mxu0 %v2398
  %2414 = vmatpush.bf16.msra.mxu0 %v2397
  %2415 = vmatpush.bf16.msra.mxu0 %v2396
  %2416 = vmatpush.bf16.msra.mxu0 %v2395
  %2417 = vmatpush.bf16.msra.mxu0 %v2394
  %2418 = vmatmul.bf16.gmra.mxu0 %v2360
  %v2419 = vpop.f32.mrf.mxu0
  %v2420 = vadd.f32 0.0, %v2419
  %v2421 = vpop.f32.mrf.mxu0
  %v2422 = vadd.f32 0.0, %v2421
  %2423 = vdwg.mxu0
  %v2424 = vadd.f32 %v2337, %v2420
  %v2425 = vadd.f32 %v2338, %v2422
  %s2426 = scalar_lea.vmem %s3, 384
  %v2427 = vld [vmem:[%s2426] sm:$0xf]
  %v2428 = vld [vmem:[%s2426 + $0x4] sm:$0xf]
  %v2429 = vld [vmem:[%s2426 + $0x8] sm:$0xf]
  %v2430 = vld [vmem:[%s2426 + $0xc] sm:$0xf]
  %v2431 = vld [vmem:[%s2426 + $0x10] sm:$0xf]
  %v2432 = vld [vmem:[%s2426 + $0x14] sm:$0xf]
  %v2433 = vld [vmem:[%s2426 + $0x18] sm:$0xf]
  %v2434 = vld [vmem:[%s2426 + $0x1c] sm:$0xf]
  %v2435 = vld [vmem:[%s2426 + $0x20] sm:$0xf]
  %v2436 = vld [vmem:[%s2426 + $0x24] sm:$0xf]
  %v2437 = vld [vmem:[%s2426 + $0x28] sm:$0xf]
  %v2438 = vld [vmem:[%s2426 + $0x2c] sm:$0xf]
  %v2439 = vld [vmem:[%s2426 + $0x30] sm:$0xf]
  %v2440 = vld [vmem:[%s2426 + $0x34] sm:$0xf]
  %v2441 = vld [vmem:[%s2426 + $0x38] sm:$0xf]
  %v2442 = vld [vmem:[%s2426 + $0x3c] sm:$0xf]
  %v2445 = vunpack.c.l.b16 %v1889
  %v2446 = vunpack.c.l.b16 %v1890
  %v2447 = vpack.c.b16 %v2446, %v2445
  %v2465 = vunpack.c.l.b16 %v2427
  %v2466 = vunpack.c.l.b16 %v2428
  %v2467 = vunpack.c.l.b16 %v2429
  %v2468 = vunpack.c.l.b16 %v2430
  %v2469 = vunpack.c.l.b16 %v2431
  %v2470 = vunpack.c.l.b16 %v2432
  %v2471 = vunpack.c.l.b16 %v2433
  %v2472 = vunpack.c.l.b16 %v2434
  %v2473 = vunpack.c.l.b16 %v2435
  %v2474 = vunpack.c.l.b16 %v2436
  %v2475 = vunpack.c.l.b16 %v2437
  %v2476 = vunpack.c.l.b16 %v2438
  %v2477 = vunpack.c.l.b16 %v2439
  %v2478 = vunpack.c.l.b16 %v2440
  %v2479 = vunpack.c.l.b16 %v2441
  %v2480 = vunpack.c.l.b16 %v2442
  %v2481 = vpack.c.b16 %v2466, %v2465
  %v2482 = vpack.c.b16 %v2468, %v2467
  %v2483 = vpack.c.b16 %v2470, %v2469
  %v2484 = vpack.c.b16 %v2472, %v2471
  %v2485 = vpack.c.b16 %v2474, %v2473
  %v2486 = vpack.c.b16 %v2476, %v2475
  %v2487 = vpack.c.b16 %v2478, %v2477
  %v2488 = vpack.c.b16 %v2480, %v2479
  %2497 = vmatpush.bf16.msra.mxu0 %v2488
  %2498 = vmatpush.bf16.msra.mxu0 %v2487
  %2499 = vmatpush.bf16.msra.mxu0 %v2486
  %2500 = vmatpush.bf16.msra.mxu0 %v2485
  %2501 = vmatpush.bf16.msra.mxu0 %v2484
  %2502 = vmatpush.bf16.msra.mxu0 %v2483
  %2503 = vmatpush.bf16.msra.mxu0 %v2482
  %2504 = vmatpush.bf16.msra.mxu0 %v2481
  %2505 = vmatmul.bf16.gmra.mxu0 %v2447
  %v2506 = vpop.f32.mrf.mxu0
  %v2507 = vadd.f32 0.0, %v2506
  %v2508 = vpop.f32.mrf.mxu0
  %v2509 = vadd.f32 0.0, %v2508
  %2510 = vdwg.mxu0
  %v2511 = vadd.f32 %v2424, %v2507
  %v2512 = vadd.f32 %v2425, %v2509
  %s2513 = scalar_lea.vmem %s3, 448
  %v2514 = vld [vmem:[%s2513] sm:$0xf]
  %v2515 = vld [vmem:[%s2513 + $0x4] sm:$0xf]
  %v2516 = vld [vmem:[%s2513 + $0x8] sm:$0xf]
  %v2517 = vld [vmem:[%s2513 + $0xc] sm:$0xf]
  %v2518 = vld [vmem:[%s2513 + $0x10] sm:$0xf]
  %v2519 = vld [vmem:[%s2513 + $0x14] sm:$0xf]
  %v2520 = vld [vmem:[%s2513 + $0x18] sm:$0xf]
  %v2521 = vld [vmem:[%s2513 + $0x1c] sm:$0xf]
  %v2522 = vld [vmem:[%s2513 + $0x20] sm:$0xf]
  %v2523 = vld [vmem:[%s2513 + $0x24] sm:$0xf]
  %v2524 = vld [vmem:[%s2513 + $0x28] sm:$0xf]
  %v2525 = vld [vmem:[%s2513 + $0x2c] sm:$0xf]
  %v2526 = vld [vmem:[%s2513 + $0x30] sm:$0xf]
  %v2527 = vld [vmem:[%s2513 + $0x34] sm:$0xf]
  %v2528 = vld [vmem:[%s2513 + $0x38] sm:$0xf]
  %v2529 = vld [vmem:[%s2513 + $0x3c] sm:$0xf]
  %v2532 = vunpack.c.l.b16 %v1891
  %v2533 = vunpack.c.l.b16 %v1892
  %v2534 = vpack.c.b16 %v2533, %v2532
  %v2552 = vunpack.c.l.b16 %v2514
  %v2553 = vunpack.c.l.b16 %v2515
  %v2554 = vunpack.c.l.b16 %v2516
  %v2555 = vunpack.c.l.b16 %v2517
  %v2556 = vunpack.c.l.b16 %v2518
  %v2557 = vunpack.c.l.b16 %v2519
  %v2558 = vunpack.c.l.b16 %v2520
  %v2559 = vunpack.c.l.b16 %v2521
  %v2560 = vunpack.c.l.b16 %v2522
  %v2561 = vunpack.c.l.b16 %v2523
  %v2562 = vunpack.c.l.b16 %v2524
  %v2563 = vunpack.c.l.b16 %v2525
  %v2564 = vunpack.c.l.b16 %v2526
  %v2565 = vunpack.c.l.b16 %v2527
  %v2566 = vunpack.c.l.b16 %v2528
  %v2567 = vunpack.c.l.b16 %v2529
  %v2568 = vpack.c.b16 %v2553, %v2552
  %v2569 = vpack.c.b16 %v2555, %v2554
  %v2570 = vpack.c.b16 %v2557, %v2556
  %v2571 = vpack.c.b16 %v2559, %v2558
  %v2572 = vpack.c.b16 %v2561, %v2560
  %v2573 = vpack.c.b16 %v2563, %v2562
  %v2574 = vpack.c.b16 %v2565, %v2564
  %v2575 = vpack.c.b16 %v2567, %v2566
  %2584 = vmatpush.bf16.msra.mxu0 %v2575
  %2585 = vmatpush.bf16.msra.mxu0 %v2574
  %2586 = vmatpush.bf16.msra.mxu0 %v2573
  %2587 = vmatpush.bf16.msra.mxu0 %v2572
  %2588 = vmatpush.bf16.msra.mxu0 %v2571
  %2589 = vmatpush.bf16.msra.mxu0 %v2570
  %2590 = vmatpush.bf16.msra.mxu0 %v2569
  %2591 = vmatpush.bf16.msra.mxu0 %v2568
  %2592 = vmatmul.bf16.gmra.mxu0 %v2534
  %v2593 = vpop.f32.mrf.mxu0
  %v2594 = vadd.f32 0.0, %v2593
  %v2595 = vpop.f32.mrf.mxu0
  %v2596 = vadd.f32 0.0, %v2595
  %2597 = vdwg.mxu0
  %v2598 = vadd.f32 %v2511, %v2594
  %v2599 = vadd.f32 %v2512, %v2596
  %s2600 = scalar_lea.vmem %s3, 512
  %v2601 = vld [vmem:[%s2600] sm:$0xf]
  %v2602 = vld [vmem:[%s2600 + $0x4] sm:$0xf]
  %v2603 = vld [vmem:[%s2600 + $0x8] sm:$0xf]
  %v2604 = vld [vmem:[%s2600 + $0xc] sm:$0xf]
  %v2605 = vld [vmem:[%s2600 + $0x10] sm:$0xf]
  %v2606 = vld [vmem:[%s2600 + $0x14] sm:$0xf]
  %v2607 = vld [vmem:[%s2600 + $0x18] sm:$0xf]
  %v2608 = vld [vmem:[%s2600 + $0x1c] sm:$0xf]
  %v2609 = vld [vmem:[%s2600 + $0x20] sm:$0xf]
  %v2610 = vld [vmem:[%s2600 + $0x24] sm:$0xf]
  %v2611 = vld [vmem:[%s2600 + $0x28] sm:$0xf]
  %v2612 = vld [vmem:[%s2600 + $0x2c] sm:$0xf]
  %v2613 = vld [vmem:[%s2600 + $0x30] sm:$0xf]
  %v2614 = vld [vmem:[%s2600 + $0x34] sm:$0xf]
  %v2615 = vld [vmem:[%s2600 + $0x38] sm:$0xf]
  %v2616 = vld [vmem:[%s2600 + $0x3c] sm:$0xf]
  %v2619 = vunpack.c.l.b16 %v1893
  %v2620 = vunpack.c.l.b16 %v1894
  %v2621 = vpack.c.b16 %v2620, %v2619
  %v2639 = vunpack.c.l.b16 %v2601
  %v2640 = vunpack.c.l.b16 %v2602
  %v2641 = vunpack.c.l.b16 %v2603
  %v2642 = vunpack.c.l.b16 %v2604
  %v2643 = vunpack.c.l.b16 %v2605
  %v2644 = vunpack.c.l.b16 %v2606
  %v2645 = vunpack.c.l.b16 %v2607
  %v2646 = vunpack.c.l.b16 %v2608
  %v2647 = vunpack.c.l.b16 %v2609
  %v2648 = vunpack.c.l.b16 %v2610
  %v2649 = vunpack.c.l.b16 %v2611
  %v2650 = vunpack.c.l.b16 %v2612
  %v2651 = vunpack.c.l.b16 %v2613
  %v2652 = vunpack.c.l.b16 %v2614
  %v2653 = vunpack.c.l.b16 %v2615
  %v2654 = vunpack.c.l.b16 %v2616
  %v2655 = vpack.c.b16 %v2640, %v2639
  %v2656 = vpack.c.b16 %v2642, %v2641
  %v2657 = vpack.c.b16 %v2644, %v2643
  %v2658 = vpack.c.b16 %v2646, %v2645
  %v2659 = vpack.c.b16 %v2648, %v2647
  %v2660 = vpack.c.b16 %v2650, %v2649
  %v2661 = vpack.c.b16 %v2652, %v2651
  %v2662 = vpack.c.b16 %v2654, %v2653
  %2671 = vmatpush.bf16.msra.mxu0 %v2662
  %2672 = vmatpush.bf16.msra.mxu0 %v2661
  %2673 = vmatpush.bf16.msra.mxu0 %v2660
  %2674 = vmatpush.bf16.msra.mxu0 %v2659
  %2675 = vmatpush.bf16.msra.mxu0 %v2658
  %2676 = vmatpush.bf16.msra.mxu0 %v2657
  %2677 = vmatpush.bf16.msra.mxu0 %v2656
  %2678 = vmatpush.bf16.msra.mxu0 %v2655
  %2679 = vmatmul.bf16.gmra.mxu0 %v2621
  %v2680 = vpop.f32.mrf.mxu0
  %v2681 = vadd.f32 0.0, %v2680
  %v2682 = vpop.f32.mrf.mxu0
  %v2683 = vadd.f32 0.0, %v2682
  %2684 = vdwg.mxu0
  %v2685 = vadd.f32 %v2598, %v2681
  %v2686 = vadd.f32 %v2599, %v2683
  %s2687 = scalar_lea.vmem %s3, 576
  %v2688 = vld [vmem:[%s2687] sm:$0xf]
  %v2689 = vld [vmem:[%s2687 + $0x4] sm:$0xf]
  %v2690 = vld [vmem:[%s2687 + $0x8] sm:$0xf]
  %v2691 = vld [vmem:[%s2687 + $0xc] sm:$0xf]
  %v2692 = vld [vmem:[%s2687 + $0x10] sm:$0xf]
  %v2693 = vld [vmem:[%s2687 + $0x14] sm:$0xf]
  %v2694 = vld [vmem:[%s2687 + $0x18] sm:$0xf]
  %v2695 = vld [vmem:[%s2687 + $0x1c] sm:$0xf]
  %v2696 = vld [vmem:[%s2687 + $0x20] sm:$0xf]
  %v2697 = vld [vmem:[%s2687 + $0x24] sm:$0xf]
  %v2698 = vld [vmem:[%s2687 + $0x28] sm:$0xf]
  %v2699 = vld [vmem:[%s2687 + $0x2c] sm:$0xf]
  %v2700 = vld [vmem:[%s2687 + $0x30] sm:$0xf]
  %v2701 = vld [vmem:[%s2687 + $0x34] sm:$0xf]
  %v2702 = vld [vmem:[%s2687 + $0x38] sm:$0xf]
  %v2703 = vld [vmem:[%s2687 + $0x3c] sm:$0xf]
  %v2706 = vunpack.c.l.b16 %v1895
  %v2707 = vunpack.c.l.b16 %v1896
  %v2708 = vpack.c.b16 %v2707, %v2706
  %v2726 = vunpack.c.l.b16 %v2688
  %v2727 = vunpack.c.l.b16 %v2689
  %v2728 = vunpack.c.l.b16 %v2690
  %v2729 = vunpack.c.l.b16 %v2691
  %v2730 = vunpack.c.l.b16 %v2692
  %v2731 = vunpack.c.l.b16 %v2693
  %v2732 = vunpack.c.l.b16 %v2694
  %v2733 = vunpack.c.l.b16 %v2695
  %v2734 = vunpack.c.l.b16 %v2696
  %v2735 = vunpack.c.l.b16 %v2697
  %v2736 = vunpack.c.l.b16 %v2698
  %v2737 = vunpack.c.l.b16 %v2699
  %v2738 = vunpack.c.l.b16 %v2700
  %v2739 = vunpack.c.l.b16 %v2701
  %v2740 = vunpack.c.l.b16 %v2702
  %v2741 = vunpack.c.l.b16 %v2703
  %v2742 = vpack.c.b16 %v2727, %v2726
  %v2743 = vpack.c.b16 %v2729, %v2728
  %v2744 = vpack.c.b16 %v2731, %v2730
  %v2745 = vpack.c.b16 %v2733, %v2732
  %v2746 = vpack.c.b16 %v2735, %v2734
  %v2747 = vpack.c.b16 %v2737, %v2736
  %v2748 = vpack.c.b16 %v2739, %v2738
  %v2749 = vpack.c.b16 %v2741, %v2740
  %2758 = vmatpush.bf16.msra.mxu0 %v2749
  %2759 = vmatpush.bf16.msra.mxu0 %v2748
  %2760 = vmatpush.bf16.msra.mxu0 %v2747
  %2761 = vmatpush.bf16.msra.mxu0 %v2746
  %2762 = vmatpush.bf16.msra.mxu0 %v2745
  %2763 = vmatpush.bf16.msra.mxu0 %v2744
  %2764 = vmatpush.bf16.msra.mxu0 %v2743
  %2765 = vmatpush.bf16.msra.mxu0 %v2742
  %2766 = vmatmul.bf16.gmra.mxu0 %v2708
  %v2767 = vpop.f32.mrf.mxu0
  %v2768 = vadd.f32 0.0, %v2767
  %v2769 = vpop.f32.mrf.mxu0
  %v2770 = vadd.f32 0.0, %v2769
  %2771 = vdwg.mxu0
  %v2772 = vadd.f32 %v2685, %v2768
  %v2773 = vadd.f32 %v2686, %v2770
  %s2774 = scalar_lea.vmem %s3, 640
  %v2775 = vld [vmem:[%s2774] sm:$0xf]
  %v2776 = vld [vmem:[%s2774 + $0x4] sm:$0xf]
  %v2777 = vld [vmem:[%s2774 + $0x8] sm:$0xf]
  %v2778 = vld [vmem:[%s2774 + $0xc] sm:$0xf]
  %v2779 = vld [vmem:[%s2774 + $0x10] sm:$0xf]
  %v2780 = vld [vmem:[%s2774 + $0x14] sm:$0xf]
  %v2781 = vld [vmem:[%s2774 + $0x18] sm:$0xf]
  %v2782 = vld [vmem:[%s2774 + $0x1c] sm:$0xf]
  %v2783 = vld [vmem:[%s2774 + $0x20] sm:$0xf]
  %v2784 = vld [vmem:[%s2774 + $0x24] sm:$0xf]
  %v2785 = vld [vmem:[%s2774 + $0x28] sm:$0xf]
  %v2786 = vld [vmem:[%s2774 + $0x2c] sm:$0xf]
  %v2787 = vld [vmem:[%s2774 + $0x30] sm:$0xf]
  %v2788 = vld [vmem:[%s2774 + $0x34] sm:$0xf]
  %v2789 = vld [vmem:[%s2774 + $0x38] sm:$0xf]
  %v2790 = vld [vmem:[%s2774 + $0x3c] sm:$0xf]
  %v2793 = vunpack.c.l.b16 %v1897
  %v2794 = vunpack.c.l.b16 %v1898
  %v2795 = vpack.c.b16 %v2794, %v2793
  %v2813 = vunpack.c.l.b16 %v2775
  %v2814 = vunpack.c.l.b16 %v2776
  %v2815 = vunpack.c.l.b16 %v2777
  %v2816 = vunpack.c.l.b16 %v2778
  %v2817 = vunpack.c.l.b16 %v2779
  %v2818 = vunpack.c.l.b16 %v2780
  %v2819 = vunpack.c.l.b16 %v2781
  %v2820 = vunpack.c.l.b16 %v2782
  %v2821 = vunpack.c.l.b16 %v2783
  %v2822 = vunpack.c.l.b16 %v2784
  %v2823 = vunpack.c.l.b16 %v2785
  %v2824 = vunpack.c.l.b16 %v2786
  %v2825 = vunpack.c.l.b16 %v2787
  %v2826 = vunpack.c.l.b16 %v2788
  %v2827 = vunpack.c.l.b16 %v2789
  %v2828 = vunpack.c.l.b16 %v2790
  %v2829 = vpack.c.b16 %v2814, %v2813
  %v2830 = vpack.c.b16 %v2816, %v2815
  %v2831 = vpack.c.b16 %v2818, %v2817
  %v2832 = vpack.c.b16 %v2820, %v2819
  %v2833 = vpack.c.b16 %v2822, %v2821
  %v2834 = vpack.c.b16 %v2824, %v2823
  %v2835 = vpack.c.b16 %v2826, %v2825
  %v2836 = vpack.c.b16 %v2828, %v2827
  %2845 = vmatpush.bf16.msra.mxu0 %v2836
  %2846 = vmatpush.bf16.msra.mxu0 %v2835
  %2847 = vmatpush.bf16.msra.mxu0 %v2834
  %2848 = vmatpush.bf16.msra.mxu0 %v2833
  %2849 = vmatpush.bf16.msra.mxu0 %v2832
  %2850 = vmatpush.bf16.msra.mxu0 %v2831
  %2851 = vmatpush.bf16.msra.mxu0 %v2830
  %2852 = vmatpush.bf16.msra.mxu0 %v2829
  %2853 = vmatmul.bf16.gmra.mxu0 %v2795
  %v2854 = vpop.f32.mrf.mxu0
  %v2855 = vadd.f32 0.0, %v2854
  %v2856 = vpop.f32.mrf.mxu0
  %v2857 = vadd.f32 0.0, %v2856
  %2858 = vdwg.mxu0
  %v2859 = vadd.f32 %v2772, %v2855
  %v2860 = vadd.f32 %v2773, %v2857
  %s2861 = scalar_lea.vmem %s3, 704
  %v2862 = vld [vmem:[%s2861] sm:$0xf]
  %v2863 = vld [vmem:[%s2861 + $0x4] sm:$0xf]
  %v2864 = vld [vmem:[%s2861 + $0x8] sm:$0xf]
  %v2865 = vld [vmem:[%s2861 + $0xc] sm:$0xf]
  %v2866 = vld [vmem:[%s2861 + $0x10] sm:$0xf]
  %v2867 = vld [vmem:[%s2861 + $0x14] sm:$0xf]
  %v2868 = vld [vmem:[%s2861 + $0x18] sm:$0xf]
  %v2869 = vld [vmem:[%s2861 + $0x1c] sm:$0xf]
  %v2870 = vld [vmem:[%s2861 + $0x20] sm:$0xf]
  %v2871 = vld [vmem:[%s2861 + $0x24] sm:$0xf]
  %v2872 = vld [vmem:[%s2861 + $0x28] sm:$0xf]
  %v2873 = vld [vmem:[%s2861 + $0x2c] sm:$0xf]
  %v2874 = vld [vmem:[%s2861 + $0x30] sm:$0xf]
  %v2875 = vld [vmem:[%s2861 + $0x34] sm:$0xf]
  %v2876 = vld [vmem:[%s2861 + $0x38] sm:$0xf]
  %v2877 = vld [vmem:[%s2861 + $0x3c] sm:$0xf]
  %v2880 = vunpack.c.l.b16 %v1899
  %v2881 = vunpack.c.l.b16 %v1900
  %v2882 = vpack.c.b16 %v2881, %v2880
  %v2900 = vunpack.c.l.b16 %v2862
  %v2901 = vunpack.c.l.b16 %v2863
  %v2902 = vunpack.c.l.b16 %v2864
  %v2903 = vunpack.c.l.b16 %v2865
  %v2904 = vunpack.c.l.b16 %v2866
  %v2905 = vunpack.c.l.b16 %v2867
  %v2906 = vunpack.c.l.b16 %v2868
  %v2907 = vunpack.c.l.b16 %v2869
  %v2908 = vunpack.c.l.b16 %v2870
  %v2909 = vunpack.c.l.b16 %v2871
  %v2910 = vunpack.c.l.b16 %v2872
  %v2911 = vunpack.c.l.b16 %v2873
  %v2912 = vunpack.c.l.b16 %v2874
  %v2913 = vunpack.c.l.b16 %v2875
  %v2914 = vunpack.c.l.b16 %v2876
  %v2915 = vunpack.c.l.b16 %v2877
  %v2916 = vpack.c.b16 %v2901, %v2900
  %v2917 = vpack.c.b16 %v2903, %v2902
  %v2918 = vpack.c.b16 %v2905, %v2904
  %v2919 = vpack.c.b16 %v2907, %v2906
  %v2920 = vpack.c.b16 %v2909, %v2908
  %v2921 = vpack.c.b16 %v2911, %v2910
  %v2922 = vpack.c.b16 %v2913, %v2912
  %v2923 = vpack.c.b16 %v2915, %v2914
  %2932 = vmatpush.bf16.msra.mxu0 %v2923
  %2933 = vmatpush.bf16.msra.mxu0 %v2922
  %2934 = vmatpush.bf16.msra.mxu0 %v2921
  %2935 = vmatpush.bf16.msra.mxu0 %v2920
  %2936 = vmatpush.bf16.msra.mxu0 %v2919
  %2937 = vmatpush.bf16.msra.mxu0 %v2918
  %2938 = vmatpush.bf16.msra.mxu0 %v2917
  %2939 = vmatpush.bf16.msra.mxu0 %v2916
  %2940 = vmatmul.bf16.gmra.mxu0 %v2882
  %v2941 = vpop.f32.mrf.mxu0
  %v2942 = vadd.f32 0.0, %v2941
  %v2943 = vpop.f32.mrf.mxu0
  %v2944 = vadd.f32 0.0, %v2943
  %2945 = vdwg.mxu0
  %v2946 = vadd.f32 %v2859, %v2942
  %v2947 = vadd.f32 %v2860, %v2944
  %s2948 = scalar_lea.vmem %s3, 768
  %v2949 = vld [vmem:[%s2948] sm:$0xf]
  %v2950 = vld [vmem:[%s2948 + $0x4] sm:$0xf]
  %v2951 = vld [vmem:[%s2948 + $0x8] sm:$0xf]
  %v2952 = vld [vmem:[%s2948 + $0xc] sm:$0xf]
  %v2953 = vld [vmem:[%s2948 + $0x10] sm:$0xf]
  %v2954 = vld [vmem:[%s2948 + $0x14] sm:$0xf]
  %v2955 = vld [vmem:[%s2948 + $0x18] sm:$0xf]
  %v2956 = vld [vmem:[%s2948 + $0x1c] sm:$0xf]
  %v2957 = vld [vmem:[%s2948 + $0x20] sm:$0xf]
  %v2958 = vld [vmem:[%s2948 + $0x24] sm:$0xf]
  %v2959 = vld [vmem:[%s2948 + $0x28] sm:$0xf]
  %v2960 = vld [vmem:[%s2948 + $0x2c] sm:$0xf]
  %v2961 = vld [vmem:[%s2948 + $0x30] sm:$0xf]
  %v2962 = vld [vmem:[%s2948 + $0x34] sm:$0xf]
  %v2963 = vld [vmem:[%s2948 + $0x38] sm:$0xf]
  %v2964 = vld [vmem:[%s2948 + $0x3c] sm:$0xf]
  %v2967 = vunpack.c.l.b16 %v1901
  %v2968 = vunpack.c.l.b16 %v1902
  %v2969 = vpack.c.b16 %v2968, %v2967
  %v2987 = vunpack.c.l.b16 %v2949
  %v2988 = vunpack.c.l.b16 %v2950
  %v2989 = vunpack.c.l.b16 %v2951
  %v2990 = vunpack.c.l.b16 %v2952
  %v2991 = vunpack.c.l.b16 %v2953
  %v2992 = vunpack.c.l.b16 %v2954
  %v2993 = vunpack.c.l.b16 %v2955
  %v2994 = vunpack.c.l.b16 %v2956
  %v2995 = vunpack.c.l.b16 %v2957
  %v2996 = vunpack.c.l.b16 %v2958
  %v2997 = vunpack.c.l.b16 %v2959
  %v2998 = vunpack.c.l.b16 %v2960
  %v2999 = vunpack.c.l.b16 %v2961
  %v3000 = vunpack.c.l.b16 %v2962
  %v3001 = vunpack.c.l.b16 %v2963
  %v3002 = vunpack.c.l.b16 %v2964
  %v3003 = vpack.c.b16 %v2988, %v2987
  %v3004 = vpack.c.b16 %v2990, %v2989
  %v3005 = vpack.c.b16 %v2992, %v2991
  %v3006 = vpack.c.b16 %v2994, %v2993
  %v3007 = vpack.c.b16 %v2996, %v2995
  %v3008 = vpack.c.b16 %v2998, %v2997
  %v3009 = vpack.c.b16 %v3000, %v2999
  %v3010 = vpack.c.b16 %v3002, %v3001
  %3019 = vmatpush.bf16.msra.mxu0 %v3010
  %3020 = vmatpush.bf16.msra.mxu0 %v3009
  %3021 = vmatpush.bf16.msra.mxu0 %v3008
  %3022 = vmatpush.bf16.msra.mxu0 %v3007
  %3023 = vmatpush.bf16.msra.mxu0 %v3006
  %3024 = vmatpush.bf16.msra.mxu0 %v3005
  %3025 = vmatpush.bf16.msra.mxu0 %v3004
  %3026 = vmatpush.bf16.msra.mxu0 %v3003
  %3027 = vmatmul.bf16.gmra.mxu0 %v2969
  %v3028 = vpop.f32.mrf.mxu0
  %v3029 = vadd.f32 0.0, %v3028
  %v3030 = vpop.f32.mrf.mxu0
  %v3031 = vadd.f32 0.0, %v3030
  %3032 = vdwg.mxu0
  %v3033 = vadd.f32 %v2946, %v3029
  %v3034 = vadd.f32 %v2947, %v3031
  %s3035 = scalar_lea.vmem %s3, 832
  %v3036 = vld [vmem:[%s3035] sm:$0xf]
  %v3037 = vld [vmem:[%s3035 + $0x4] sm:$0xf]
  %v3038 = vld [vmem:[%s3035 + $0x8] sm:$0xf]
  %v3039 = vld [vmem:[%s3035 + $0xc] sm:$0xf]
  %v3040 = vld [vmem:[%s3035 + $0x10] sm:$0xf]
  %v3041 = vld [vmem:[%s3035 + $0x14] sm:$0xf]
  %v3042 = vld [vmem:[%s3035 + $0x18] sm:$0xf]
  %v3043 = vld [vmem:[%s3035 + $0x1c] sm:$0xf]
  %v3044 = vld [vmem:[%s3035 + $0x20] sm:$0xf]
  %v3045 = vld [vmem:[%s3035 + $0x24] sm:$0xf]
  %v3046 = vld [vmem:[%s3035 + $0x28] sm:$0xf]
  %v3047 = vld [vmem:[%s3035 + $0x2c] sm:$0xf]
  %v3048 = vld [vmem:[%s3035 + $0x30] sm:$0xf]
  %v3049 = vld [vmem:[%s3035 + $0x34] sm:$0xf]
  %v3050 = vld [vmem:[%s3035 + $0x38] sm:$0xf]
  %v3051 = vld [vmem:[%s3035 + $0x3c] sm:$0xf]
  %v3054 = vunpack.c.l.b16 %v1903
  %v3055 = vunpack.c.l.b16 %v1904
  %v3056 = vpack.c.b16 %v3055, %v3054
  %v3074 = vunpack.c.l.b16 %v3036
  %v3075 = vunpack.c.l.b16 %v3037
  %v3076 = vunpack.c.l.b16 %v3038
  %v3077 = vunpack.c.l.b16 %v3039
  %v3078 = vunpack.c.l.b16 %v3040
  %v3079 = vunpack.c.l.b16 %v3041
  %v3080 = vunpack.c.l.b16 %v3042
  %v3081 = vunpack.c.l.b16 %v3043
  %v3082 = vunpack.c.l.b16 %v3044
  %v3083 = vunpack.c.l.b16 %v3045
  %v3084 = vunpack.c.l.b16 %v3046
  %v3085 = vunpack.c.l.b16 %v3047
  %v3086 = vunpack.c.l.b16 %v3048
  %v3087 = vunpack.c.l.b16 %v3049
  %v3088 = vunpack.c.l.b16 %v3050
  %v3089 = vunpack.c.l.b16 %v3051
  %v3090 = vpack.c.b16 %v3075, %v3074
  %v3091 = vpack.c.b16 %v3077, %v3076
  %v3092 = vpack.c.b16 %v3079, %v3078
  %v3093 = vpack.c.b16 %v3081, %v3080
  %v3094 = vpack.c.b16 %v3083, %v3082
  %v3095 = vpack.c.b16 %v3085, %v3084
  %v3096 = vpack.c.b16 %v3087, %v3086
  %v3097 = vpack.c.b16 %v3089, %v3088
  %3106 = vmatpush.bf16.msra.mxu0 %v3097
  %3107 = vmatpush.bf16.msra.mxu0 %v3096
  %3108 = vmatpush.bf16.msra.mxu0 %v3095
  %3109 = vmatpush.bf16.msra.mxu0 %v3094
  %3110 = vmatpush.bf16.msra.mxu0 %v3093
  %3111 = vmatpush.bf16.msra.mxu0 %v3092
  %3112 = vmatpush.bf16.msra.mxu0 %v3091
  %3113 = vmatpush.bf16.msra.mxu0 %v3090
  %3114 = vmatmul.bf16.gmra.mxu0 %v3056
  %v3115 = vpop.f32.mrf.mxu0
  %v3116 = vadd.f32 0.0, %v3115
  %v3117 = vpop.f32.mrf.mxu0
  %v3118 = vadd.f32 0.0, %v3117
  %3119 = vdwg.mxu0
  %v3120 = vadd.f32 %v3033, %v3116
  %v3121 = vadd.f32 %v3034, %v3118
  %s3122 = scalar_lea.vmem %s3, 896
  %v3123 = vld [vmem:[%s3122] sm:$0xf]
  %v3124 = vld [vmem:[%s3122 + $0x4] sm:$0xf]
  %v3125 = vld [vmem:[%s3122 + $0x8] sm:$0xf]
  %v3126 = vld [vmem:[%s3122 + $0xc] sm:$0xf]
  %v3127 = vld [vmem:[%s3122 + $0x10] sm:$0xf]
  %v3128 = vld [vmem:[%s3122 + $0x14] sm:$0xf]
  %v3129 = vld [vmem:[%s3122 + $0x18] sm:$0xf]
  %v3130 = vld [vmem:[%s3122 + $0x1c] sm:$0xf]
  %v3131 = vld [vmem:[%s3122 + $0x20] sm:$0xf]
  %v3132 = vld [vmem:[%s3122 + $0x24] sm:$0xf]
  %v3133 = vld [vmem:[%s3122 + $0x28] sm:$0xf]
  %v3134 = vld [vmem:[%s3122 + $0x2c] sm:$0xf]
  %v3135 = vld [vmem:[%s3122 + $0x30] sm:$0xf]
  %v3136 = vld [vmem:[%s3122 + $0x34] sm:$0xf]
  %v3137 = vld [vmem:[%s3122 + $0x38] sm:$0xf]
  %v3138 = vld [vmem:[%s3122 + $0x3c] sm:$0xf]
  %v3141 = vunpack.c.l.b16 %v1905
  %v3142 = vunpack.c.l.b16 %v1906
  %v3143 = vpack.c.b16 %v3142, %v3141
  %v3161 = vunpack.c.l.b16 %v3123
  %v3162 = vunpack.c.l.b16 %v3124
  %v3163 = vunpack.c.l.b16 %v3125
  %v3164 = vunpack.c.l.b16 %v3126
  %v3165 = vunpack.c.l.b16 %v3127
  %v3166 = vunpack.c.l.b16 %v3128
  %v3167 = vunpack.c.l.b16 %v3129
  %v3168 = vunpack.c.l.b16 %v3130
  %v3169 = vunpack.c.l.b16 %v3131
  %v3170 = vunpack.c.l.b16 %v3132
  %v3171 = vunpack.c.l.b16 %v3133
  %v3172 = vunpack.c.l.b16 %v3134
  %v3173 = vunpack.c.l.b16 %v3135
  %v3174 = vunpack.c.l.b16 %v3136
  %v3175 = vunpack.c.l.b16 %v3137
  %v3176 = vunpack.c.l.b16 %v3138
  %v3177 = vpack.c.b16 %v3162, %v3161
  %v3178 = vpack.c.b16 %v3164, %v3163
  %v3179 = vpack.c.b16 %v3166, %v3165
  %v3180 = vpack.c.b16 %v3168, %v3167
  %v3181 = vpack.c.b16 %v3170, %v3169
  %v3182 = vpack.c.b16 %v3172, %v3171
  %v3183 = vpack.c.b16 %v3174, %v3173
  %v3184 = vpack.c.b16 %v3176, %v3175
  %3193 = vmatpush.bf16.msra.mxu0 %v3184
  %3194 = vmatpush.bf16.msra.mxu0 %v3183
  %3195 = vmatpush.bf16.msra.mxu0 %v3182
  %3196 = vmatpush.bf16.msra.mxu0 %v3181
  %3197 = vmatpush.bf16.msra.mxu0 %v3180
  %3198 = vmatpush.bf16.msra.mxu0 %v3179
  %3199 = vmatpush.bf16.msra.mxu0 %v3178
  %3200 = vmatpush.bf16.msra.mxu0 %v3177
  %3201 = vmatmul.bf16.gmra.mxu0 %v3143
  %v3202 = vpop.f32.mrf.mxu0
  %v3203 = vadd.f32 0.0, %v3202
  %v3204 = vpop.f32.mrf.mxu0
  %v3205 = vadd.f32 0.0, %v3204
  %3206 = vdwg.mxu0
  %v3207 = vadd.f32 %v3120, %v3203
  %v3208 = vadd.f32 %v3121, %v3205
  %s3209 = scalar_lea.vmem %s3, 960
  %v3210 = vld [vmem:[%s3209] sm:$0xf]
  %v3211 = vld [vmem:[%s3209 + $0x4] sm:$0xf]
  %v3212 = vld [vmem:[%s3209 + $0x8] sm:$0xf]
  %v3213 = vld [vmem:[%s3209 + $0xc] sm:$0xf]
  %v3214 = vld [vmem:[%s3209 + $0x10] sm:$0xf]
  %v3215 = vld [vmem:[%s3209 + $0x14] sm:$0xf]
  %v3216 = vld [vmem:[%s3209 + $0x18] sm:$0xf]
  %v3217 = vld [vmem:[%s3209 + $0x1c] sm:$0xf]
  %v3218 = vld [vmem:[%s3209 + $0x20] sm:$0xf]
  %v3219 = vld [vmem:[%s3209 + $0x24] sm:$0xf]
  %v3220 = vld [vmem:[%s3209 + $0x28] sm:$0xf]
  %v3221 = vld [vmem:[%s3209 + $0x2c] sm:$0xf]
  %v3222 = vld [vmem:[%s3209 + $0x30] sm:$0xf]
  %v3223 = vld [vmem:[%s3209 + $0x34] sm:$0xf]
  %v3224 = vld [vmem:[%s3209 + $0x38] sm:$0xf]
  %v3225 = vld [vmem:[%s3209 + $0x3c] sm:$0xf]
  %v3228 = vunpack.c.l.b16 %v1907
  %v3229 = vunpack.c.l.b16 %v1908
  %v3230 = vpack.c.b16 %v3229, %v3228
  %v3248 = vunpack.c.l.b16 %v3210
  %v3249 = vunpack.c.l.b16 %v3211
  %v3250 = vunpack.c.l.b16 %v3212
  %v3251 = vunpack.c.l.b16 %v3213
  %v3252 = vunpack.c.l.b16 %v3214
  %v3253 = vunpack.c.l.b16 %v3215
  %v3254 = vunpack.c.l.b16 %v3216
  %v3255 = vunpack.c.l.b16 %v3217
  %v3256 = vunpack.c.l.b16 %v3218
  %v3257 = vunpack.c.l.b16 %v3219
  %v3258 = vunpack.c.l.b16 %v3220
  %v3259 = vunpack.c.l.b16 %v3221
  %v3260 = vunpack.c.l.b16 %v3222
  %v3261 = vunpack.c.l.b16 %v3223
  %v3262 = vunpack.c.l.b16 %v3224
  %v3263 = vunpack.c.l.b16 %v3225
  %v3264 = vpack.c.b16 %v3249, %v3248
  %v3265 = vpack.c.b16 %v3251, %v3250
  %v3266 = vpack.c.b16 %v3253, %v3252
  %v3267 = vpack.c.b16 %v3255, %v3254
  %v3268 = vpack.c.b16 %v3257, %v3256
  %v3269 = vpack.c.b16 %v3259, %v3258
  %v3270 = vpack.c.b16 %v3261, %v3260
  %v3271 = vpack.c.b16 %v3263, %v3262
  %3280 = vmatpush.bf16.msra.mxu0 %v3271
  %3281 = vmatpush.bf16.msra.mxu0 %v3270
  %3282 = vmatpush.bf16.msra.mxu0 %v3269
  %3283 = vmatpush.bf16.msra.mxu0 %v3268
  %3284 = vmatpush.bf16.msra.mxu0 %v3267
  %3285 = vmatpush.bf16.msra.mxu0 %v3266
  %3286 = vmatpush.bf16.msra.mxu0 %v3265
  %3287 = vmatpush.bf16.msra.mxu0 %v3264
  %3288 = vmatmul.bf16.gmra.mxu0 %v3230
  %v3289 = vpop.f32.mrf.mxu0
  %v3290 = vadd.f32 0.0, %v3289
  %v3291 = vpop.f32.mrf.mxu0
  %v3292 = vadd.f32 0.0, %v3291
  %3293 = vdwg.mxu0
  %v3294 = vadd.f32 %v3207, %v3290
  %v3295 = vadd.f32 %v3208, %v3292
  %v3296 = vld [vmem:[%s4] sm:$0x1]
  %v3298 = vperm.slane %v3296, 0
  %v3300 = vadd.f32 %v3294, %v3298
  %v3301 = vadd.f32 %v3295, %v3298
  %v3302 = vmax.f32 %v3300, 0.0
  %v3303 = vmax.f32 %v3301, 0.0
  %v3304 = vpack.c.bf16 %v3303, %v3302
  %v3305 = vld [vmem:[%s5] sm:$0xf]
  %v3306 = vld [vmem:[%s5 + $0x4] sm:$0xf]
  %v3307 = vld [vmem:[%s5 + $0x8] sm:$0xf]
  %v3308 = vld [vmem:[%s5 + $0xc] sm:$0xf]
  %v3309 = vld [vmem:[%s5 + $0x10] sm:$0xf]
  %v3310 = vld [vmem:[%s5 + $0x14] sm:$0xf]
  %v3311 = vld [vmem:[%s5 + $0x18] sm:$0xf]
  %v3312 = vld [vmem:[%s5 + $0x1c] sm:$0xf]
  %v3313 = vld [vmem:[%s6] sm:$0x1]
  %v3315 = vperm.slane %v3313, 0
  %v3325 = vunpack.c.l.b16 %v3305
  %v3326 = vunpack.c.l.b16 %v3306
  %v3327 = vunpack.c.l.b16 %v3307
  %v3328 = vunpack.c.l.b16 %v3308
  %v3329 = vunpack.c.l.b16 %v3309
  %v3330 = vunpack.c.l.b16 %v3310
  %v3331 = vunpack.c.l.b16 %v3311
  %v3332 = vunpack.c.l.b16 %v3312
  %v3333 = vpack.c.b16 %v3326, %v3325
  %v3334 = vpack.c.b16 %v3328, %v3327
  %v3335 = vpack.c.b16 %v3330, %v3329
  %v3336 = vpack.c.b16 %v3332, %v3331
  %vm3341 = vcmask 523264
  %v3343 = vsel %vm3341, %v3304, 0
  %3345 = vmatpush.bf16.msra.mxu0 0
  %3346 = vmatpush.bf16.msra.mxu0 0
  %3347 = vmatpush.bf16.msra.mxu0 0
  %3348 = vmatpush.bf16.msra.mxu0 0
  %3349 = vmatpush.bf16.msra.mxu0 %v3336
  %3350 = vmatpush.bf16.msra.mxu0 %v3335
  %3351 = vmatpush.bf16.msra.mxu0 %v3334
  %3352 = vmatpush.bf16.msra.mxu0 %v3333
  %3353 = vmatmul.bf16.gmra.mxu0 %v3343
  %v3354 = vpop.f32.mrf.mxu0
  %v3355 = vadd.f32 %v3315, %v3354
  %v3356 = vpop.f32.mrf.mxu0
  %v3357 = vadd.f32 %v3315, %v3356
  %3358 = vdwg.mxu0
  %v3359 = vlaneseq
  %v3360 = vand.u32 %v3359, 127
  %vm3361 = vcmp.lt.s32.totalorder %v3360, 10
  %v3362 = vsel %vm3361, %v3355, -1e+30
  %v3363 = vsel %vm3361, %v3357, -1e+30
  %3364 = vmax.xlane.f32.xlu0 %v3362
  %v3365 = vpop.xlane.xlu0 %3364
  %3366 = vmax.xlane.f32.xlu0 %v3363
  %v3367 = vpop.xlane.xlu0 %3366
  %v3368 = vsub.f32 %v3362, %v3365
  %v3369 = vsub.f32 %v3363, %v3367
  %v3370 = vmul.f32 %v3368, 1.442695
  %v3371 = vpow.pop %v3370
  %v3372 = vmul.f32 %v3369, 1.442695
  %v3373 = vpow.pop %v3372
  %3374 = vadd.xlane.f32.xlu0 %v3371
  %v3375 = vpop.xlane.xlu0 %3374
  %3376 = vadd.xlane.f32.xlu0 %v3373
  %v3377 = vpop.xlane.xlu0 %3376
  %v3378 = vlog2.pop %v3375
  %v3379 = vmul.f32 %v3378, 0.6931472
  %v3380 = vlog2.pop %v3377
  %v3381 = vmul.f32 %v3380, 0.6931472
  %v3382 = vsub.f32 %v3368, %v3379
  %v3383 = vsub.f32 %v3369, %v3381
  %3384 = vst [vmem:[%s7] sm:$0xff] %v3382
  %3385 = vst [vmem:[%s7 + $0x8] sm:$0xff] %v3383
  // Predicated region
  $region30: #{mnist_comparator_forward.3} parent=0 // pred_check
    _
  $region31: #{mnist_comparator_forward.3} parent=0 // pred_check_branch
    %3387 = sbr.rel (0) target = $region33
  $region32: #{mnist_comparator_forward.3} parent=0 // pred_region
    _
  $region33: #{mnist_comparator_forward.3} parent=0 // pred_fallthru
    _
  // Predicated region
  $region34: #{mnist_comparator_forward.3} parent=0 // pred_check
    _
  $region35: #{mnist_comparator_forward.3} parent=0 // pred_check_branch
    %3389 = sbr.rel (0) target = $region37
  $region36: #{mnist_comparator_forward.3} parent=0 // pred_region
    _
  $region37: #{mnist_comparator_forward.3} parent=0 // pred_fallthru
    _

</llo_original>
